<compile_context>
chip_gen: v6e
topology: v6e:2x2x1
jax: 0.10.0
libtpu: 0.0.40
codegen_flags: <defaults>
</compile_context>

<pallas_src>
import functools

import jax
import jax.numpy as jnp
import numpy as np
from jax.experimental import pallas as pl
from jax.experimental.pallas import tpu as pltpu

NEG = -1e30  # "log(0)" stand-in (finite so NEG arithmetic never produces NaN)


# ----------------------------------------------------------------------------
# Fused kernel (one grid step = one block of NS=8 samples):
#   logits    = feats @ W + b                       (8T, Vp)  bf16 MXU -> f32
#   log_probs = log_softmax(logits)                 (8T, Vp)  f32
#   lp        = batched log_probs @ onehot(ext)     (8, T, Lp) f32 MXU gather
#   alpha     : CTC forward recursion over t, alpha carried in registers
#   out[b]    = -logsumexp(alpha[2*tlen_b], alpha[2*tlen_b - 1]) / tlen_b
# ----------------------------------------------------------------------------
def _recognizer_ctc_kernel(feats_ref, w_ref, b_ref, ext_ref, inlen_ref,
                           endpos_ref, out_ref, lp_scr, *, T, NS, Lp):
    f32 = jnp.float32
    neg = f32(NEG)

    # ---- classifier (bf16 inputs, f32 accumulate) + log_softmax -------------
    logits = jnp.dot(feats_ref[...], w_ref[...],
                     preferred_element_type=f32) + b_ref[...]       # (NS*T, Vp)
    mx = jnp.max(logits, axis=-1, keepdims=True)
    lse = mx + jnp.log(jnp.sum(jnp.exp(logits - mx), axis=-1, keepdims=True))
    log_probs = logits - lse                                        # (NS*T, Vp)
    Vp = log_probs.shape[-1]

    # ---- one-hot gather of extended-label log-probs (exact f32 select) ------
    ext = ext_ref[...]                                              # (NS, Lp) int32
    v_iota = jax.lax.broadcasted_iota(jnp.int32, (NS, Vp, Lp), 1)
    onehot = (v_iota == ext[:, None, :]).astype(f32)                # (NS, Vp, Lp)
    lp3 = log_probs.reshape(NS, T, Vp)
    lp_scr[...] = jax.lax.dot_general(
        lp3, onehot, (((2,), (1,)), ((0,), (0,))),
        preferred_element_type=f32)                                 # (NS, T, Lp)

    # ---- per-state masks (built in-kernel; nothing large comes from HBM) ----
    s_iota = jax.lax.broadcasted_iota(jnp.int32, (NS, Lp), 1)
    ext_m2 = pltpu.roll(ext, 2, axis=1)                             # ext[s-2]
    allow2 = (s_iota >= 2) & (ext != 0) & (ext != ext_m2)           # (NS, Lp)
    mask1 = s_iota >= 1
    inlen = inlen_ref[...]                                          # (NS, 1) int32
    endpos = endpos_ref[...]                                        # (NS, 1) int32 (= 2*target_len)
    end_mask = (s_iota == endpos) | (s_iota == endpos - 1)

    # ---- CTC alpha recursion; alpha lives in registers (one (8,128) vreg) ---
    # virtual alpha_{-1} = [0, NEG, NEG, ...] -> the t=0 step reproduces the
    # standard CTC initialization exactly.
    a_init = jnp.where(s_iota == 0, f32(0.0), neg)

    def body(t, alpha):
        a1 = jnp.where(mask1, pltpu.roll(alpha, 1, axis=1), neg)    # alpha[s-1]
        a2 = jnp.where(allow2, pltpu.roll(alpha, 2, axis=1), neg)   # alpha[s-2]
        m = jnp.maximum(jnp.maximum(alpha, a1), a2)
        lse3 = m + jnp.log(jnp.exp(alpha - m) + jnp.exp(a1 - m) + jnp.exp(a2 - m))
        lp_t = lp_scr[:, pl.ds(t, 1), :].reshape(NS, Lp)            # (NS, Lp)
        new_a = lse3 + lp_t
        return jnp.where(t < inlen, new_a, alpha)                   # freeze past input_length

    unroll = True if T <= 64 else 8
    alpha = jax.lax.fori_loop(0, T, body, a_init, unroll=unroll)

    # ---- -logsumexp over the two terminal states, scaled by 1/target_len ----
    masked = jnp.where(end_mask, alpha, neg)
    m = jnp.max(masked, axis=-1, keepdims=True)
    ll = m + jnp.log(jnp.sum(jnp.exp(masked - m), axis=-1, keepdims=True))
    inv_tlen = 2.0 / endpos.astype(f32)                             # = 1 / target_len
    out_ref[...] = -(ll * inv_tlen)


# ----------------------------------------------------------------------------
# Recognizer.forward: features (B, T, F), targets (B, S) -> scalar CTC loss
# ----------------------------------------------------------------------------
def recognizer_forward(params, features, targets,
                       input_lengths=None, target_lengths=None):
    B, T, F = features.shape
    S = targets.shape[-1]
    V = params["w"].shape[0]

    if input_lengths is None:
        input_lengths = jnp.full((B,), T, dtype=jnp.int32)
    if target_lengths is None:
        # targets handled as a padded (B, S) matrix -> per-sample length S.
        target_lengths = jnp.full((B,), S, dtype=jnp.int32)

    NS = 8                                   # samples per grid step (sublanes)
    BB = ((B + NS - 1) // NS) * NS           # batch padded to a whole block
    Tp = ((T + 7) // 8) * 8                  # time padded (clean sublane split)
    Vp = ((V + 127) // 128) * 128            # lane-dense vocab
    L = 2 * S + 1
    Lp = max(128, ((L + 127) // 128) * 128)  # lane-dense extended-label axis

    # Classifier weights / bias (padded vocab columns neutralized via bias).
    w_pad = (jnp.zeros((F, Vp), jnp.float32)
             .at[:, :V].set(params["w"].T).astype(jnp.bfloat16))
    b_pad = jnp.full((1, Vp), -1e9, jnp.float32).at[0, :V].set(params["b"])

    # Features: pad batch/time, cast to bf16, flatten to a (BB*Tp, F) slab.
    feats = (jnp.zeros((BB, Tp, F), jnp.bfloat16)
             .at[:B, :T].set(features.astype(jnp.bfloat16)))
    feats2d = feats.reshape(BB * Tp, F)

    # Extended label sequence l' = [blank, y1, blank, ..., yS, blank], lane-padded.
    ext = (jnp.zeros((BB, Lp), jnp.int32)
           .at[:B, 1:2 * S:2].set(targets.astype(jnp.int32)))

    inlen = (jnp.zeros((BB, 1), jnp.int32)
             .at[:B, 0].set(input_lengths.astype(jnp.int32)))
    endpos = (jnp.full((BB, 1), 2, jnp.int32)
              .at[:B, 0].set(2 * target_lengths.astype(jnp.int32)))

    kernel = functools.partial(_recognizer_ctc_kernel, T=Tp, NS=NS, Lp=Lp)
    losses = pl.pallas_call(
        kernel,
        out_shape=jax.ShapeDtypeStruct((BB, 1), jnp.float32),
        grid=(BB // NS,),
        in_specs=[
            pl.BlockSpec((NS * Tp, F), lambda g: (g, 0)),   # features slab (bf16)
            pl.BlockSpec((F, Vp), lambda g: (0, 0)),        # classifier W^T (bf16)
            pl.BlockSpec((1, Vp), lambda g: (0, 0)),        # bias (f32)
            pl.BlockSpec((NS, Lp), lambda g: (g, 0)),       # extended labels (int32)
            pl.BlockSpec((NS, 1), lambda g: (g, 0)),        # input lengths
            pl.BlockSpec((NS, 1), lambda g: (g, 0)),        # 2 * target lengths
        ],
        out_specs=pl.BlockSpec((NS, 1), lambda g: (g, 0)),
        scratch_shapes=[
            pltpu.VMEM((NS, Tp, Lp), jnp.float32),          # per-timestep label log-probs
        ],
        compiler_params=pltpu.CompilerParams(
            dimension_semantics=("parallel",),
            vmem_limit_bytes=64 * 1024 * 1024,
        ),
    )(feats2d, w_pad, b_pad, ext, inlen, endpos)

    # PyTorch CTCLoss(reduction='mean'): mean over batch of loss_b / target_len_b.
    return jnp.mean(losses[:B, 0])


# ----------------------------------------------------------------------------
# Pure numpy reference (float64) for the correctness check
# ----------------------------------------------------------------------------
def recognizer_reference(params, features, targets, input_lengths, target_lengths):
    feats = np.asarray(features, np.float64)
    w = np.asarray(params["w"], np.float64)
    b = np.asarray(params["b"], np.float64)
    tg = np.asarray(targets)
    il = np.asarray(input_lengths)
    tl = np.asarray(target_lengths)

    logits = feats @ w.T + b
    m = logits.max(-1, keepdims=True)
    logp = logits - (m + np.log(np.exp(logits - m).sum(-1, keepdims=True)))

    B = feats.shape[0]
    losses = []
    for bi in range(B):
        U, Tb = int(tl[bi]), int(il[bi])
        y = tg[bi, :U]
        L = 2 * U + 1
        ext = np.zeros(L, np.int64)
        ext[1::2] = y
        lp = logp[bi]
        alpha = np.full(L, -np.inf)
        alpha[0] = lp[0, ext[0]]
        if L > 1:
            alpha[1] = lp[0, ext[1]]
        for t in range(1, Tb):
            new = np.full(L, -np.inf)
            for s in range(L):
                v = alpha[s]
                if s >= 1:
                    v = np.logaddexp(v, alpha[s - 1])
                if s >= 2 and ext[s] != 0 and ext[s] != ext[s - 2]:
                    v = np.logaddexp(v, alpha[s - 2])
                new[s] = v + lp[t, ext[s]]
            alpha = new
        ll = np.logaddexp(alpha[L - 1], alpha[L - 2])
        losses.append(-ll / U)
    return float(np.mean(losses))


if __name__ == "__main__":
    # Small shapes consistent with the module: Recognizer(feat_dim=1024,
    # vocab_size=56), batch=2, seq=16, target length <= 5.
    B, T, FEAT = 2, 16, 1024
    V = 55 + 1
    S = 5

    key = jax.random.PRNGKey(0)
    k1, k2, k3, k4 = jax.random.split(key, 4)
    params = {
        "w": 0.05 * jax.random.normal(k1, (V, FEAT), jnp.float32),  # classifier.weight
        "b": 0.05 * jax.random.normal(k2, (V,), jnp.float32),       # classifier.bias
    }
    features = jax.random.normal(k3, (B, T, FEAT), jnp.float32)
    targets = jax.random.randint(k4, (B, S), 1, V)                  # labels in [1, V-1]
    input_lengths = jnp.array([T, T - 3], jnp.int32)
    target_lengths = jnp.array([S, S - 2], jnp.int32)

    loss = recognizer_forward(params, features, targets, input_lengths, target_lengths)
    loss = jax.block_until_ready(loss)

    ref = recognizer_reference(params, features, targets, input_lengths, target_lengths)
    # bf16 classifier-matmul inputs move the loss at the ~1e-3..1e-2 level.
    np.testing.assert_allclose(float(loss), ref, rtol=3e-2, atol=3e-2)

    print("KERNEL_OK")
</pallas_src>

<mosaic_0001>
module attributes {stable_mosaic.version = 11 : i64} {
  func.func @_recognizer_ctc_kernel(%arg0: i32, %arg1: memref<128x1024xbf16, #tpu.memory_space<vmem>>, %arg2: memref<1024x128xbf16, #tpu.memory_space<vmem>>, %arg3: memref<1x128xf32, #tpu.memory_space<vmem>>, %arg4: memref<8x128xi32, #tpu.memory_space<vmem>>, %arg5: memref<8x1xi32, #tpu.memory_space<vmem>>, %arg6: memref<8x1xi32, #tpu.memory_space<vmem>>, %arg7: memref<8x1xf32, #tpu.memory_space<vmem>>, %arg8: memref<8x16x128xf32, #tpu.memory_space<vmem>>) attributes {dimension_semantics = [#tpu.dimension_semantics<parallel>], iteration_bounds = array<i64: 1>, scalar_prefetch = 0 : i64, scratch_operands = 1 : i64, tpu.core_type = #tpu.core_type<tc>, window_params = [{transform_indices = @transform_0, window_bounds = array<i64: 128, 1024>}, {pipeline_mode = #tpu.pipeline_mode<synchronous>, transform_indices = @transform_1, window_bounds = array<i64: 1024, 128>}, {pipeline_mode = #tpu.pipeline_mode<synchronous>, transform_indices = @transform_2, window_bounds = array<i64: 1, 128>}, {transform_indices = @transform_3, window_bounds = array<i64: 8, 128>}, {transform_indices = @transform_4, window_bounds = array<i64: 8, 1>}, {transform_indices = @transform_5, window_bounds = array<i64: 8, 1>}, {transform_indices = @transform_6, window_bounds = array<i64: 8, 1>}]} {
    %c0 = arith.constant 0 : index
    %c0_0 = arith.constant 0 : index
    %0 = vector.load %arg1[%c0, %c0_0] : memref<128x1024xbf16, #tpu.memory_space<vmem>>, vector<128x1024xbf16>
    %c0_1 = arith.constant 0 : index
    %c0_2 = arith.constant 0 : index
    %1 = vector.load %arg2[%c0_1, %c0_2] : memref<1024x128xbf16, #tpu.memory_space<vmem>>, vector<1024x128xbf16>
    %cst = arith.constant dense<0.000000e+00> : vector<128x128xf32>
    %2 = tpu.matmul %0, %1, %cst {dimension_numbers = #tpu.dot_dimension_numbers<[1], [0], [0], [1], [0, 0, 1, 1], [], []>} : vector<128x1024xbf16>, vector<1024x128xbf16>, vector<128x128xf32> -> vector<128x128xf32>
    %c0_3 = arith.constant 0 : index
    %c0_4 = arith.constant 0 : index
    %3 = vector.load %arg3[%c0_3, %c0_4] : memref<1x128xf32, #tpu.memory_space<vmem>>, vector<1x128xf32>
    %4 = vector.broadcast %3 : vector<1x128xf32> to vector<128x128xf32>
    %5 = arith.addf %2, %4 : vector<128x128xf32>
    %cst_5 = arith.constant dense<0xFF800000> : vector<128xf32>
    %6 = vector.multi_reduction <maximumf>, %5, %cst_5 [1] : vector<128x128xf32> to vector<128xf32>
    %7 = vector.shape_cast %6 : vector<128xf32> to vector<128x1xf32>
    %8 = vector.broadcast %7 : vector<128x1xf32> to vector<128x128xf32>
    %9 = arith.subf %5, %8 : vector<128x128xf32>
    %10 = math.exp %9 : vector<128x128xf32>
    %cst_6 = arith.constant dense<0.000000e+00> : vector<128xf32>
    %11 = vector.multi_reduction <add>, %10, %cst_6 [1] : vector<128x128xf32> to vector<128xf32>
    %12 = vector.shape_cast %11 : vector<128xf32> to vector<128x1xf32>
    %13 = math.log %12 : vector<128x1xf32>
    %14 = arith.addf %7, %13 : vector<128x1xf32>
    %15 = vector.broadcast %14 : vector<128x1xf32> to vector<128x128xf32>
    %16 = arith.subf %5, %15 : vector<128x128xf32>
    %c0_7 = arith.constant 0 : index
    %c0_8 = arith.constant 0 : index
    %17 = vector.load %arg4[%c0_7, %c0_8] : memref<8x128xi32, #tpu.memory_space<vmem>>, vector<8x128xi32>
    %18 = tpu.iota {dimensions = array<i32: 1>} : vector<8x128x128xi32>
    %19 = vector.shape_cast %17 : vector<8x128xi32> to vector<8x1x128xi32>
    %20 = vector.broadcast %19 : vector<8x1x128xi32> to vector<8x128x128xi32>
    %21 = arith.cmpi eq, %18, %20 : vector<8x128x128xi32>
    %22 = arith.extui %21 : vector<8x128x128xi1> to vector<8x128x128xi32>
    %23 = arith.sitofp %22 : vector<8x128x128xi32> to vector<8x128x128xf32>
    %24 = vector.shape_cast %16 : vector<128x128xf32> to vector<8x16x128xf32>
    %cst_9 = arith.constant dense<0.000000e+00> : vector<8x16x128xf32>
    %25 = tpu.matmul %24, %23, %cst_9 {dimension_numbers = #tpu.dot_dimension_numbers<[2], [1], [1], [2], [0, 0, 0, 1, 1, 2], [0], [0]>} : vector<8x16x128xf32>, vector<8x128x128xf32>, vector<8x16x128xf32> -> vector<8x16x128xf32>
    %c0_10 = arith.constant 0 : index
    %c0_11 = arith.constant 0 : index
    %c0_12 = arith.constant 0 : index
    %26 = vector.load %arg8[%c0_10, %c0_11, %c0_12] : memref<8x16x128xf32, #tpu.memory_space<vmem>>, vector<8x16x128xf32>
    tpu.vector_store %arg8[%c0_10, %c0_11, %c0_12], %25 {strides = array<i32>} : memref<8x16x128xf32, #tpu.memory_space<vmem>>, vector<8x16x128xf32>,
    %27 = tpu.iota {dimensions = array<i32: 1>} : vector<8x128xi32>
    %c2_i32 = arith.constant 2 : i32
    %28 = tpu.dynamic_rotate %17 by %c2_i32 dim 1 : vector<8x128xi32>, i32 -> vector<8x128xi32>
    %c2_i32_13 = arith.constant 2 : i32
    %29 = vector.broadcast %c2_i32_13 : i32 to vector<8x128xi32>
    %30 = arith.cmpi sge, %27, %29 : vector<8x128xi32>
    %c0_i32 = arith.constant 0 : i32
    %31 = vector.broadcast %c0_i32 : i32 to vector<8x128xi32>
    %32 = arith.cmpi ne, %17, %31 : vector<8x128xi32>
    %33 = arith.andi %30, %32 : vector<8x128xi1>
    %34 = arith.cmpi ne, %17, %28 : vector<8x128xi32>
    %35 = arith.andi %33, %34 : vector<8x128xi1>
    %c1_i32 = arith.constant 1 : i32
    %36 = vector.broadcast %c1_i32 : i32 to vector<8x128xi32>
    %37 = arith.cmpi sge, %27, %36 : vector<8x128xi32>
    %c0_14 = arith.constant 0 : index
    %c0_15 = arith.constant 0 : index
    %38 = vector.load %arg5[%c0_14, %c0_15] : memref<8x1xi32, #tpu.memory_space<vmem>>, vector<8x1xi32>
    %c0_16 = arith.constant 0 : index
    %c0_17 = arith.constant 0 : index
    %39 = vector.load %arg6[%c0_16, %c0_17] : memref<8x1xi32, #tpu.memory_space<vmem>>, vector<8x1xi32>
    %40 = vector.broadcast %39 : vector<8x1xi32> to vector<8x128xi32>
    %41 = arith.cmpi eq, %27, %40 : vector<8x128xi32>
    %c1_i32_18 = arith.constant 1 : i32
    %42 = vector.broadcast %c1_i32_18 : i32 to vector<8x1xi32>
    %43 = arith.subi %39, %42 : vector<8x1xi32>
    %44 = vector.broadcast %43 : vector<8x1xi32> to vector<8x128xi32>
    %45 = arith.cmpi eq, %27, %44 : vector<8x128xi32>
    %46 = arith.ori %41, %45 : vector<8x128xi1>
    %c0_i32_19 = arith.constant 0 : i32
    %47 = vector.broadcast %c0_i32_19 : i32 to vector<8x128xi32>
    %48 = arith.cmpi eq, %27, %47 : vector<8x128xi32>
    %cst_20 = arith.constant 0.000000e+00 : f32
    %cst_21 = arith.constant -1.000000e+30 : f32
    %49 = vector.broadcast %cst_20 : f32 to vector<8x128xf32>
    %50 = vector.broadcast %cst_21 : f32 to vector<8x128xf32>
    %51 = arith.select %48, %49, %50 : vector<8x128xi1>, vector<8x128xf32>
    %cst_22 = arith.constant -1.000000e+30 : f32
    %c0_i32_23 = arith.constant 0 : i32
    %c1_i32_24 = arith.constant 1 : i32
    %52 = tpu.dynamic_rotate %51 by %c1_i32_24 dim 1 : vector<8x128xf32>, i32 -> vector<8x128xf32>
    %53 = vector.broadcast %cst_22 : f32 to vector<8x128xf32>
    %54 = arith.select %37, %52, %53 : vector<8x128xi1>, vector<8x128xf32>
    %c2_i32_25 = arith.constant 2 : i32
    %55 = tpu.dynamic_rotate %51 by %c2_i32_25 dim 1 : vector<8x128xf32>, i32 -> vector<8x128xf32>
    %56 = vector.broadcast %cst_22 : f32 to vector<8x128xf32>
    %57 = arith.select %35, %55, %56 : vector<8x128xi1>, vector<8x128xf32>
    %58 = arith.maximumf %51, %54 : vector<8x128xf32>
    %59 = arith.maximumf %58, %57 : vector<8x128xf32>
    %60 = arith.subf %51, %59 : vector<8x128xf32>
    %61 = math.exp %60 : vector<8x128xf32>
    %62 = arith.subf %54, %59 : vector<8x128xf32>
    %63 = math.exp %62 : vector<8x128xf32>
    %64 = arith.addf %61, %63 : vector<8x128xf32>
    %65 = arith.subf %57, %59 : vector<8x128xf32>
    %66 = math.exp %65 : vector<8x128xf32>
    %67 = arith.addf %64, %66 : vector<8x128xf32>
    %68 = math.log %67 : vector<8x128xf32>
    %69 = arith.addf %59, %68 : vector<8x128xf32>
    %c0_26 = arith.constant 0 : index
    %70 = arith.index_cast %c0_i32_23 : i32 to index
    %c0_27 = arith.constant 0 : index
    %71 = vector.load %arg8[%c0_26, %70, %c0_27] : memref<8x16x128xf32, #tpu.memory_space<vmem>>, vector<8x1x128xf32>
    %72 = vector.shape_cast %71 : vector<8x1x128xf32> to vector<8x128xf32>
    %73 = arith.addf %69, %72 : vector<8x128xf32>
    %74 = vector.broadcast %c0_i32_23 : i32 to vector<8x1xi32>
    %75 = arith.cmpi slt, %74, %38 : vector<8x1xi32>
    %76 = vector.shape_cast %75 : vector<8x1xi1> to vector<8x1xi1>
    %77 = vector.broadcast %76 : vector<8x1xi1> to vector<8x128xi1>
    %78 = arith.select %77, %73, %51 : vector<8x128xi1>, vector<8x128xf32>
    %c1_i32_28 = arith.constant 1 : i32
    %c1_i32_29 = arith.constant 1 : i32
    %79 = tpu.dynamic_rotate %78 by %c1_i32_29 dim 1 : vector<8x128xf32>, i32 -> vector<8x128xf32>
    %80 = vector.broadcast %cst_22 : f32 to vector<8x128xf32>
    %81 = arith.select %37, %79, %80 : vector<8x128xi1>, vector<8x128xf32>
    %c2_i32_30 = arith.constant 2 : i32
    %82 = tpu.dynamic_rotate %78 by %c2_i32_30 dim 1 : vector<8x128xf32>, i32 -> vector<8x128xf32>
    %83 = vector.broadcast %cst_22 : f32 to vector<8x128xf32>
    %84 = arith.select %35, %82, %83 : vector<8x128xi1>, vector<8x128xf32>
    %85 = arith.maximumf %78, %81 : vector<8x128xf32>
    %86 = arith.maximumf %85, %84 : vector<8x128xf32>
    %87 = arith.subf %78, %86 : vector<8x128xf32>
    %88 = math.exp %87 : vector<8x128xf32>
    %89 = arith.subf %81, %86 : vector<8x128xf32>
    %90 = math.exp %89 : vector<8x128xf32>
    %91 = arith.addf %88, %90 : vector<8x128xf32>
    %92 = arith.subf %84, %86 : vector<8x128xf32>
    %93 = math.exp %92 : vector<8x128xf32>
    %94 = arith.addf %91, %93 : vector<8x128xf32>
    %95 = math.log %94 : vector<8x128xf32>
    %96 = arith.addf %86, %95 : vector<8x128xf32>
    %c0_31 = arith.constant 0 : index
    %97 = arith.index_cast %c1_i32_28 : i32 to index
    %c0_32 = arith.constant 0 : index
    %98 = vector.load %arg8[%c0_31, %97, %c0_32] : memref<8x16x128xf32, #tpu.memory_space<vmem>>, vector<8x1x128xf32>
    %99 = vector.shape_cast %98 : vector<8x1x128xf32> to vector<8x128xf32>
    %100 = arith.addf %96, %99 : vector<8x128xf32>
    %101 = vector.broadcast %c1_i32_28 : i32 to vector<8x1xi32>
    %102 = arith.cmpi slt, %101, %38 : vector<8x1xi32>
    %103 = vector.shape_cast %102 : vector<8x1xi1> to vector<8x1xi1>
    %104 = vector.broadcast %103 : vector<8x1xi1> to vector<8x128xi1>
    %105 = arith.select %104, %100, %78 : vector<8x128xi1>, vector<8x128xf32>
    %c2_i32_33 = arith.constant 2 : i32
    %c1_i32_34 = arith.constant 1 : i32
    %106 = tpu.dynamic_rotate %105 by %c1_i32_34 dim 1 : vector<8x128xf32>, i32 -> vector<8x128xf32>
    %107 = vector.broadcast %cst_22 : f32 to vector<8x128xf32>
    %108 = arith.select %37, %106, %107 : vector<8x128xi1>, vector<8x128xf32>
    %c2_i32_35 = arith.constant 2 : i32
    %109 = tpu.dynamic_rotate %105 by %c2_i32_35 dim 1 : vector<8x128xf32>, i32 -> vector<8x128xf32>
    %110 = vector.broadcast %cst_22 : f32 to vector<8x128xf32>
    %111 = arith.select %35, %109, %110 : vector<8x128xi1>, vector<8x128xf32>
    %112 = arith.maximumf %105, %108 : vector<8x128xf32>
    %113 = arith.maximumf %112, %111 : vector<8x128xf32>
    %114 = arith.subf %105, %113 : vector<8x128xf32>
    %115 = math.exp %114 : vector<8x128xf32>
    %116 = arith.subf %108, %113 : vector<8x128xf32>
    %117 = math.exp %116 : vector<8x128xf32>
    %118 = arith.addf %115, %117 : vector<8x128xf32>
    %119 = arith.subf %111, %113 : vector<8x128xf32>
    %120 = math.exp %119 : vector<8x128xf32>
    %121 = arith.addf %118, %120 : vector<8x128xf32>
    %122 = math.log %121 : vector<8x128xf32>
    %123 = arith.addf %113, %122 : vector<8x128xf32>
    %c0_36 = arith.constant 0 : index
    %124 = arith.index_cast %c2_i32_33 : i32 to index
    %c0_37 = arith.constant 0 : index
    %125 = vector.load %arg8[%c0_36, %124, %c0_37] : memref<8x16x128xf32, #tpu.memory_space<vmem>>, vector<8x1x128xf32>
    %126 = vector.shape_cast %125 : vector<8x1x128xf32> to vector<8x128xf32>
    %127 = arith.addf %123, %126 : vector<8x128xf32>
    %128 = vector.broadcast %c2_i32_33 : i32 to vector<8x1xi32>
    %129 = arith.cmpi slt, %128, %38 : vector<8x1xi32>
    %130 = vector.shape_cast %129 : vector<8x1xi1> to vector<8x1xi1>
    %131 = vector.broadcast %130 : vector<8x1xi1> to vector<8x128xi1>
    %132 = arith.select %131, %127, %105 : vector<8x128xi1>, vector<8x128xf32>
    %c3_i32 = arith.constant 3 : i32
    %c1_i32_38 = arith.constant 1 : i32
    %133 = tpu.dynamic_rotate %132 by %c1_i32_38 dim 1 : vector<8x128xf32>, i32 -> vector<8x128xf32>
    %134 = vector.broadcast %cst_22 : f32 to vector<8x128xf32>
    %135 = arith.select %37, %133, %134 : vector<8x128xi1>, vector<8x128xf32>
    %c2_i32_39 = arith.constant 2 : i32
    %136 = tpu.dynamic_rotate %132 by %c2_i32_39 dim 1 : vector<8x128xf32>, i32 -> vector<8x128xf32>
    %137 = vector.broadcast %cst_22 : f32 to vector<8x128xf32>
    %138 = arith.select %35, %136, %137 : vector<8x128xi1>, vector<8x128xf32>
    %139 = arith.maximumf %132, %135 : vector<8x128xf32>
    %140 = arith.maximumf %139, %138 : vector<8x128xf32>
    %141 = arith.subf %132, %140 : vector<8x128xf32>
    %142 = math.exp %141 : vector<8x128xf32>
    %143 = arith.subf %135, %140 : vector<8x128xf32>
    %144 = math.exp %143 : vector<8x128xf32>
    %145 = arith.addf %142, %144 : vector<8x128xf32>
    %146 = arith.subf %138, %140 : vector<8x128xf32>
    %147 = math.exp %146 : vector<8x128xf32>
    %148 = arith.addf %145, %147 : vector<8x128xf32>
    %149 = math.log %148 : vector<8x128xf32>
    %150 = arith.addf %140, %149 : vector<8x128xf32>
    %c0_40 = arith.constant 0 : index
    %151 = arith.index_cast %c3_i32 : i32 to index
    %c0_41 = arith.constant 0 : index
    %152 = vector.load %arg8[%c0_40, %151, %c0_41] : memref<8x16x128xf32, #tpu.memory_space<vmem>>, vector<8x1x128xf32>
    %153 = vector.shape_cast %152 : vector<8x1x128xf32> to vector<8x128xf32>
    %154 = arith.addf %150, %153 : vector<8x128xf32>
    %155 = vector.broadcast %c3_i32 : i32 to vector<8x1xi32>
    %156 = arith.cmpi slt, %155, %38 : vector<8x1xi32>
    %157 = vector.shape_cast %156 : vector<8x1xi1> to vector<8x1xi1>
    %158 = vector.broadcast %157 : vector<8x1xi1> to vector<8x128xi1>
    %159 = arith.select %158, %154, %132 : vector<8x128xi1>, vector<8x128xf32>
    %c4_i32 = arith.constant 4 : i32
    %c1_i32_42 = arith.constant 1 : i32
    %160 = tpu.dynamic_rotate %159 by %c1_i32_42 dim 1 : vector<8x128xf32>, i32 -> vector<8x128xf32>
    %161 = vector.broadcast %cst_22 : f32 to vector<8x128xf32>
    %162 = arith.select %37, %160, %161 : vector<8x128xi1>, vector<8x128xf32>
    %c2_i32_43 = arith.constant 2 : i32
    %163 = tpu.dynamic_rotate %159 by %c2_i32_43 dim 1 : vector<8x128xf32>, i32 -> vector<8x128xf32>
    %164 = vector.broadcast %cst_22 : f32 to vector<8x128xf32>
    %165 = arith.select %35, %163, %164 : vector<8x128xi1>, vector<8x128xf32>
    %166 = arith.maximumf %159, %162 : vector<8x128xf32>
    %167 = arith.maximumf %166, %165 : vector<8x128xf32>
    %168 = arith.subf %159, %167 : vector<8x128xf32>
    %169 = math.exp %168 : vector<8x128xf32>
    %170 = arith.subf %162, %167 : vector<8x128xf32>
    %171 = math.exp %170 : vector<8x128xf32>
    %172 = arith.addf %169, %171 : vector<8x128xf32>
    %173 = arith.subf %165, %167 : vector<8x128xf32>
    %174 = math.exp %173 : vector<8x128xf32>
    %175 = arith.addf %172, %174 : vector<8x128xf32>
    %176 = math.log %175 : vector<8x128xf32>
    %177 = arith.addf %167, %176 : vector<8x128xf32>
    %c0_44 = arith.constant 0 : index
    %178 = arith.index_cast %c4_i32 : i32 to index
    %c0_45 = arith.constant 0 : index
    %179 = vector.load %arg8[%c0_44, %178, %c0_45] : memref<8x16x128xf32, #tpu.memory_space<vmem>>, vector<8x1x128xf32>
    %180 = vector.shape_cast %179 : vector<8x1x128xf32> to vector<8x128xf32>
    %181 = arith.addf %177, %180 : vector<8x128xf32>
    %182 = vector.broadcast %c4_i32 : i32 to vector<8x1xi32>
    %183 = arith.cmpi slt, %182, %38 : vector<8x1xi32>
    %184 = vector.shape_cast %183 : vector<8x1xi1> to vector<8x1xi1>
    %185 = vector.broadcast %184 : vector<8x1xi1> to vector<8x128xi1>
    %186 = arith.select %185, %181, %159 : vector<8x128xi1>, vector<8x128xf32>
    %c5_i32 = arith.constant 5 : i32
    %c1_i32_46 = arith.constant 1 : i32
    %187 = tpu.dynamic_rotate %186 by %c1_i32_46 dim 1 : vector<8x128xf32>, i32 -> vector<8x128xf32>
    %188 = vector.broadcast %cst_22 : f32 to vector<8x128xf32>
    %189 = arith.select %37, %187, %188 : vector<8x128xi1>, vector<8x128xf32>
    %c2_i32_47 = arith.constant 2 : i32
    %190 = tpu.dynamic_rotate %186 by %c2_i32_47 dim 1 : vector<8x128xf32>, i32 -> vector<8x128xf32>
    %191 = vector.broadcast %cst_22 : f32 to vector<8x128xf32>
    %192 = arith.select %35, %190, %191 : vector<8x128xi1>, vector<8x128xf32>
    %193 = arith.maximumf %186, %189 : vector<8x128xf32>
    %194 = arith.maximumf %193, %192 : vector<8x128xf32>
    %195 = arith.subf %186, %194 : vector<8x128xf32>
    %196 = math.exp %195 : vector<8x128xf32>
    %197 = arith.subf %189, %194 : vector<8x128xf32>
    %198 = math.exp %197 : vector<8x128xf32>
    %199 = arith.addf %196, %198 : vector<8x128xf32>
    %200 = arith.subf %192, %194 : vector<8x128xf32>
    %201 = math.exp %200 : vector<8x128xf32>
    %202 = arith.addf %199, %201 : vector<8x128xf32>
    %203 = math.log %202 : vector<8x128xf32>
    %204 = arith.addf %194, %203 : vector<8x128xf32>
    %c0_48 = arith.constant 0 : index
    %205 = arith.index_cast %c5_i32 : i32 to index
    %c0_49 = arith.constant 0 : index
    %206 = vector.load %arg8[%c0_48, %205, %c0_49] : memref<8x16x128xf32, #tpu.memory_space<vmem>>, vector<8x1x128xf32>
    %207 = vector.shape_cast %206 : vector<8x1x128xf32> to vector<8x128xf32>
    %208 = arith.addf %204, %207 : vector<8x128xf32>
    %209 = vector.broadcast %c5_i32 : i32 to vector<8x1xi32>
    %210 = arith.cmpi slt, %209, %38 : vector<8x1xi32>
    %211 = vector.shape_cast %210 : vector<8x1xi1> to vector<8x1xi1>
    %212 = vector.broadcast %211 : vector<8x1xi1> to vector<8x128xi1>
    %213 = arith.select %212, %208, %186 : vector<8x128xi1>, vector<8x128xf32>
    %c6_i32 = arith.constant 6 : i32
    %c1_i32_50 = arith.constant 1 : i32
    %214 = tpu.dynamic_rotate %213 by %c1_i32_50 dim 1 : vector<8x128xf32>, i32 -> vector<8x128xf32>
    %215 = vector.broadcast %cst_22 : f32 to vector<8x128xf32>
    %216 = arith.select %37, %214, %215 : vector<8x128xi1>, vector<8x128xf32>
    %c2_i32_51 = arith.constant 2 : i32
    %217 = tpu.dynamic_rotate %213 by %c2_i32_51 dim 1 : vector<8x128xf32>, i32 -> vector<8x128xf32>
    %218 = vector.broadcast %cst_22 : f32 to vector<8x128xf32>
    %219 = arith.select %35, %217, %218 : vector<8x128xi1>, vector<8x128xf32>
    %220 = arith.maximumf %213, %216 : vector<8x128xf32>
    %221 = arith.maximumf %220, %219 : vector<8x128xf32>
    %222 = arith.subf %213, %221 : vector<8x128xf32>
    %223 = math.exp %222 : vector<8x128xf32>
    %224 = arith.subf %216, %221 : vector<8x128xf32>
    %225 = math.exp %224 : vector<8x128xf32>
    %226 = arith.addf %223, %225 : vector<8x128xf32>
    %227 = arith.subf %219, %221 : vector<8x128xf32>
    %228 = math.exp %227 : vector<8x128xf32>
    %229 = arith.addf %226, %228 : vector<8x128xf32>
    %230 = math.log %229 : vector<8x128xf32>
    %231 = arith.addf %221, %230 : vector<8x128xf32>
    %c0_52 = arith.constant 0 : index
    %232 = arith.index_cast %c6_i32 : i32 to index
    %c0_53 = arith.constant 0 : index
    %233 = vector.load %arg8[%c0_52, %232, %c0_53] : memref<8x16x128xf32, #tpu.memory_space<vmem>>, vector<8x1x128xf32>
    %234 = vector.shape_cast %233 : vector<8x1x128xf32> to vector<8x128xf32>
    %235 = arith.addf %231, %234 : vector<8x128xf32>
    %236 = vector.broadcast %c6_i32 : i32 to vector<8x1xi32>
    %237 = arith.cmpi slt, %236, %38 : vector<8x1xi32>
    %238 = vector.shape_cast %237 : vector<8x1xi1> to vector<8x1xi1>
    %239 = vector.broadcast %238 : vector<8x1xi1> to vector<8x128xi1>
    %240 = arith.select %239, %235, %213 : vector<8x128xi1>, vector<8x128xf32>
    %c7_i32 = arith.constant 7 : i32
    %c1_i32_54 = arith.constant 1 : i32
    %241 = tpu.dynamic_rotate %240 by %c1_i32_54 dim 1 : vector<8x128xf32>, i32 -> vector<8x128xf32>
    %242 = vector.broadcast %cst_22 : f32 to vector<8x128xf32>
    %243 = arith.select %37, %241, %242 : vector<8x128xi1>, vector<8x128xf32>
    %c2_i32_55 = arith.constant 2 : i32
    %244 = tpu.dynamic_rotate %240 by %c2_i32_55 dim 1 : vector<8x128xf32>, i32 -> vector<8x128xf32>
    %245 = vector.broadcast %cst_22 : f32 to vector<8x128xf32>
    %246 = arith.select %35, %244, %245 : vector<8x128xi1>, vector<8x128xf32>
    %247 = arith.maximumf %240, %243 : vector<8x128xf32>
    %248 = arith.maximumf %247, %246 : vector<8x128xf32>
    %249 = arith.subf %240, %248 : vector<8x128xf32>
    %250 = math.exp %249 : vector<8x128xf32>
    %251 = arith.subf %243, %248 : vector<8x128xf32>
    %252 = math.exp %251 : vector<8x128xf32>
    %253 = arith.addf %250, %252 : vector<8x128xf32>
    %254 = arith.subf %246, %248 : vector<8x128xf32>
    %255 = math.exp %254 : vector<8x128xf32>
    %256 = arith.addf %253, %255 : vector<8x128xf32>
    %257 = math.log %256 : vector<8x128xf32>
    %258 = arith.addf %248, %257 : vector<8x128xf32>
    %c0_56 = arith.constant 0 : index
    %259 = arith.index_cast %c7_i32 : i32 to index
    %c0_57 = arith.constant 0 : index
    %260 = vector.load %arg8[%c0_56, %259, %c0_57] : memref<8x16x128xf32, #tpu.memory_space<vmem>>, vector<8x1x128xf32>
    %261 = vector.shape_cast %260 : vector<8x1x128xf32> to vector<8x128xf32>
    %262 = arith.addf %258, %261 : vector<8x128xf32>
    %263 = vector.broadcast %c7_i32 : i32 to vector<8x1xi32>
    %264 = arith.cmpi slt, %263, %38 : vector<8x1xi32>
    %265 = vector.shape_cast %264 : vector<8x1xi1> to vector<8x1xi1>
    %266 = vector.broadcast %265 : vector<8x1xi1> to vector<8x128xi1>
    %267 = arith.select %266, %262, %240 : vector<8x128xi1>, vector<8x128xf32>
    %c8_i32 = arith.constant 8 : i32
    %c1_i32_58 = arith.constant 1 : i32
    %268 = tpu.dynamic_rotate %267 by %c1_i32_58 dim 1 : vector<8x128xf32>, i32 -> vector<8x128xf32>
    %269 = vector.broadcast %cst_22 : f32 to vector<8x128xf32>
    %270 = arith.select %37, %268, %269 : vector<8x128xi1>, vector<8x128xf32>
    %c2_i32_59 = arith.constant 2 : i32
    %271 = tpu.dynamic_rotate %267 by %c2_i32_59 dim 1 : vector<8x128xf32>, i32 -> vector<8x128xf32>
    %272 = vector.broadcast %cst_22 : f32 to vector<8x128xf32>
    %273 = arith.select %35, %271, %272 : vector<8x128xi1>, vector<8x128xf32>
    %274 = arith.maximumf %267, %270 : vector<8x128xf32>
    %275 = arith.maximumf %274, %273 : vector<8x128xf32>
    %276 = arith.subf %267, %275 : vector<8x128xf32>
    %277 = math.exp %276 : vector<8x128xf32>
    %278 = arith.subf %270, %275 : vector<8x128xf32>
    %279 = math.exp %278 : vector<8x128xf32>
    %280 = arith.addf %277, %279 : vector<8x128xf32>
    %281 = arith.subf %273, %275 : vector<8x128xf32>
    %282 = math.exp %281 : vector<8x128xf32>
    %283 = arith.addf %280, %282 : vector<8x128xf32>
    %284 = math.log %283 : vector<8x128xf32>
    %285 = arith.addf %275, %284 : vector<8x128xf32>
    %c0_60 = arith.constant 0 : index
    %286 = arith.index_cast %c8_i32 : i32 to index
    %c0_61 = arith.constant 0 : index
    %287 = vector.load %arg8[%c0_60, %286, %c0_61] : memref<8x16x128xf32, #tpu.memory_space<vmem>>, vector<8x1x128xf32>
    %288 = vector.shape_cast %287 : vector<8x1x128xf32> to vector<8x128xf32>
    %289 = arith.addf %285, %288 : vector<8x128xf32>
    %290 = vector.broadcast %c8_i32 : i32 to vector<8x1xi32>
    %291 = arith.cmpi slt, %290, %38 : vector<8x1xi32>
    %292 = vector.shape_cast %291 : vector<8x1xi1> to vector<8x1xi1>
    %293 = vector.broadcast %292 : vector<8x1xi1> to vector<8x128xi1>
    %294 = arith.select %293, %289, %267 : vector<8x128xi1>, vector<8x128xf32>
    %c9_i32 = arith.constant 9 : i32
    %c1_i32_62 = arith.constant 1 : i32
    %295 = tpu.dynamic_rotate %294 by %c1_i32_62 dim 1 : vector<8x128xf32>, i32 -> vector<8x128xf32>
    %296 = vector.broadcast %cst_22 : f32 to vector<8x128xf32>
    %297 = arith.select %37, %295, %296 : vector<8x128xi1>, vector<8x128xf32>
    %c2_i32_63 = arith.constant 2 : i32
    %298 = tpu.dynamic_rotate %294 by %c2_i32_63 dim 1 : vector<8x128xf32>, i32 -> vector<8x128xf32>
    %299 = vector.broadcast %cst_22 : f32 to vector<8x128xf32>
    %300 = arith.select %35, %298, %299 : vector<8x128xi1>, vector<8x128xf32>
    %301 = arith.maximumf %294, %297 : vector<8x128xf32>
    %302 = arith.maximumf %301, %300 : vector<8x128xf32>
    %303 = arith.subf %294, %302 : vector<8x128xf32>
    %304 = math.exp %303 : vector<8x128xf32>
    %305 = arith.subf %297, %302 : vector<8x128xf32>
    %306 = math.exp %305 : vector<8x128xf32>
    %307 = arith.addf %304, %306 : vector<8x128xf32>
    %308 = arith.subf %300, %302 : vector<8x128xf32>
    %309 = math.exp %308 : vector<8x128xf32>
    %310 = arith.addf %307, %309 : vector<8x128xf32>
    %311 = math.log %310 : vector<8x128xf32>
    %312 = arith.addf %302, %311 : vector<8x128xf32>
    %c0_64 = arith.constant 0 : index
    %313 = arith.index_cast %c9_i32 : i32 to index
    %c0_65 = arith.constant 0 : index
    %314 = vector.load %arg8[%c0_64, %313, %c0_65] : memref<8x16x128xf32, #tpu.memory_space<vmem>>, vector<8x1x128xf32>
    %315 = vector.shape_cast %314 : vector<8x1x128xf32> to vector<8x128xf32>
    %316 = arith.addf %312, %315 : vector<8x128xf32>
    %317 = vector.broadcast %c9_i32 : i32 to vector<8x1xi32>
    %318 = arith.cmpi slt, %317, %38 : vector<8x1xi32>
    %319 = vector.shape_cast %318 : vector<8x1xi1> to vector<8x1xi1>
    %320 = vector.broadcast %319 : vector<8x1xi1> to vector<8x128xi1>
    %321 = arith.select %320, %316, %294 : vector<8x128xi1>, vector<8x128xf32>
    %c10_i32 = arith.constant 10 : i32
    %c1_i32_66 = arith.constant 1 : i32
    %322 = tpu.dynamic_rotate %321 by %c1_i32_66 dim 1 : vector<8x128xf32>, i32 -> vector<8x128xf32>
    %323 = vector.broadcast %cst_22 : f32 to vector<8x128xf32>
    %324 = arith.select %37, %322, %323 : vector<8x128xi1>, vector<8x128xf32>
    %c2_i32_67 = arith.constant 2 : i32
    %325 = tpu.dynamic_rotate %321 by %c2_i32_67 dim 1 : vector<8x128xf32>, i32 -> vector<8x128xf32>
    %326 = vector.broadcast %cst_22 : f32 to vector<8x128xf32>
    %327 = arith.select %35, %325, %326 : vector<8x128xi1>, vector<8x128xf32>
    %328 = arith.maximumf %321, %324 : vector<8x128xf32>
    %329 = arith.maximumf %328, %327 : vector<8x128xf32>
    %330 = arith.subf %321, %329 : vector<8x128xf32>
    %331 = math.exp %330 : vector<8x128xf32>
    %332 = arith.subf %324, %329 : vector<8x128xf32>
    %333 = math.exp %332 : vector<8x128xf32>
    %334 = arith.addf %331, %333 : vector<8x128xf32>
    %335 = arith.subf %327, %329 : vector<8x128xf32>
    %336 = math.exp %335 : vector<8x128xf32>
    %337 = arith.addf %334, %336 : vector<8x128xf32>
    %338 = math.log %337 : vector<8x128xf32>
    %339 = arith.addf %329, %338 : vector<8x128xf32>
    %c0_68 = arith.constant 0 : index
    %340 = arith.index_cast %c10_i32 : i32 to index
    %c0_69 = arith.constant 0 : index
    %341 = vector.load %arg8[%c0_68, %340, %c0_69] : memref<8x16x128xf32, #tpu.memory_space<vmem>>, vector<8x1x128xf32>
    %342 = vector.shape_cast %341 : vector<8x1x128xf32> to vector<8x128xf32>
    %343 = arith.addf %339, %342 : vector<8x128xf32>
    %344 = vector.broadcast %c10_i32 : i32 to vector<8x1xi32>
    %345 = arith.cmpi slt, %344, %38 : vector<8x1xi32>
    %346 = vector.shape_cast %345 : vector<8x1xi1> to vector<8x1xi1>
    %347 = vector.broadcast %346 : vector<8x1xi1> to vector<8x128xi1>
    %348 = arith.select %347, %343, %321 : vector<8x128xi1>, vector<8x128xf32>
    %c11_i32 = arith.constant 11 : i32
    %c1_i32_70 = arith.constant 1 : i32
    %349 = tpu.dynamic_rotate %348 by %c1_i32_70 dim 1 : vector<8x128xf32>, i32 -> vector<8x128xf32>
    %350 = vector.broadcast %cst_22 : f32 to vector<8x128xf32>
    %351 = arith.select %37, %349, %350 : vector<8x128xi1>, vector<8x128xf32>
    %c2_i32_71 = arith.constant 2 : i32
    %352 = tpu.dynamic_rotate %348 by %c2_i32_71 dim 1 : vector<8x128xf32>, i32 -> vector<8x128xf32>
    %353 = vector.broadcast %cst_22 : f32 to vector<8x128xf32>
    %354 = arith.select %35, %352, %353 : vector<8x128xi1>, vector<8x128xf32>
    %355 = arith.maximumf %348, %351 : vector<8x128xf32>
    %356 = arith.maximumf %355, %354 : vector<8x128xf32>
    %357 = arith.subf %348, %356 : vector<8x128xf32>
    %358 = math.exp %357 : vector<8x128xf32>
    %359 = arith.subf %351, %356 : vector<8x128xf32>
    %360 = math.exp %359 : vector<8x128xf32>
    %361 = arith.addf %358, %360 : vector<8x128xf32>
    %362 = arith.subf %354, %356 : vector<8x128xf32>
    %363 = math.exp %362 : vector<8x128xf32>
    %364 = arith.addf %361, %363 : vector<8x128xf32>
    %365 = math.log %364 : vector<8x128xf32>
    %366 = arith.addf %356, %365 : vector<8x128xf32>
    %c0_72 = arith.constant 0 : index
    %367 = arith.index_cast %c11_i32 : i32 to index
    %c0_73 = arith.constant 0 : index
    %368 = vector.load %arg8[%c0_72, %367, %c0_73] : memref<8x16x128xf32, #tpu.memory_space<vmem>>, vector<8x1x128xf32>
    %369 = vector.shape_cast %368 : vector<8x1x128xf32> to vector<8x128xf32>
    %370 = arith.addf %366, %369 : vector<8x128xf32>
    %371 = vector.broadcast %c11_i32 : i32 to vector<8x1xi32>
    %372 = arith.cmpi slt, %371, %38 : vector<8x1xi32>
    %373 = vector.shape_cast %372 : vector<8x1xi1> to vector<8x1xi1>
    %374 = vector.broadcast %373 : vector<8x1xi1> to vector<8x128xi1>
    %375 = arith.select %374, %370, %348 : vector<8x128xi1>, vector<8x128xf32>
    %c12_i32 = arith.constant 12 : i32
    %c1_i32_74 = arith.constant 1 : i32
    %376 = tpu.dynamic_rotate %375 by %c1_i32_74 dim 1 : vector<8x128xf32>, i32 -> vector<8x128xf32>
    %377 = vector.broadcast %cst_22 : f32 to vector<8x128xf32>
    %378 = arith.select %37, %376, %377 : vector<8x128xi1>, vector<8x128xf32>
    %c2_i32_75 = arith.constant 2 : i32
    %379 = tpu.dynamic_rotate %375 by %c2_i32_75 dim 1 : vector<8x128xf32>, i32 -> vector<8x128xf32>
    %380 = vector.broadcast %cst_22 : f32 to vector<8x128xf32>
    %381 = arith.select %35, %379, %380 : vector<8x128xi1>, vector<8x128xf32>
    %382 = arith.maximumf %375, %378 : vector<8x128xf32>
    %383 = arith.maximumf %382, %381 : vector<8x128xf32>
    %384 = arith.subf %375, %383 : vector<8x128xf32>
    %385 = math.exp %384 : vector<8x128xf32>
    %386 = arith.subf %378, %383 : vector<8x128xf32>
    %387 = math.exp %386 : vector<8x128xf32>
    %388 = arith.addf %385, %387 : vector<8x128xf32>
    %389 = arith.subf %381, %383 : vector<8x128xf32>
    %390 = math.exp %389 : vector<8x128xf32>
    %391 = arith.addf %388, %390 : vector<8x128xf32>
    %392 = math.log %391 : vector<8x128xf32>
    %393 = arith.addf %383, %392 : vector<8x128xf32>
    %c0_76 = arith.constant 0 : index
    %394 = arith.index_cast %c12_i32 : i32 to index
    %c0_77 = arith.constant 0 : index
    %395 = vector.load %arg8[%c0_76, %394, %c0_77] : memref<8x16x128xf32, #tpu.memory_space<vmem>>, vector<8x1x128xf32>
    %396 = vector.shape_cast %395 : vector<8x1x128xf32> to vector<8x128xf32>
    %397 = arith.addf %393, %396 : vector<8x128xf32>
    %398 = vector.broadcast %c12_i32 : i32 to vector<8x1xi32>
    %399 = arith.cmpi slt, %398, %38 : vector<8x1xi32>
    %400 = vector.shape_cast %399 : vector<8x1xi1> to vector<8x1xi1>
    %401 = vector.broadcast %400 : vector<8x1xi1> to vector<8x128xi1>
    %402 = arith.select %401, %397, %375 : vector<8x128xi1>, vector<8x128xf32>
    %c13_i32 = arith.constant 13 : i32
    %c1_i32_78 = arith.constant 1 : i32
    %403 = tpu.dynamic_rotate %402 by %c1_i32_78 dim 1 : vector<8x128xf32>, i32 -> vector<8x128xf32>
    %404 = vector.broadcast %cst_22 : f32 to vector<8x128xf32>
    %405 = arith.select %37, %403, %404 : vector<8x128xi1>, vector<8x128xf32>
    %c2_i32_79 = arith.constant 2 : i32
    %406 = tpu.dynamic_rotate %402 by %c2_i32_79 dim 1 : vector<8x128xf32>, i32 -> vector<8x128xf32>
    %407 = vector.broadcast %cst_22 : f32 to vector<8x128xf32>
    %408 = arith.select %35, %406, %407 : vector<8x128xi1>, vector<8x128xf32>
    %409 = arith.maximumf %402, %405 : vector<8x128xf32>
    %410 = arith.maximumf %409, %408 : vector<8x128xf32>
    %411 = arith.subf %402, %410 : vector<8x128xf32>
    %412 = math.exp %411 : vector<8x128xf32>
    %413 = arith.subf %405, %410 : vector<8x128xf32>
    %414 = math.exp %413 : vector<8x128xf32>
    %415 = arith.addf %412, %414 : vector<8x128xf32>
    %416 = arith.subf %408, %410 : vector<8x128xf32>
    %417 = math.exp %416 : vector<8x128xf32>
    %418 = arith.addf %415, %417 : vector<8x128xf32>
    %419 = math.log %418 : vector<8x128xf32>
    %420 = arith.addf %410, %419 : vector<8x128xf32>
    %c0_80 = arith.constant 0 : index
    %421 = arith.index_cast %c13_i32 : i32 to index
    %c0_81 = arith.constant 0 : index
    %422 = vector.load %arg8[%c0_80, %421, %c0_81] : memref<8x16x128xf32, #tpu.memory_space<vmem>>, vector<8x1x128xf32>
    %423 = vector.shape_cast %422 : vector<8x1x128xf32> to vector<8x128xf32>
    %424 = arith.addf %420, %423 : vector<8x128xf32>
    %425 = vector.broadcast %c13_i32 : i32 to vector<8x1xi32>
    %426 = arith.cmpi slt, %425, %38 : vector<8x1xi32>
    %427 = vector.shape_cast %426 : vector<8x1xi1> to vector<8x1xi1>
    %428 = vector.broadcast %427 : vector<8x1xi1> to vector<8x128xi1>
    %429 = arith.select %428, %424, %402 : vector<8x128xi1>, vector<8x128xf32>
    %c14_i32 = arith.constant 14 : i32
    %c1_i32_82 = arith.constant 1 : i32
    %430 = tpu.dynamic_rotate %429 by %c1_i32_82 dim 1 : vector<8x128xf32>, i32 -> vector<8x128xf32>
    %431 = vector.broadcast %cst_22 : f32 to vector<8x128xf32>
    %432 = arith.select %37, %430, %431 : vector<8x128xi1>, vector<8x128xf32>
    %c2_i32_83 = arith.constant 2 : i32
    %433 = tpu.dynamic_rotate %429 by %c2_i32_83 dim 1 : vector<8x128xf32>, i32 -> vector<8x128xf32>
    %434 = vector.broadcast %cst_22 : f32 to vector<8x128xf32>
    %435 = arith.select %35, %433, %434 : vector<8x128xi1>, vector<8x128xf32>
    %436 = arith.maximumf %429, %432 : vector<8x128xf32>
    %437 = arith.maximumf %436, %435 : vector<8x128xf32>
    %438 = arith.subf %429, %437 : vector<8x128xf32>
    %439 = math.exp %438 : vector<8x128xf32>
    %440 = arith.subf %432, %437 : vector<8x128xf32>
    %441 = math.exp %440 : vector<8x128xf32>
    %442 = arith.addf %439, %441 : vector<8x128xf32>
    %443 = arith.subf %435, %437 : vector<8x128xf32>
    %444 = math.exp %443 : vector<8x128xf32>
    %445 = arith.addf %442, %444 : vector<8x128xf32>
    %446 = math.log %445 : vector<8x128xf32>
    %447 = arith.addf %437, %446 : vector<8x128xf32>
    %c0_84 = arith.constant 0 : index
    %448 = arith.index_cast %c14_i32 : i32 to index
    %c0_85 = arith.constant 0 : index
    %449 = vector.load %arg8[%c0_84, %448, %c0_85] : memref<8x16x128xf32, #tpu.memory_space<vmem>>, vector<8x1x128xf32>
    %450 = vector.shape_cast %449 : vector<8x1x128xf32> to vector<8x128xf32>
    %451 = arith.addf %447, %450 : vector<8x128xf32>
    %452 = vector.broadcast %c14_i32 : i32 to vector<8x1xi32>
    %453 = arith.cmpi slt, %452, %38 : vector<8x1xi32>
    %454 = vector.shape_cast %453 : vector<8x1xi1> to vector<8x1xi1>
    %455 = vector.broadcast %454 : vector<8x1xi1> to vector<8x128xi1>
    %456 = arith.select %455, %451, %429 : vector<8x128xi1>, vector<8x128xf32>
    %c15_i32 = arith.constant 15 : i32
    %c1_i32_86 = arith.constant 1 : i32
    %457 = tpu.dynamic_rotate %456 by %c1_i32_86 dim 1 : vector<8x128xf32>, i32 -> vector<8x128xf32>
    %458 = vector.broadcast %cst_22 : f32 to vector<8x128xf32>
    %459 = arith.select %37, %457, %458 : vector<8x128xi1>, vector<8x128xf32>
    %c2_i32_87 = arith.constant 2 : i32
    %460 = tpu.dynamic_rotate %456 by %c2_i32_87 dim 1 : vector<8x128xf32>, i32 -> vector<8x128xf32>
    %461 = vector.broadcast %cst_22 : f32 to vector<8x128xf32>
    %462 = arith.select %35, %460, %461 : vector<8x128xi1>, vector<8x128xf32>
    %463 = arith.maximumf %456, %459 : vector<8x128xf32>
    %464 = arith.maximumf %463, %462 : vector<8x128xf32>
    %465 = arith.subf %456, %464 : vector<8x128xf32>
    %466 = math.exp %465 : vector<8x128xf32>
    %467 = arith.subf %459, %464 : vector<8x128xf32>
    %468 = math.exp %467 : vector<8x128xf32>
    %469 = arith.addf %466, %468 : vector<8x128xf32>
    %470 = arith.subf %462, %464 : vector<8x128xf32>
    %471 = math.exp %470 : vector<8x128xf32>
    %472 = arith.addf %469, %471 : vector<8x128xf32>
    %473 = math.log %472 : vector<8x128xf32>
    %474 = arith.addf %464, %473 : vector<8x128xf32>
    %c0_88 = arith.constant 0 : index
    %475 = arith.index_cast %c15_i32 : i32 to index
    %c0_89 = arith.constant 0 : index
    %476 = vector.load %arg8[%c0_88, %475, %c0_89] : memref<8x16x128xf32, #tpu.memory_space<vmem>>, vector<8x1x128xf32>
    %477 = vector.shape_cast %476 : vector<8x1x128xf32> to vector<8x128xf32>
    %478 = arith.addf %474, %477 : vector<8x128xf32>
    %479 = vector.broadcast %c15_i32 : i32 to vector<8x1xi32>
    %480 = arith.cmpi slt, %479, %38 : vector<8x1xi32>
    %481 = vector.shape_cast %480 : vector<8x1xi1> to vector<8x1xi1>
    %482 = vector.broadcast %481 : vector<8x1xi1> to vector<8x128xi1>
    %483 = arith.select %482, %478, %456 : vector<8x128xi1>, vector<8x128xf32>
    %c16_i32 = arith.constant 16 : i32
    %cst_90 = arith.constant -1.000000e+30 : f32
    %484 = vector.broadcast %cst_90 : f32 to vector<8x128xf32>
    %485 = arith.select %46, %483, %484 : vector<8x128xi1>, vector<8x128xf32>
    %cst_91 = arith.constant dense<0xFF800000> : vector<8xf32>
    %486 = vector.multi_reduction <maximumf>, %485, %cst_91 [1] : vector<8x128xf32> to vector<8xf32>
    %487 = vector.shape_cast %486 : vector<8xf32> to vector<8x1xf32>
    %488 = vector.broadcast %487 : vector<8x1xf32> to vector<8x128xf32>
    %489 = arith.subf %485, %488 : vector<8x128xf32>
    %490 = math.exp %489 : vector<8x128xf32>
    %cst_92 = arith.constant dense<0.000000e+00> : vector<8xf32>
    %491 = vector.multi_reduction <add>, %490, %cst_92 [1] : vector<8x128xf32> to vector<8xf32>
    %492 = vector.shape_cast %491 : vector<8xf32> to vector<8x1xf32>
    %493 = math.log %492 : vector<8x1xf32>
    %494 = arith.addf %487, %493 : vector<8x1xf32>
    %495 = arith.sitofp %39 : vector<8x1xi32> to vector<8x1xf32>
    %cst_93 = arith.constant 2.000000e+00 : f32
    %496 = vector.broadcast %cst_93 : f32 to vector<8x1xf32>
    %497 = arith.divf %496, %495 : vector<8x1xf32>
    %498 = arith.mulf %494, %497 : vector<8x1xf32>
    %cst_94 = arith.constant 0.000000e+00 : f32
    %499 = vector.broadcast %cst_94 : f32 to vector<8x1xf32>
    %500 = arith.subf %499, %498 : vector<8x1xf32>
    %c0_95 = arith.constant 0 : index
    %c0_96 = arith.constant 0 : index
    %501 = vector.load %arg7[%c0_95, %c0_96] : memref<8x1xf32, #tpu.memory_space<vmem>>, vector<8x1xf32>
    tpu.vector_store %arg7[%c0_95, %c0_96], %500 {strides = array<i32>} : memref<8x1xf32, #tpu.memory_space<vmem>>, vector<8x1xf32>,
    return
  }
  func.func @transform_0(%arg0: i32) -> (i32, i32) {
    %c0_i32 = arith.constant 0 : i32
    %c0_i32_0 = arith.constant 0 : i32
    return %arg0, %c0_i32 : i32, i32
  }
  func.func @transform_1(%arg0: i32) -> (i32, i32) {
    %c0_i32 = arith.constant 0 : i32
    %c0_i32_0 = arith.constant 0 : i32
    %c0_i32_1 = arith.constant 0 : i32
    return %c0_i32, %c0_i32_0 : i32, i32
  }
  func.func @transform_2(%arg0: i32) -> (i32, i32) {
    %c0_i32 = arith.constant 0 : i32
    %c0_i32_0 = arith.constant 0 : i32
    %c0_i32_1 = arith.constant 0 : i32
    return %c0_i32, %c0_i32_0 : i32, i32
  }
  func.func @transform_3(%arg0: i32) -> (i32, i32) {
    %c0_i32 = arith.constant 0 : i32
    %c0_i32_0 = arith.constant 0 : i32
    return %arg0, %c0_i32 : i32, i32
  }
  func.func @transform_4(%arg0: i32) -> (i32, i32) {
    %c0_i32 = arith.constant 0 : i32
    %c0_i32_0 = arith.constant 0 : i32
    return %arg0, %c0_i32 : i32, i32
  }
  func.func @transform_5(%arg0: i32) -> (i32, i32) {
    %c0_i32 = arith.constant 0 : i32
    %c0_i32_0 = arith.constant 0 : i32
    return %arg0, %c0_i32 : i32, i32
  }
  func.func @transform_6(%arg0: i32) -> (i32, i32) {
    %c0_i32 = arith.constant 0 : i32
    %c0_i32_0 = arith.constant 0 : i32
    return %arg0, %c0_i32 : i32, i32
  }
}

</mosaic_0001>

<llo_original>
// kernel: tpu_custom_call.1
$region0: #{tpu_custom_call.1}
  #allocation0 [shape = 'u32[]', space=smem, size = 0x4, offset = 0x4, fixed_abs, tag = 'smem constant byte address 0x4 - core index']
  #allocation1 [shape = 'u32[144,128]{1,0:T(1,128)}', space=vmem, size = 0x12000, scoped, tag = 'internal scratch']
  #allocation2 [shape = 'f32[8,16,128]{2,1,0:T(8,128)}', space=vmem, size = 0x10000, scoped, tag = 'scratch operand']
  %s0 = inlined_call_operand.hbm [shape: bf16[128,1024], index: 0, kind: input, shape index: {}]
  %s1 = inlined_call_operand.hbm [shape: bf16[1024,128], index: 1, kind: input, shape index: {}]
  %s2 = inlined_call_operand.vmem [shape: f32[1,128], index: 2, kind: input, shape index: {}]
  %s3 = inlined_call_operand.vmem [shape: s32[8,128], index: 3, kind: input, shape index: {}]
  %s4 = inlined_call_operand.vmem [shape: s32[8,1], index: 4, kind: input, shape index: {}]
  %s5 = inlined_call_operand.vmem [shape: s32[8,1], index: 5, kind: input, shape index: {}]
  %s6 = inlined_call_operand.vmem [shape: f32[8,1], index: 6, kind: output, shape index: {}]
  %s7 = sld [smem:[#allocation0]]
  $region42: #{tpu_custom_call.1} parent=0
    _
  %s9 = ssub.s32 1, %s7
  %s10 = scalar_select 0, %s9, %s7
  $region1: #{tpu_custom_call.1} parent=0
    #allocation3 [shape = 'u8[262144]{0}', space=vmem, size = 0x40000, scoped, tag = 'input window, operand 0, single buffered']
    #allocation4 [shape = 's32[1]{0}', space=sflag, size = 0x4, scoped, tag = 'scoped memory for tpu_custom_call.1']
    #allocation5 [shape = 'u8[262144]{0}', space=vmem, size = 0x40000, scoped, tag = 'input window, operand 1, single buffered']
    #allocation6 [shape = 's32[1]{0}', space=sflag, size = 0x4, scoped, tag = 'scoped memory for tpu_custom_call.1']
    %11 = vsyncpa [#allocation4], 0
    %12 = vsyncpa [#allocation6], 0
    // Predicated region
    $region2: #{tpu_custom_call.1} parent=1 // pred_check
      _
    $region3: #{tpu_custom_call.1} parent=1 // pred_check_branch
      %14 = sbr.rel (0) target = $region5
    $region4: #{tpu_custom_call.1} parent=1 // pred_region
      %s16 = ssub.s32 8192, 8192
      %17 = vsyncadd [#allocation4], %s16
      %s18 = sshll.u32 [#allocation3], 4
      %s19 = int_to_ptr.vmem [resolvable:$true] %s18
      %24 = dma.hbm_to_vmem [thread:$0]  %s0, 8192, %s19, [#allocation4], 512, 512, 32
    $region5: #{tpu_custom_call.1} parent=1 // pred_fallthru
      _
    // Predicated region
    $region6: #{tpu_custom_call.1} parent=1 // pred_check
      _
    $region7: #{tpu_custom_call.1} parent=1 // pred_check_branch
      %26 = sbr.rel (0) target = $region9
    $region8: #{tpu_custom_call.1} parent=1 // pred_region
      %s28 = ssub.s32 8192, 8192
      %29 = vsyncadd [#allocation6], %s28
      %s30 = sshll.u32 [#allocation5], 4
      %s31 = int_to_ptr.vmem [resolvable:$true] %s30
      %36 = dma.hbm_to_vmem [thread:$0]  %s1, 8192, %s31, [#allocation6], 64, 64, 4
    $region9: #{tpu_custom_call.1} parent=1 // pred_fallthru
      _
    // Predicated region
    $region10: #{tpu_custom_call.1} parent=1 // pred_check
      _
    $region11: #{tpu_custom_call.1} parent=1 // pred_check_branch
      %38 = sbr.rel (0) target = $region13
    $region12: #{tpu_custom_call.1} parent=1 // pred_region
      _
    $region13: #{tpu_custom_call.1} parent=1 // pred_fallthru
      _
    // Predicated region
    $region14: #{tpu_custom_call.1} parent=1 // pred_check
      _
    $region15: #{tpu_custom_call.1} parent=1 // pred_check_branch
      %40 = sbr.rel (0) target = $region17
    $region16: #{tpu_custom_call.1} parent=1 // pred_region
      _
    $region17: #{tpu_custom_call.1} parent=1 // pred_fallthru
      _
    // Predicated region
    $region18: #{tpu_custom_call.1} parent=1 // pred_check
      _
    $region19: #{tpu_custom_call.1} parent=1 // pred_check_branch
      %42 = sbr.rel (0) target = $region21
    $region20: #{tpu_custom_call.1} parent=1 // pred_region
      _
    $region21: #{tpu_custom_call.1} parent=1 // pred_fallthru
      _
    // Predicated region
    $region22: #{tpu_custom_call.1} parent=1 // pred_check
      _
    $region23: #{tpu_custom_call.1} parent=1 // pred_check_branch
      %44 = sbr.rel (0) target = $region25
    $region24: #{tpu_custom_call.1} parent=1 // pred_region
      _
    $region25: #{tpu_custom_call.1} parent=1 // pred_fallthru
      _
    // Predicated region
    $region26: #{tpu_custom_call.1} parent=1 // pred_check
      _
    $region27: #{tpu_custom_call.1} parent=1 // pred_check_branch
      %46 = sbr.rel (0) target = $region29
    $region28: #{tpu_custom_call.1} parent=1 // pred_region
      %47 = dma.done [#allocation4], 8192
    $region29: #{tpu_custom_call.1} parent=1 // pred_fallthru
      _
    // Predicated region
    $region30: #{tpu_custom_call.1} parent=1 // pred_check
      _
    $region31: #{tpu_custom_call.1} parent=1 // pred_check_branch
      %49 = sbr.rel (0) target = $region33
    $region32: #{tpu_custom_call.1} parent=1 // pred_region
      %50 = dma.done [#allocation6], 8192
    $region33: #{tpu_custom_call.1} parent=1 // pred_fallthru
      _
    %v52 = vld [vmem:[#allocation3] sm:$0xff]
    %v53 = vld [vmem:[#allocation3 + $0x8] sm:$0xff]
    %v54 = vld [vmem:[#allocation3 + $0x10] sm:$0xff]
    %v55 = vld [vmem:[#allocation3 + $0x18] sm:$0xff]
    %v56 = vld [vmem:[#allocation3 + $0x20] sm:$0xff]
    %v57 = vld [vmem:[#allocation3 + $0x28] sm:$0xff]
    %v58 = vld [vmem:[#allocation3 + $0x30] sm:$0xff]
    %v59 = vld [vmem:[#allocation3 + $0x38] sm:$0xff]
    %v60 = vld [vmem:[#allocation3 + $0x40] sm:$0xff]
    %v61 = vld [vmem:[#allocation3 + $0x48] sm:$0xff]
    %v62 = vld [vmem:[#allocation3 + $0x50] sm:$0xff]
    %v63 = vld [vmem:[#allocation3 + $0x58] sm:$0xff]
    %v64 = vld [vmem:[#allocation3 + $0x60] sm:$0xff]
    %v65 = vld [vmem:[#allocation3 + $0x68] sm:$0xff]
    %v66 = vld [vmem:[#allocation3 + $0x70] sm:$0xff]
    %v67 = vld [vmem:[#allocation3 + $0x78] sm:$0xff]
    %v68 = vld [vmem:[#allocation3 + $0x80] sm:$0xff]
    %v69 = vld [vmem:[#allocation3 + $0x88] sm:$0xff]
    %v70 = vld [vmem:[#allocation3 + $0x90] sm:$0xff]
    %v71 = vld [vmem:[#allocation3 + $0x98] sm:$0xff]
    %v72 = vld [vmem:[#allocation3 + $0xa0] sm:$0xff]
    %v73 = vld [vmem:[#allocation3 + $0xa8] sm:$0xff]
    %v74 = vld [vmem:[#allocation3 + $0xb0] sm:$0xff]
    %v75 = vld [vmem:[#allocation3 + $0xb8] sm:$0xff]
    %v76 = vld [vmem:[#allocation3 + $0xc0] sm:$0xff]
    %v77 = vld [vmem:[#allocation3 + $0xc8] sm:$0xff]
    %v78 = vld [vmem:[#allocation3 + $0xd0] sm:$0xff]
    %v79 = vld [vmem:[#allocation3 + $0xd8] sm:$0xff]
    %v80 = vld [vmem:[#allocation3 + $0xe0] sm:$0xff]
    %v81 = vld [vmem:[#allocation3 + $0xe8] sm:$0xff]
    %v82 = vld [vmem:[#allocation3 + $0xf0] sm:$0xff]
    %v83 = vld [vmem:[#allocation3 + $0xf8] sm:$0xff]
    %v84 = vld [vmem:[#allocation3 + $0x100] sm:$0xff]
    %v85 = vld [vmem:[#allocation3 + $0x108] sm:$0xff]
    %v86 = vld [vmem:[#allocation3 + $0x110] sm:$0xff]
    %v87 = vld [vmem:[#allocation3 + $0x118] sm:$0xff]
    %v88 = vld [vmem:[#allocation3 + $0x120] sm:$0xff]
    %v89 = vld [vmem:[#allocation3 + $0x128] sm:$0xff]
    %v90 = vld [vmem:[#allocation3 + $0x130] sm:$0xff]
    %v91 = vld [vmem:[#allocation3 + $0x138] sm:$0xff]
    %v92 = vld [vmem:[#allocation3 + $0x140] sm:$0xff]
    %v93 = vld [vmem:[#allocation3 + $0x148] sm:$0xff]
    %v94 = vld [vmem:[#allocation3 + $0x150] sm:$0xff]
    %v95 = vld [vmem:[#allocation3 + $0x158] sm:$0xff]
    %v96 = vld [vmem:[#allocation3 + $0x160] sm:$0xff]
    %v97 = vld [vmem:[#allocation3 + $0x168] sm:$0xff]
    %v98 = vld [vmem:[#allocation3 + $0x170] sm:$0xff]
    %v99 = vld [vmem:[#allocation3 + $0x178] sm:$0xff]
    %v100 = vld [vmem:[#allocation3 + $0x180] sm:$0xff]
    %v101 = vld [vmem:[#allocation3 + $0x188] sm:$0xff]
    %v102 = vld [vmem:[#allocation3 + $0x190] sm:$0xff]
    %v103 = vld [vmem:[#allocation3 + $0x198] sm:$0xff]
    %v104 = vld [vmem:[#allocation3 + $0x1a0] sm:$0xff]
    %v105 = vld [vmem:[#allocation3 + $0x1a8] sm:$0xff]
    %v106 = vld [vmem:[#allocation3 + $0x1b0] sm:$0xff]
    %v107 = vld [vmem:[#allocation3 + $0x1b8] sm:$0xff]
    %v108 = vld [vmem:[#allocation3 + $0x1c0] sm:$0xff]
    %v109 = vld [vmem:[#allocation3 + $0x1c8] sm:$0xff]
    %v110 = vld [vmem:[#allocation3 + $0x1d0] sm:$0xff]
    %v111 = vld [vmem:[#allocation3 + $0x1d8] sm:$0xff]
    %v112 = vld [vmem:[#allocation3 + $0x1e0] sm:$0xff]
    %v113 = vld [vmem:[#allocation3 + $0x1e8] sm:$0xff]
    %v114 = vld [vmem:[#allocation3 + $0x1f0] sm:$0xff]
    %v115 = vld [vmem:[#allocation3 + $0x1f8] sm:$0xff]
    %v116 = vld [vmem:[#allocation5] sm:$0xf]
    %v117 = vld [vmem:[#allocation5 + $0x4] sm:$0xf]
    %v118 = vld [vmem:[#allocation5 + $0x8] sm:$0xf]
    %v119 = vld [vmem:[#allocation5 + $0xc] sm:$0xf]
    %v120 = vld [vmem:[#allocation5 + $0x10] sm:$0xf]
    %v121 = vld [vmem:[#allocation5 + $0x14] sm:$0xf]
    %v122 = vld [vmem:[#allocation5 + $0x18] sm:$0xf]
    %v123 = vld [vmem:[#allocation5 + $0x1c] sm:$0xf]
    %v124 = vld [vmem:[#allocation5 + $0x20] sm:$0xf]
    %v125 = vld [vmem:[#allocation5 + $0x24] sm:$0xf]
    %v126 = vld [vmem:[#allocation5 + $0x28] sm:$0xf]
    %v127 = vld [vmem:[#allocation5 + $0x2c] sm:$0xf]
    %v128 = vld [vmem:[#allocation5 + $0x30] sm:$0xf]
    %v129 = vld [vmem:[#allocation5 + $0x34] sm:$0xf]
    %v130 = vld [vmem:[#allocation5 + $0x38] sm:$0xf]
    %v131 = vld [vmem:[#allocation5 + $0x3c] sm:$0xf]
    %v132 = vld [vmem:[#allocation5 + $0x40] sm:$0xf]
    %v133 = vld [vmem:[#allocation5 + $0x44] sm:$0xf]
    %v134 = vld [vmem:[#allocation5 + $0x48] sm:$0xf]
    %v135 = vld [vmem:[#allocation5 + $0x4c] sm:$0xf]
    %v136 = vld [vmem:[#allocation5 + $0x50] sm:$0xf]
    %v137 = vld [vmem:[#allocation5 + $0x54] sm:$0xf]
    %v138 = vld [vmem:[#allocation5 + $0x58] sm:$0xf]
    %v139 = vld [vmem:[#allocation5 + $0x5c] sm:$0xf]
    %v140 = vld [vmem:[#allocation5 + $0x60] sm:$0xf]
    %v141 = vld [vmem:[#allocation5 + $0x64] sm:$0xf]
    %v142 = vld [vmem:[#allocation5 + $0x68] sm:$0xf]
    %v143 = vld [vmem:[#allocation5 + $0x6c] sm:$0xf]
    %v144 = vld [vmem:[#allocation5 + $0x70] sm:$0xf]
    %v145 = vld [vmem:[#allocation5 + $0x74] sm:$0xf]
    %v146 = vld [vmem:[#allocation5 + $0x78] sm:$0xf]
    %v147 = vld [vmem:[#allocation5 + $0x7c] sm:$0xf]
    %v148 = vld [vmem:[#allocation5 + $0x80] sm:$0xf]
    %v149 = vld [vmem:[#allocation5 + $0x84] sm:$0xf]
    %v150 = vld [vmem:[#allocation5 + $0x88] sm:$0xf]
    %v151 = vld [vmem:[#allocation5 + $0x8c] sm:$0xf]
    %v152 = vld [vmem:[#allocation5 + $0x90] sm:$0xf]
    %v153 = vld [vmem:[#allocation5 + $0x94] sm:$0xf]
    %v154 = vld [vmem:[#allocation5 + $0x98] sm:$0xf]
    %v155 = vld [vmem:[#allocation5 + $0x9c] sm:$0xf]
    %v156 = vld [vmem:[#allocation5 + $0xa0] sm:$0xf]
    %v157 = vld [vmem:[#allocation5 + $0xa4] sm:$0xf]
    %v158 = vld [vmem:[#allocation5 + $0xa8] sm:$0xf]
    %v159 = vld [vmem:[#allocation5 + $0xac] sm:$0xf]
    %v160 = vld [vmem:[#allocation5 + $0xb0] sm:$0xf]
    %v161 = vld [vmem:[#allocation5 + $0xb4] sm:$0xf]
    %v162 = vld [vmem:[#allocation5 + $0xb8] sm:$0xf]
    %v163 = vld [vmem:[#allocation5 + $0xbc] sm:$0xf]
    %v164 = vld [vmem:[#allocation5 + $0xc0] sm:$0xf]
    %v165 = vld [vmem:[#allocation5 + $0xc4] sm:$0xf]
    %v166 = vld [vmem:[#allocation5 + $0xc8] sm:$0xf]
    %v167 = vld [vmem:[#allocation5 + $0xcc] sm:$0xf]
    %v168 = vld [vmem:[#allocation5 + $0xd0] sm:$0xf]
    %v169 = vld [vmem:[#allocation5 + $0xd4] sm:$0xf]
    %v170 = vld [vmem:[#allocation5 + $0xd8] sm:$0xf]
    %v171 = vld [vmem:[#allocation5 + $0xdc] sm:$0xf]
    %v172 = vld [vmem:[#allocation5 + $0xe0] sm:$0xf]
    %v173 = vld [vmem:[#allocation5 + $0xe4] sm:$0xf]
    %v174 = vld [vmem:[#allocation5 + $0xe8] sm:$0xf]
    %v175 = vld [vmem:[#allocation5 + $0xec] sm:$0xf]
    %v176 = vld [vmem:[#allocation5 + $0xf0] sm:$0xf]
    %v177 = vld [vmem:[#allocation5 + $0xf4] sm:$0xf]
    %v178 = vld [vmem:[#allocation5 + $0xf8] sm:$0xf]
    %v179 = vld [vmem:[#allocation5 + $0xfc] sm:$0xf]
    %v180 = vld [vmem:[#allocation5 + $0x100] sm:$0xf]
    %v181 = vld [vmem:[#allocation5 + $0x104] sm:$0xf]
    %v182 = vld [vmem:[#allocation5 + $0x108] sm:$0xf]
    %v183 = vld [vmem:[#allocation5 + $0x10c] sm:$0xf]
    %v184 = vld [vmem:[#allocation5 + $0x110] sm:$0xf]
    %v185 = vld [vmem:[#allocation5 + $0x114] sm:$0xf]
    %v186 = vld [vmem:[#allocation5 + $0x118] sm:$0xf]
    %v187 = vld [vmem:[#allocation5 + $0x11c] sm:$0xf]
    %v188 = vld [vmem:[#allocation5 + $0x120] sm:$0xf]
    %v189 = vld [vmem:[#allocation5 + $0x124] sm:$0xf]
    %v190 = vld [vmem:[#allocation5 + $0x128] sm:$0xf]
    %v191 = vld [vmem:[#allocation5 + $0x12c] sm:$0xf]
    %v192 = vld [vmem:[#allocation5 + $0x130] sm:$0xf]
    %v193 = vld [vmem:[#allocation5 + $0x134] sm:$0xf]
    %v194 = vld [vmem:[#allocation5 + $0x138] sm:$0xf]
    %v195 = vld [vmem:[#allocation5 + $0x13c] sm:$0xf]
    %v196 = vld [vmem:[#allocation5 + $0x140] sm:$0xf]
    %v197 = vld [vmem:[#allocation5 + $0x144] sm:$0xf]
    %v198 = vld [vmem:[#allocation5 + $0x148] sm:$0xf]
    %v199 = vld [vmem:[#allocation5 + $0x14c] sm:$0xf]
    %v200 = vld [vmem:[#allocation5 + $0x150] sm:$0xf]
    %v201 = vld [vmem:[#allocation5 + $0x154] sm:$0xf]
    %v202 = vld [vmem:[#allocation5 + $0x158] sm:$0xf]
    %v203 = vld [vmem:[#allocation5 + $0x15c] sm:$0xf]
    %v204 = vld [vmem:[#allocation5 + $0x160] sm:$0xf]
    %v205 = vld [vmem:[#allocation5 + $0x164] sm:$0xf]
    %v206 = vld [vmem:[#allocation5 + $0x168] sm:$0xf]
    %v207 = vld [vmem:[#allocation5 + $0x16c] sm:$0xf]
    %v208 = vld [vmem:[#allocation5 + $0x170] sm:$0xf]
    %v209 = vld [vmem:[#allocation5 + $0x174] sm:$0xf]
    %v210 = vld [vmem:[#allocation5 + $0x178] sm:$0xf]
    %v211 = vld [vmem:[#allocation5 + $0x17c] sm:$0xf]
    %v212 = vld [vmem:[#allocation5 + $0x180] sm:$0xf]
    %v213 = vld [vmem:[#allocation5 + $0x184] sm:$0xf]
    %v214 = vld [vmem:[#allocation5 + $0x188] sm:$0xf]
    %v215 = vld [vmem:[#allocation5 + $0x18c] sm:$0xf]
    %v216 = vld [vmem:[#allocation5 + $0x190] sm:$0xf]
    %v217 = vld [vmem:[#allocation5 + $0x194] sm:$0xf]
    %v218 = vld [vmem:[#allocation5 + $0x198] sm:$0xf]
    %v219 = vld [vmem:[#allocation5 + $0x19c] sm:$0xf]
    %v220 = vld [vmem:[#allocation5 + $0x1a0] sm:$0xf]
    %v221 = vld [vmem:[#allocation5 + $0x1a4] sm:$0xf]
    %v222 = vld [vmem:[#allocation5 + $0x1a8] sm:$0xf]
    %v223 = vld [vmem:[#allocation5 + $0x1ac] sm:$0xf]
    %v224 = vld [vmem:[#allocation5 + $0x1b0] sm:$0xf]
    %v225 = vld [vmem:[#allocation5 + $0x1b4] sm:$0xf]
    %v226 = vld [vmem:[#allocation5 + $0x1b8] sm:$0xf]
    %v227 = vld [vmem:[#allocation5 + $0x1bc] sm:$0xf]
    %v228 = vld [vmem:[#allocation5 + $0x1c0] sm:$0xf]
    %v229 = vld [vmem:[#allocation5 + $0x1c4] sm:$0xf]
    %v230 = vld [vmem:[#allocation5 + $0x1c8] sm:$0xf]
    %v231 = vld [vmem:[#allocation5 + $0x1cc] sm:$0xf]
    %v232 = vld [vmem:[#allocation5 + $0x1d0] sm:$0xf]
    %v233 = vld [vmem:[#allocation5 + $0x1d4] sm:$0xf]
    %v234 = vld [vmem:[#allocation5 + $0x1d8] sm:$0xf]
    %v235 = vld [vmem:[#allocation5 + $0x1dc] sm:$0xf]
    %v236 = vld [vmem:[#allocation5 + $0x1e0] sm:$0xf]
    %v237 = vld [vmem:[#allocation5 + $0x1e4] sm:$0xf]
    %v238 = vld [vmem:[#allocation5 + $0x1e8] sm:$0xf]
    %v239 = vld [vmem:[#allocation5 + $0x1ec] sm:$0xf]
    %v240 = vld [vmem:[#allocation5 + $0x1f0] sm:$0xf]
    %v241 = vld [vmem:[#allocation5 + $0x1f4] sm:$0xf]
    %v242 = vld [vmem:[#allocation5 + $0x1f8] sm:$0xf]
    %v243 = vld [vmem:[#allocation5 + $0x1fc] sm:$0xf]
    %v244 = vld [vmem:[%s2] sm:$0x1]
    %v246 = vlaneseq
    %v247 = vshrl.u32 %v246, 7
    %v248 = vsub.s32 0, %v247
    %v249 = vrot.slane %v244, %v248
    %v315 = vunpack.c.l.b16 %v52
    %v316 = vunpack.c.h.b16 %v52
    %v317 = vunpack.c.l.b16 %v53
    %v318 = vunpack.c.h.b16 %v53
    %v319 = vunpack.c.l.b16 %v54
    %v320 = vunpack.c.h.b16 %v54
    %v321 = vunpack.c.l.b16 %v55
    %v322 = vunpack.c.h.b16 %v55
    %v323 = vunpack.c.l.b16 %v56
    %v324 = vunpack.c.h.b16 %v56
    %v325 = vunpack.c.l.b16 %v57
    %v326 = vunpack.c.h.b16 %v57
    %v327 = vunpack.c.l.b16 %v58
    %v328 = vunpack.c.h.b16 %v58
    %v329 = vunpack.c.l.b16 %v59
    %v330 = vunpack.c.h.b16 %v59
    %v331 = vunpack.c.l.b16 %v60
    %v332 = vunpack.c.h.b16 %v60
    %v333 = vunpack.c.l.b16 %v61
    %v334 = vunpack.c.h.b16 %v61
    %v335 = vunpack.c.l.b16 %v62
    %v336 = vunpack.c.h.b16 %v62
    %v337 = vunpack.c.l.b16 %v63
    %v338 = vunpack.c.h.b16 %v63
    %v339 = vunpack.c.l.b16 %v64
    %v340 = vunpack.c.h.b16 %v64
    %v341 = vunpack.c.l.b16 %v65
    %v342 = vunpack.c.h.b16 %v65
    %v343 = vunpack.c.l.b16 %v66
    %v344 = vunpack.c.h.b16 %v66
    %v345 = vunpack.c.l.b16 %v67
    %v346 = vunpack.c.h.b16 %v67
    %v347 = vunpack.c.l.b16 %v68
    %v348 = vunpack.c.h.b16 %v68
    %v349 = vunpack.c.l.b16 %v69
    %v350 = vunpack.c.h.b16 %v69
    %v351 = vunpack.c.l.b16 %v70
    %v352 = vunpack.c.h.b16 %v70
    %v353 = vunpack.c.l.b16 %v71
    %v354 = vunpack.c.h.b16 %v71
    %v355 = vunpack.c.l.b16 %v72
    %v356 = vunpack.c.h.b16 %v72
    %v357 = vunpack.c.l.b16 %v73
    %v358 = vunpack.c.h.b16 %v73
    %v359 = vunpack.c.l.b16 %v74
    %v360 = vunpack.c.h.b16 %v74
    %v361 = vunpack.c.l.b16 %v75
    %v362 = vunpack.c.h.b16 %v75
    %v363 = vunpack.c.l.b16 %v76
    %v364 = vunpack.c.h.b16 %v76
    %v365 = vunpack.c.l.b16 %v77
    %v366 = vunpack.c.h.b16 %v77
    %v367 = vunpack.c.l.b16 %v78
    %v368 = vunpack.c.h.b16 %v78
    %v369 = vunpack.c.l.b16 %v79
    %v370 = vunpack.c.h.b16 %v79
    %v371 = vunpack.c.l.b16 %v80
    %v372 = vunpack.c.h.b16 %v80
    %v373 = vunpack.c.l.b16 %v81
    %v374 = vunpack.c.h.b16 %v81
    %v375 = vunpack.c.l.b16 %v82
    %v376 = vunpack.c.h.b16 %v82
    %v377 = vunpack.c.l.b16 %v83
    %v378 = vunpack.c.h.b16 %v83
    %v379 = vunpack.c.l.b16 %v84
    %v380 = vunpack.c.h.b16 %v84
    %v381 = vunpack.c.l.b16 %v85
    %v382 = vunpack.c.h.b16 %v85
    %v383 = vunpack.c.l.b16 %v86
    %v384 = vunpack.c.h.b16 %v86
    %v385 = vunpack.c.l.b16 %v87
    %v386 = vunpack.c.h.b16 %v87
    %v387 = vunpack.c.l.b16 %v88
    %v388 = vunpack.c.h.b16 %v88
    %v389 = vunpack.c.l.b16 %v89
    %v390 = vunpack.c.h.b16 %v89
    %v391 = vunpack.c.l.b16 %v90
    %v392 = vunpack.c.h.b16 %v90
    %v393 = vunpack.c.l.b16 %v91
    %v394 = vunpack.c.h.b16 %v91
    %v395 = vunpack.c.l.b16 %v92
    %v396 = vunpack.c.h.b16 %v92
    %v397 = vunpack.c.l.b16 %v93
    %v398 = vunpack.c.h.b16 %v93
    %v399 = vunpack.c.l.b16 %v94
    %v400 = vunpack.c.h.b16 %v94
    %v401 = vunpack.c.l.b16 %v95
    %v402 = vunpack.c.h.b16 %v95
    %v403 = vunpack.c.l.b16 %v96
    %v404 = vunpack.c.h.b16 %v96
    %v405 = vunpack.c.l.b16 %v97
    %v406 = vunpack.c.h.b16 %v97
    %v407 = vunpack.c.l.b16 %v98
    %v408 = vunpack.c.h.b16 %v98
    %v409 = vunpack.c.l.b16 %v99
    %v410 = vunpack.c.h.b16 %v99
    %v411 = vunpack.c.l.b16 %v100
    %v412 = vunpack.c.h.b16 %v100
    %v413 = vunpack.c.l.b16 %v101
    %v414 = vunpack.c.h.b16 %v101
    %v415 = vunpack.c.l.b16 %v102
    %v416 = vunpack.c.h.b16 %v102
    %v417 = vunpack.c.l.b16 %v103
    %v418 = vunpack.c.h.b16 %v103
    %v419 = vunpack.c.l.b16 %v104
    %v420 = vunpack.c.h.b16 %v104
    %v421 = vunpack.c.l.b16 %v105
    %v422 = vunpack.c.h.b16 %v105
    %v423 = vunpack.c.l.b16 %v106
    %v424 = vunpack.c.h.b16 %v106
    %v425 = vunpack.c.l.b16 %v107
    %v426 = vunpack.c.h.b16 %v107
    %v427 = vunpack.c.l.b16 %v108
    %v428 = vunpack.c.h.b16 %v108
    %v429 = vunpack.c.l.b16 %v109
    %v430 = vunpack.c.h.b16 %v109
    %v431 = vunpack.c.l.b16 %v110
    %v432 = vunpack.c.h.b16 %v110
    %v433 = vunpack.c.l.b16 %v111
    %v434 = vunpack.c.h.b16 %v111
    %v435 = vunpack.c.l.b16 %v112
    %v436 = vunpack.c.h.b16 %v112
    %v437 = vunpack.c.l.b16 %v113
    %v438 = vunpack.c.h.b16 %v113
    %v439 = vunpack.c.l.b16 %v114
    %v440 = vunpack.c.h.b16 %v114
    %v441 = vunpack.c.l.b16 %v115
    %v442 = vunpack.c.h.b16 %v115
    %v443 = vpack.c.b16 %v323, %v315
    %v444 = vpack.c.b16 %v324, %v316
    %v445 = vpack.c.b16 %v325, %v317
    %v446 = vpack.c.b16 %v326, %v318
    %v447 = vpack.c.b16 %v327, %v319
    %v448 = vpack.c.b16 %v328, %v320
    %v449 = vpack.c.b16 %v329, %v321
    %v450 = vpack.c.b16 %v330, %v322
    %v451 = vpack.c.b16 %v339, %v331
    %v452 = vpack.c.b16 %v340, %v332
    %v453 = vpack.c.b16 %v341, %v333
    %v454 = vpack.c.b16 %v342, %v334
    %v455 = vpack.c.b16 %v343, %v335
    %v456 = vpack.c.b16 %v344, %v336
    %v457 = vpack.c.b16 %v345, %v337
    %v458 = vpack.c.b16 %v346, %v338
    %v459 = vpack.c.b16 %v355, %v347
    %v460 = vpack.c.b16 %v356, %v348
    %v461 = vpack.c.b16 %v357, %v349
    %v462 = vpack.c.b16 %v358, %v350
    %v463 = vpack.c.b16 %v359, %v351
    %v464 = vpack.c.b16 %v360, %v352
    %v465 = vpack.c.b16 %v361, %v353
    %v466 = vpack.c.b16 %v362, %v354
    %v467 = vpack.c.b16 %v371, %v363
    %v468 = vpack.c.b16 %v372, %v364
    %v469 = vpack.c.b16 %v373, %v365
    %v470 = vpack.c.b16 %v374, %v366
    %v471 = vpack.c.b16 %v375, %v367
    %v472 = vpack.c.b16 %v376, %v368
    %v473 = vpack.c.b16 %v377, %v369
    %v474 = vpack.c.b16 %v378, %v370
    %v475 = vpack.c.b16 %v387, %v379
    %v476 = vpack.c.b16 %v388, %v380
    %v477 = vpack.c.b16 %v389, %v381
    %v478 = vpack.c.b16 %v390, %v382
    %v479 = vpack.c.b16 %v391, %v383
    %v480 = vpack.c.b16 %v392, %v384
    %v481 = vpack.c.b16 %v393, %v385
    %v482 = vpack.c.b16 %v394, %v386
    %v483 = vpack.c.b16 %v403, %v395
    %v484 = vpack.c.b16 %v404, %v396
    %v485 = vpack.c.b16 %v405, %v397
    %v486 = vpack.c.b16 %v406, %v398
    %v487 = vpack.c.b16 %v407, %v399
    %v488 = vpack.c.b16 %v408, %v400
    %v489 = vpack.c.b16 %v409, %v401
    %v490 = vpack.c.b16 %v410, %v402
    %v491 = vpack.c.b16 %v419, %v411
    %v492 = vpack.c.b16 %v420, %v412
    %v493 = vpack.c.b16 %v421, %v413
    %v494 = vpack.c.b16 %v422, %v414
    %v495 = vpack.c.b16 %v423, %v415
    %v496 = vpack.c.b16 %v424, %v416
    %v497 = vpack.c.b16 %v425, %v417
    %v498 = vpack.c.b16 %v426, %v418
    %v499 = vpack.c.b16 %v435, %v427
    %v500 = vpack.c.b16 %v436, %v428
    %v501 = vpack.c.b16 %v437, %v429
    %v502 = vpack.c.b16 %v438, %v430
    %v503 = vpack.c.b16 %v439, %v431
    %v504 = vpack.c.b16 %v440, %v432
    %v505 = vpack.c.b16 %v441, %v433
    %v506 = vpack.c.b16 %v442, %v434
    %v699 = vunpack.c.l.b16 %v116
    %v700 = vunpack.c.l.b16 %v117
    %v701 = vunpack.c.l.b16 %v118
    %v702 = vunpack.c.l.b16 %v119
    %v703 = vunpack.c.l.b16 %v120
    %v704 = vunpack.c.l.b16 %v121
    %v705 = vunpack.c.l.b16 %v122
    %v706 = vunpack.c.l.b16 %v123
    %v707 = vunpack.c.l.b16 %v124
    %v708 = vunpack.c.l.b16 %v125
    %v709 = vunpack.c.l.b16 %v126
    %v710 = vunpack.c.l.b16 %v127
    %v711 = vunpack.c.l.b16 %v128
    %v712 = vunpack.c.l.b16 %v129
    %v713 = vunpack.c.l.b16 %v130
    %v714 = vunpack.c.l.b16 %v131
    %v715 = vunpack.c.l.b16 %v132
    %v716 = vunpack.c.l.b16 %v133
    %v717 = vunpack.c.l.b16 %v134
    %v718 = vunpack.c.l.b16 %v135
    %v719 = vunpack.c.l.b16 %v136
    %v720 = vunpack.c.l.b16 %v137
    %v721 = vunpack.c.l.b16 %v138
    %v722 = vunpack.c.l.b16 %v139
    %v723 = vunpack.c.l.b16 %v140
    %v724 = vunpack.c.l.b16 %v141
    %v725 = vunpack.c.l.b16 %v142
    %v726 = vunpack.c.l.b16 %v143
    %v727 = vunpack.c.l.b16 %v144
    %v728 = vunpack.c.l.b16 %v145
    %v729 = vunpack.c.l.b16 %v146
    %v730 = vunpack.c.l.b16 %v147
    %v731 = vunpack.c.l.b16 %v148
    %v732 = vunpack.c.l.b16 %v149
    %v733 = vunpack.c.l.b16 %v150
    %v734 = vunpack.c.l.b16 %v151
    %v735 = vunpack.c.l.b16 %v152
    %v736 = vunpack.c.l.b16 %v153
    %v737 = vunpack.c.l.b16 %v154
    %v738 = vunpack.c.l.b16 %v155
    %v739 = vunpack.c.l.b16 %v156
    %v740 = vunpack.c.l.b16 %v157
    %v741 = vunpack.c.l.b16 %v158
    %v742 = vunpack.c.l.b16 %v159
    %v743 = vunpack.c.l.b16 %v160
    %v744 = vunpack.c.l.b16 %v161
    %v745 = vunpack.c.l.b16 %v162
    %v746 = vunpack.c.l.b16 %v163
    %v747 = vunpack.c.l.b16 %v164
    %v748 = vunpack.c.l.b16 %v165
    %v749 = vunpack.c.l.b16 %v166
    %v750 = vunpack.c.l.b16 %v167
    %v751 = vunpack.c.l.b16 %v168
    %v752 = vunpack.c.l.b16 %v169
    %v753 = vunpack.c.l.b16 %v170
    %v754 = vunpack.c.l.b16 %v171
    %v755 = vunpack.c.l.b16 %v172
    %v756 = vunpack.c.l.b16 %v173
    %v757 = vunpack.c.l.b16 %v174
    %v758 = vunpack.c.l.b16 %v175
    %v759 = vunpack.c.l.b16 %v176
    %v760 = vunpack.c.l.b16 %v177
    %v761 = vunpack.c.l.b16 %v178
    %v762 = vunpack.c.l.b16 %v179
    %v763 = vunpack.c.l.b16 %v180
    %v764 = vunpack.c.l.b16 %v181
    %v765 = vunpack.c.l.b16 %v182
    %v766 = vunpack.c.l.b16 %v183
    %v767 = vunpack.c.l.b16 %v184
    %v768 = vunpack.c.l.b16 %v185
    %v769 = vunpack.c.l.b16 %v186
    %v770 = vunpack.c.l.b16 %v187
    %v771 = vunpack.c.l.b16 %v188
    %v772 = vunpack.c.l.b16 %v189
    %v773 = vunpack.c.l.b16 %v190
    %v774 = vunpack.c.l.b16 %v191
    %v775 = vunpack.c.l.b16 %v192
    %v776 = vunpack.c.l.b16 %v193
    %v777 = vunpack.c.l.b16 %v194
    %v778 = vunpack.c.l.b16 %v195
    %v779 = vunpack.c.l.b16 %v196
    %v780 = vunpack.c.l.b16 %v197
    %v781 = vunpack.c.l.b16 %v198
    %v782 = vunpack.c.l.b16 %v199
    %v783 = vunpack.c.l.b16 %v200
    %v784 = vunpack.c.l.b16 %v201
    %v785 = vunpack.c.l.b16 %v202
    %v786 = vunpack.c.l.b16 %v203
    %v787 = vunpack.c.l.b16 %v204
    %v788 = vunpack.c.l.b16 %v205
    %v789 = vunpack.c.l.b16 %v206
    %v790 = vunpack.c.l.b16 %v207
    %v791 = vunpack.c.l.b16 %v208
    %v792 = vunpack.c.l.b16 %v209
    %v793 = vunpack.c.l.b16 %v210
    %v794 = vunpack.c.l.b16 %v211
    %v795 = vunpack.c.l.b16 %v212
    %v796 = vunpack.c.l.b16 %v213
    %v797 = vunpack.c.l.b16 %v214
    %v798 = vunpack.c.l.b16 %v215
    %v799 = vunpack.c.l.b16 %v216
    %v800 = vunpack.c.l.b16 %v217
    %v801 = vunpack.c.l.b16 %v218
    %v802 = vunpack.c.l.b16 %v219
    %v803 = vunpack.c.l.b16 %v220
    %v804 = vunpack.c.l.b16 %v221
    %v805 = vunpack.c.l.b16 %v222
    %v806 = vunpack.c.l.b16 %v223
    %v807 = vunpack.c.l.b16 %v224
    %v808 = vunpack.c.l.b16 %v225
    %v809 = vunpack.c.l.b16 %v226
    %v810 = vunpack.c.l.b16 %v227
    %v811 = vunpack.c.l.b16 %v228
    %v812 = vunpack.c.l.b16 %v229
    %v813 = vunpack.c.l.b16 %v230
    %v814 = vunpack.c.l.b16 %v231
    %v815 = vunpack.c.l.b16 %v232
    %v816 = vunpack.c.l.b16 %v233
    %v817 = vunpack.c.l.b16 %v234
    %v818 = vunpack.c.l.b16 %v235
    %v819 = vunpack.c.l.b16 %v236
    %v820 = vunpack.c.l.b16 %v237
    %v821 = vunpack.c.l.b16 %v238
    %v822 = vunpack.c.l.b16 %v239
    %v823 = vunpack.c.l.b16 %v240
    %v824 = vunpack.c.l.b16 %v241
    %v825 = vunpack.c.l.b16 %v242
    %v826 = vunpack.c.l.b16 %v243
    %v827 = vpack.c.b16 %v700, %v699
    %v828 = vpack.c.b16 %v702, %v701
    %v829 = vpack.c.b16 %v704, %v703
    %v830 = vpack.c.b16 %v706, %v705
    %v831 = vpack.c.b16 %v708, %v707
    %v832 = vpack.c.b16 %v710, %v709
    %v833 = vpack.c.b16 %v712, %v711
    %v834 = vpack.c.b16 %v714, %v713
    %v835 = vpack.c.b16 %v716, %v715
    %v836 = vpack.c.b16 %v718, %v717
    %v837 = vpack.c.b16 %v720, %v719
    %v838 = vpack.c.b16 %v722, %v721
    %v839 = vpack.c.b16 %v724, %v723
    %v840 = vpack.c.b16 %v726, %v725
    %v841 = vpack.c.b16 %v728, %v727
    %v842 = vpack.c.b16 %v730, %v729
    %v843 = vpack.c.b16 %v732, %v731
    %v844 = vpack.c.b16 %v734, %v733
    %v845 = vpack.c.b16 %v736, %v735
    %v846 = vpack.c.b16 %v738, %v737
    %v847 = vpack.c.b16 %v740, %v739
    %v848 = vpack.c.b16 %v742, %v741
    %v849 = vpack.c.b16 %v744, %v743
    %v850 = vpack.c.b16 %v746, %v745
    %v851 = vpack.c.b16 %v748, %v747
    %v852 = vpack.c.b16 %v750, %v749
    %v853 = vpack.c.b16 %v752, %v751
    %v854 = vpack.c.b16 %v754, %v753
    %v855 = vpack.c.b16 %v756, %v755
    %v856 = vpack.c.b16 %v758, %v757
    %v857 = vpack.c.b16 %v760, %v759
    %v858 = vpack.c.b16 %v762, %v761
    %v859 = vpack.c.b16 %v764, %v763
    %v860 = vpack.c.b16 %v766, %v765
    %v861 = vpack.c.b16 %v768, %v767
    %v862 = vpack.c.b16 %v770, %v769
    %v863 = vpack.c.b16 %v772, %v771
    %v864 = vpack.c.b16 %v774, %v773
    %v865 = vpack.c.b16 %v776, %v775
    %v866 = vpack.c.b16 %v778, %v777
    %v867 = vpack.c.b16 %v780, %v779
    %v868 = vpack.c.b16 %v782, %v781
    %v869 = vpack.c.b16 %v784, %v783
    %v870 = vpack.c.b16 %v786, %v785
    %v871 = vpack.c.b16 %v788, %v787
    %v872 = vpack.c.b16 %v790, %v789
    %v873 = vpack.c.b16 %v792, %v791
    %v874 = vpack.c.b16 %v794, %v793
    %v875 = vpack.c.b16 %v796, %v795
    %v876 = vpack.c.b16 %v798, %v797
    %v877 = vpack.c.b16 %v800, %v799
    %v878 = vpack.c.b16 %v802, %v801
    %v879 = vpack.c.b16 %v804, %v803
    %v880 = vpack.c.b16 %v806, %v805
    %v881 = vpack.c.b16 %v808, %v807
    %v882 = vpack.c.b16 %v810, %v809
    %v883 = vpack.c.b16 %v812, %v811
    %v884 = vpack.c.b16 %v814, %v813
    %v885 = vpack.c.b16 %v816, %v815
    %v886 = vpack.c.b16 %v818, %v817
    %v887 = vpack.c.b16 %v820, %v819
    %v888 = vpack.c.b16 %v822, %v821
    %v889 = vpack.c.b16 %v824, %v823
    %v890 = vpack.c.b16 %v826, %v825
    %955 = vmatprep.subr.bf16.mxu0 0
    %956 = vmatpush1.bf16.msra.mxu0 %v834
    %957 = vmatprep.subr.bf16.mxu0 0
    %958 = vmatpush1.bf16.msra.mxu0 %v833
    %959 = vmatprep.subr.bf16.mxu0 0
    %960 = vmatpush1.bf16.msra.mxu0 %v832
    %961 = vmatprep.subr.bf16.mxu0 0
    %962 = vmatpush1.bf16.msra.mxu0 %v831
    %963 = vmatprep.subr.bf16.mxu0 0
    %964 = vmatpush1.bf16.msra.mxu0 %v830
    %965 = vmatprep.subr.bf16.mxu0 0
    %966 = vmatpush1.bf16.msra.mxu0 %v829
    %967 = vmatprep.subr.bf16.mxu0 0
    %968 = vmatpush1.bf16.msra.mxu0 %v828
    %969 = vmatprep.subr.bf16.mxu0 0
    %970 = vmatpush1.bf16.msra.mxu0 %v827
    %971 = vmatprep.subr.bf16.mxu0 0
    %972 = vmatpush2.bf16.msra.mxu0 %v842
    %973 = vmatprep.subr.bf16.mxu0 0
    %974 = vmatpush2.bf16.msra.mxu0 %v841
    %975 = vmatprep.subr.bf16.mxu0 0
    %976 = vmatpush2.bf16.msra.mxu0 %v840
    %977 = vmatprep.subr.bf16.mxu0 0
    %978 = vmatpush2.bf16.msra.mxu0 %v839
    %979 = vmatprep.subr.bf16.mxu0 0
    %980 = vmatpush2.bf16.msra.mxu0 %v838
    %981 = vmatprep.subr.bf16.mxu0 0
    %982 = vmatpush2.bf16.msra.mxu0 %v837
    %983 = vmatprep.subr.bf16.mxu0 0
    %984 = vmatpush2.bf16.msra.mxu0 %v836
    %985 = vmatprep.subr.bf16.mxu0 0
    %986 = vmatpush2.bf16.msra.mxu0 %v835
    %987 = vmatprep.mubr.bf16.mxu0 %v444
    %988 = vmatmul.mubr.bf16.gmra.mxu0 %v443
    %v989 = vpop.f32.mrf.mxu0
    %v990 = vadd.f32 %v249, %v989
    %v991 = vpop.f32.mrf.mxu0
    %v992 = vpop.f32.mrf.mxu0
    %v993 = vadd.f32 %v249, %v992
    %v994 = vpop.f32.mrf.mxu0
    %995 = vmatprep.mubr.bf16.mxu0 %v452
    %996 = vmatmul.mubr.bf16.gmra.mxu0 %v451
    %v997 = vpop.f32.mrf.mxu0
    %v998 = vadd.f32 %v249, %v997
    %v999 = vpop.f32.mrf.mxu0
    %v1000 = vpop.f32.mrf.mxu0
    %v1001 = vadd.f32 %v249, %v1000
    %v1002 = vpop.f32.mrf.mxu0
    %1003 = vmatprep.mubr.bf16.mxu0 %v460
    %1004 = vmatmul.mubr.bf16.gmra.mxu0 %v459
    %v1005 = vpop.f32.mrf.mxu0
    %v1006 = vadd.f32 %v249, %v1005
    %v1007 = vpop.f32.mrf.mxu0
    %v1008 = vpop.f32.mrf.mxu0
    %v1009 = vadd.f32 %v249, %v1008
    %v1010 = vpop.f32.mrf.mxu0
    %1011 = vmatprep.mubr.bf16.mxu0 %v468
    %1012 = vmatmul.mubr.bf16.gmra.mxu0 %v467
    %v1013 = vpop.f32.mrf.mxu0
    %v1014 = vadd.f32 %v249, %v1013
    %v1015 = vpop.f32.mrf.mxu0
    %v1016 = vpop.f32.mrf.mxu0
    %v1017 = vadd.f32 %v249, %v1016
    %v1018 = vpop.f32.mrf.mxu0
    %1019 = vmatprep.mubr.bf16.mxu0 %v476
    %1020 = vmatmul.mubr.bf16.gmra.mxu0 %v475
    %v1021 = vpop.f32.mrf.mxu0
    %v1022 = vadd.f32 %v249, %v1021
    %v1023 = vpop.f32.mrf.mxu0
    %v1024 = vpop.f32.mrf.mxu0
    %v1025 = vadd.f32 %v249, %v1024
    %v1026 = vpop.f32.mrf.mxu0
    %1027 = vmatprep.mubr.bf16.mxu0 %v484
    %1028 = vmatmul.mubr.bf16.gmra.mxu0 %v483
    %v1029 = vpop.f32.mrf.mxu0
    %v1030 = vadd.f32 %v249, %v1029
    %v1031 = vpop.f32.mrf.mxu0
    %v1032 = vpop.f32.mrf.mxu0
    %v1033 = vadd.f32 %v249, %v1032
    %v1034 = vpop.f32.mrf.mxu0
    %1035 = vmatprep.mubr.bf16.mxu0 %v492
    %1036 = vmatmul.mubr.bf16.gmra.mxu0 %v491
    %v1037 = vpop.f32.mrf.mxu0
    %v1038 = vadd.f32 %v249, %v1037
    %v1039 = vpop.f32.mrf.mxu0
    %v1040 = vpop.f32.mrf.mxu0
    %v1041 = vadd.f32 %v249, %v1040
    %v1042 = vpop.f32.mrf.mxu0
    %1043 = vmatprep.mubr.bf16.mxu0 %v500
    %1044 = vmatmul.mubr.bf16.gmra.mxu0 %v499
    %v1045 = vpop.f32.mrf.mxu0
    %v1046 = vadd.f32 %v249, %v1045
    %v1047 = vpop.f32.mrf.mxu0
    %v1048 = vpop.f32.mrf.mxu0
    %v1049 = vadd.f32 %v249, %v1048
    %v1050 = vpop.f32.mrf.mxu0
    %1051 = vdwg.mxu0
    %1052 = vmatprep.subr.bf16.mxu0 0
    %1053 = vmatpush1.bf16.msra.mxu0 %v850
    %1054 = vmatprep.subr.bf16.mxu0 0
    %1055 = vmatpush1.bf16.msra.mxu0 %v849
    %1056 = vmatprep.subr.bf16.mxu0 0
    %1057 = vmatpush1.bf16.msra.mxu0 %v848
    %1058 = vmatprep.subr.bf16.mxu0 0
    %1059 = vmatpush1.bf16.msra.mxu0 %v847
    %1060 = vmatprep.subr.bf16.mxu0 0
    %1061 = vmatpush1.bf16.msra.mxu0 %v846
    %1062 = vmatprep.subr.bf16.mxu0 0
    %1063 = vmatpush1.bf16.msra.mxu0 %v845
    %1064 = vmatprep.subr.bf16.mxu0 0
    %1065 = vmatpush1.bf16.msra.mxu0 %v844
    %1066 = vmatprep.subr.bf16.mxu0 0
    %1067 = vmatpush1.bf16.msra.mxu0 %v843
    %1068 = vmatprep.subr.bf16.mxu0 0
    %1069 = vmatpush2.bf16.msra.mxu0 %v858
    %1070 = vmatprep.subr.bf16.mxu0 0
    %1071 = vmatpush2.bf16.msra.mxu0 %v857
    %1072 = vmatprep.subr.bf16.mxu0 0
    %1073 = vmatpush2.bf16.msra.mxu0 %v856
    %1074 = vmatprep.subr.bf16.mxu0 0
    %1075 = vmatpush2.bf16.msra.mxu0 %v855
    %1076 = vmatprep.subr.bf16.mxu0 0
    %1077 = vmatpush2.bf16.msra.mxu0 %v854
    %1078 = vmatprep.subr.bf16.mxu0 0
    %1079 = vmatpush2.bf16.msra.mxu0 %v853
    %1080 = vmatprep.subr.bf16.mxu0 0
    %1081 = vmatpush2.bf16.msra.mxu0 %v852
    %1082 = vmatprep.subr.bf16.mxu0 0
    %1083 = vmatpush2.bf16.msra.mxu0 %v851
    %1084 = vmatprep.mubr.bf16.mxu0 %v446
    %1085 = vmatmul.mubr.bf16.gmra.mxu0 %v445
    %v1086 = vpop.f32.mrf.mxu0
    %v1087 = vadd.f32 %v990, %v1086
    %v1088 = vpop.f32.mrf.mxu0
    %v1089 = vpop.f32.mrf.mxu0
    %v1090 = vadd.f32 %v993, %v1089
    %v1091 = vpop.f32.mrf.mxu0
    %1092 = vmatprep.mubr.bf16.mxu0 %v454
    %1093 = vmatmul.mubr.bf16.gmra.mxu0 %v453
    %v1094 = vpop.f32.mrf.mxu0
    %v1095 = vadd.f32 %v998, %v1094
    %v1096 = vpop.f32.mrf.mxu0
    %v1097 = vpop.f32.mrf.mxu0
    %v1098 = vadd.f32 %v1001, %v1097
    %v1099 = vpop.f32.mrf.mxu0
    %1100 = vmatprep.mubr.bf16.mxu0 %v462
    %1101 = vmatmul.mubr.bf16.gmra.mxu0 %v461
    %v1102 = vpop.f32.mrf.mxu0
    %v1103 = vadd.f32 %v1006, %v1102
    %v1104 = vpop.f32.mrf.mxu0
    %v1105 = vpop.f32.mrf.mxu0
    %v1106 = vadd.f32 %v1009, %v1105
    %v1107 = vpop.f32.mrf.mxu0
    %1108 = vmatprep.mubr.bf16.mxu0 %v470
    %1109 = vmatmul.mubr.bf16.gmra.mxu0 %v469
    %v1110 = vpop.f32.mrf.mxu0
    %v1111 = vadd.f32 %v1014, %v1110
    %v1112 = vpop.f32.mrf.mxu0
    %v1113 = vpop.f32.mrf.mxu0
    %v1114 = vadd.f32 %v1017, %v1113
    %v1115 = vpop.f32.mrf.mxu0
    %1116 = vmatprep.mubr.bf16.mxu0 %v478
    %1117 = vmatmul.mubr.bf16.gmra.mxu0 %v477
    %v1118 = vpop.f32.mrf.mxu0
    %v1119 = vadd.f32 %v1022, %v1118
    %v1120 = vpop.f32.mrf.mxu0
    %v1121 = vpop.f32.mrf.mxu0
    %v1122 = vadd.f32 %v1025, %v1121
    %v1123 = vpop.f32.mrf.mxu0
    %1124 = vmatprep.mubr.bf16.mxu0 %v486
    %1125 = vmatmul.mubr.bf16.gmra.mxu0 %v485
    %v1126 = vpop.f32.mrf.mxu0
    %v1127 = vadd.f32 %v1030, %v1126
    %v1128 = vpop.f32.mrf.mxu0
    %v1129 = vpop.f32.mrf.mxu0
    %v1130 = vadd.f32 %v1033, %v1129
    %v1131 = vpop.f32.mrf.mxu0
    %1132 = vmatprep.mubr.bf16.mxu0 %v494
    %1133 = vmatmul.mubr.bf16.gmra.mxu0 %v493
    %v1134 = vpop.f32.mrf.mxu0
    %v1135 = vadd.f32 %v1038, %v1134
    %v1136 = vpop.f32.mrf.mxu0
    %v1137 = vpop.f32.mrf.mxu0
    %v1138 = vadd.f32 %v1041, %v1137
    %v1139 = vpop.f32.mrf.mxu0
    %1140 = vmatprep.mubr.bf16.mxu0 %v502
    %1141 = vmatmul.mubr.bf16.gmra.mxu0 %v501
    %v1142 = vpop.f32.mrf.mxu0
    %v1143 = vadd.f32 %v1046, %v1142
    %v1144 = vpop.f32.mrf.mxu0
    %v1145 = vpop.f32.mrf.mxu0
    %v1146 = vadd.f32 %v1049, %v1145
    %v1147 = vpop.f32.mrf.mxu0
    %1148 = vdwg.mxu0
    %1149 = vmatprep.subr.bf16.mxu0 0
    %1150 = vmatpush1.bf16.msra.mxu0 %v866
    %1151 = vmatprep.subr.bf16.mxu0 0
    %1152 = vmatpush1.bf16.msra.mxu0 %v865
    %1153 = vmatprep.subr.bf16.mxu0 0
    %1154 = vmatpush1.bf16.msra.mxu0 %v864
    %1155 = vmatprep.subr.bf16.mxu0 0
    %1156 = vmatpush1.bf16.msra.mxu0 %v863
    %1157 = vmatprep.subr.bf16.mxu0 0
    %1158 = vmatpush1.bf16.msra.mxu0 %v862
    %1159 = vmatprep.subr.bf16.mxu0 0
    %1160 = vmatpush1.bf16.msra.mxu0 %v861
    %1161 = vmatprep.subr.bf16.mxu0 0
    %1162 = vmatpush1.bf16.msra.mxu0 %v860
    %1163 = vmatprep.subr.bf16.mxu0 0
    %1164 = vmatpush1.bf16.msra.mxu0 %v859
    %1165 = vmatprep.subr.bf16.mxu0 0
    %1166 = vmatpush2.bf16.msra.mxu0 %v874
    %1167 = vmatprep.subr.bf16.mxu0 0
    %1168 = vmatpush2.bf16.msra.mxu0 %v873
    %1169 = vmatprep.subr.bf16.mxu0 0
    %1170 = vmatpush2.bf16.msra.mxu0 %v872
    %1171 = vmatprep.subr.bf16.mxu0 0
    %1172 = vmatpush2.bf16.msra.mxu0 %v871
    %1173 = vmatprep.subr.bf16.mxu0 0
    %1174 = vmatpush2.bf16.msra.mxu0 %v870
    %1175 = vmatprep.subr.bf16.mxu0 0
    %1176 = vmatpush2.bf16.msra.mxu0 %v869
    %1177 = vmatprep.subr.bf16.mxu0 0
    %1178 = vmatpush2.bf16.msra.mxu0 %v868
    %1179 = vmatprep.subr.bf16.mxu0 0
    %1180 = vmatpush2.bf16.msra.mxu0 %v867
    %1181 = vmatprep.mubr.bf16.mxu0 %v448
    %1182 = vmatmul.mubr.bf16.gmra.mxu0 %v447
    %v1183 = vpop.f32.mrf.mxu0
    %v1184 = vadd.f32 %v1087, %v1183
    %v1185 = vpop.f32.mrf.mxu0
    %v1186 = vpop.f32.mrf.mxu0
    %v1187 = vadd.f32 %v1090, %v1186
    %v1188 = vpop.f32.mrf.mxu0
    %1189 = vmatprep.mubr.bf16.mxu0 %v456
    %1190 = vmatmul.mubr.bf16.gmra.mxu0 %v455
    %v1191 = vpop.f32.mrf.mxu0
    %v1192 = vadd.f32 %v1095, %v1191
    %v1193 = vpop.f32.mrf.mxu0
    %v1194 = vpop.f32.mrf.mxu0
    %v1195 = vadd.f32 %v1098, %v1194
    %v1196 = vpop.f32.mrf.mxu0
    %1197 = vmatprep.mubr.bf16.mxu0 %v464
    %1198 = vmatmul.mubr.bf16.gmra.mxu0 %v463
    %v1199 = vpop.f32.mrf.mxu0
    %v1200 = vadd.f32 %v1103, %v1199
    %v1201 = vpop.f32.mrf.mxu0
    %v1202 = vpop.f32.mrf.mxu0
    %v1203 = vadd.f32 %v1106, %v1202
    %v1204 = vpop.f32.mrf.mxu0
    %1205 = vmatprep.mubr.bf16.mxu0 %v472
    %1206 = vmatmul.mubr.bf16.gmra.mxu0 %v471
    %v1207 = vpop.f32.mrf.mxu0
    %v1208 = vadd.f32 %v1111, %v1207
    %v1209 = vpop.f32.mrf.mxu0
    %v1210 = vpop.f32.mrf.mxu0
    %v1211 = vadd.f32 %v1114, %v1210
    %v1212 = vpop.f32.mrf.mxu0
    %1213 = vmatprep.mubr.bf16.mxu0 %v480
    %1214 = vmatmul.mubr.bf16.gmra.mxu0 %v479
    %v1215 = vpop.f32.mrf.mxu0
    %v1216 = vadd.f32 %v1119, %v1215
    %v1217 = vpop.f32.mrf.mxu0
    %v1218 = vpop.f32.mrf.mxu0
    %v1219 = vadd.f32 %v1122, %v1218
    %v1220 = vpop.f32.mrf.mxu0
    %1221 = vmatprep.mubr.bf16.mxu0 %v488
    %1222 = vmatmul.mubr.bf16.gmra.mxu0 %v487
    %v1223 = vpop.f32.mrf.mxu0
    %v1224 = vadd.f32 %v1127, %v1223
    %v1225 = vpop.f32.mrf.mxu0
    %v1226 = vpop.f32.mrf.mxu0
    %v1227 = vadd.f32 %v1130, %v1226
    %v1228 = vpop.f32.mrf.mxu0
    %1229 = vmatprep.mubr.bf16.mxu0 %v496
    %1230 = vmatmul.mubr.bf16.gmra.mxu0 %v495
    %v1231 = vpop.f32.mrf.mxu0
    %v1232 = vadd.f32 %v1135, %v1231
    %v1233 = vpop.f32.mrf.mxu0
    %v1234 = vpop.f32.mrf.mxu0
    %v1235 = vadd.f32 %v1138, %v1234
    %v1236 = vpop.f32.mrf.mxu0
    %1237 = vmatprep.mubr.bf16.mxu0 %v504
    %1238 = vmatmul.mubr.bf16.gmra.mxu0 %v503
    %v1239 = vpop.f32.mrf.mxu0
    %v1240 = vadd.f32 %v1143, %v1239
    %v1241 = vpop.f32.mrf.mxu0
    %v1242 = vpop.f32.mrf.mxu0
    %v1243 = vadd.f32 %v1146, %v1242
    %v1244 = vpop.f32.mrf.mxu0
    %1245 = vdwg.mxu0
    %1246 = vmatprep.subr.bf16.mxu0 0
    %1247 = vmatpush1.bf16.msra.mxu0 %v882
    %1248 = vmatprep.subr.bf16.mxu0 0
    %1249 = vmatpush1.bf16.msra.mxu0 %v881
    %1250 = vmatprep.subr.bf16.mxu0 0
    %1251 = vmatpush1.bf16.msra.mxu0 %v880
    %1252 = vmatprep.subr.bf16.mxu0 0
    %1253 = vmatpush1.bf16.msra.mxu0 %v879
    %1254 = vmatprep.subr.bf16.mxu0 0
    %1255 = vmatpush1.bf16.msra.mxu0 %v878
    %1256 = vmatprep.subr.bf16.mxu0 0
    %1257 = vmatpush1.bf16.msra.mxu0 %v877
    %1258 = vmatprep.subr.bf16.mxu0 0
    %1259 = vmatpush1.bf16.msra.mxu0 %v876
    %1260 = vmatprep.subr.bf16.mxu0 0
    %1261 = vmatpush1.bf16.msra.mxu0 %v875
    %1262 = vmatprep.subr.bf16.mxu0 0
    %1263 = vmatpush2.bf16.msra.mxu0 %v890
    %1264 = vmatprep.subr.bf16.mxu0 0
    %1265 = vmatpush2.bf16.msra.mxu0 %v889
    %1266 = vmatprep.subr.bf16.mxu0 0
    %1267 = vmatpush2.bf16.msra.mxu0 %v888
    %1268 = vmatprep.subr.bf16.mxu0 0
    %1269 = vmatpush2.bf16.msra.mxu0 %v887
    %1270 = vmatprep.subr.bf16.mxu0 0
    %1271 = vmatpush2.bf16.msra.mxu0 %v886
    %1272 = vmatprep.subr.bf16.mxu0 0
    %1273 = vmatpush2.bf16.msra.mxu0 %v885
    %1274 = vmatprep.subr.bf16.mxu0 0
    %1275 = vmatpush2.bf16.msra.mxu0 %v884
    %1276 = vmatprep.subr.bf16.mxu0 0
    %1277 = vmatpush2.bf16.msra.mxu0 %v883
    %1278 = vmatprep.mubr.bf16.mxu0 %v450
    %1279 = vmatmul.mubr.bf16.gmra.mxu0 %v449
    %v1280 = vpop.f32.mrf.mxu0
    %v1281 = vadd.f32 %v1184, %v1280
    %v1282 = vpop.f32.mrf.mxu0
    %v1283 = vpop.f32.mrf.mxu0
    %v1284 = vadd.f32 %v1187, %v1283
    %v1285 = vpop.f32.mrf.mxu0
    %1286 = vmatprep.mubr.bf16.mxu0 %v458
    %1287 = vmatmul.mubr.bf16.gmra.mxu0 %v457
    %v1288 = vpop.f32.mrf.mxu0
    %v1289 = vadd.f32 %v1192, %v1288
    %v1290 = vpop.f32.mrf.mxu0
    %v1291 = vpop.f32.mrf.mxu0
    %v1292 = vadd.f32 %v1195, %v1291
    %v1293 = vpop.f32.mrf.mxu0
    %1294 = vmatprep.mubr.bf16.mxu0 %v466
    %1295 = vmatmul.mubr.bf16.gmra.mxu0 %v465
    %v1296 = vpop.f32.mrf.mxu0
    %v1297 = vadd.f32 %v1200, %v1296
    %v1298 = vpop.f32.mrf.mxu0
    %v1299 = vpop.f32.mrf.mxu0
    %v1300 = vadd.f32 %v1203, %v1299
    %v1301 = vpop.f32.mrf.mxu0
    %1302 = vmatprep.mubr.bf16.mxu0 %v474
    %1303 = vmatmul.mubr.bf16.gmra.mxu0 %v473
    %v1304 = vpop.f32.mrf.mxu0
    %v1305 = vadd.f32 %v1208, %v1304
    %v1306 = vpop.f32.mrf.mxu0
    %v1307 = vpop.f32.mrf.mxu0
    %v1308 = vadd.f32 %v1211, %v1307
    %v1309 = vpop.f32.mrf.mxu0
    %1310 = vmatprep.mubr.bf16.mxu0 %v482
    %1311 = vmatmul.mubr.bf16.gmra.mxu0 %v481
    %v1312 = vpop.f32.mrf.mxu0
    %v1313 = vadd.f32 %v1216, %v1312
    %v1314 = vpop.f32.mrf.mxu0
    %v1315 = vpop.f32.mrf.mxu0
    %v1316 = vadd.f32 %v1219, %v1315
    %v1317 = vpop.f32.mrf.mxu0
    %1318 = vmatprep.mubr.bf16.mxu0 %v490
    %1319 = vmatmul.mubr.bf16.gmra.mxu0 %v489
    %v1320 = vpop.f32.mrf.mxu0
    %v1321 = vadd.f32 %v1224, %v1320
    %v1322 = vpop.f32.mrf.mxu0
    %v1323 = vpop.f32.mrf.mxu0
    %v1324 = vadd.f32 %v1227, %v1323
    %v1325 = vpop.f32.mrf.mxu0
    %1326 = vmatprep.mubr.bf16.mxu0 %v498
    %1327 = vmatmul.mubr.bf16.gmra.mxu0 %v497
    %v1328 = vpop.f32.mrf.mxu0
    %v1329 = vadd.f32 %v1232, %v1328
    %v1330 = vpop.f32.mrf.mxu0
    %v1331 = vpop.f32.mrf.mxu0
    %v1332 = vadd.f32 %v1235, %v1331
    %v1333 = vpop.f32.mrf.mxu0
    %1334 = vmatprep.mubr.bf16.mxu0 %v506
    %1335 = vmatmul.mubr.bf16.gmra.mxu0 %v505
    %v1336 = vpop.f32.mrf.mxu0
    %v1337 = vadd.f32 %v1240, %v1336
    %v1338 = vpop.f32.mrf.mxu0
    %v1339 = vpop.f32.mrf.mxu0
    %v1340 = vadd.f32 %v1243, %v1339
    %v1341 = vpop.f32.mrf.mxu0
    %1342 = vdwg.mxu0
    %1343 = vmax.xlane.f32.xlu0 %v1281
    %v1344 = vpop.xlane.xlu0 %1343
    %1345 = vmax.xlane.f32.xlu0 %v1284
    %v1346 = vpop.xlane.xlu0 %1345
    %1347 = vmax.xlane.f32.xlu0 %v1289
    %v1348 = vpop.xlane.xlu0 %1347
    %1349 = vmax.xlane.f32.xlu0 %v1292
    %v1350 = vpop.xlane.xlu0 %1349
    %1351 = vmax.xlane.f32.xlu0 %v1297
    %v1352 = vpop.xlane.xlu0 %1351
    %1353 = vmax.xlane.f32.xlu0 %v1300
    %v1354 = vpop.xlane.xlu0 %1353
    %1355 = vmax.xlane.f32.xlu0 %v1305
    %v1356 = vpop.xlane.xlu0 %1355
    %1357 = vmax.xlane.f32.xlu0 %v1308
    %v1358 = vpop.xlane.xlu0 %1357
    %1359 = vmax.xlane.f32.xlu0 %v1313
    %v1360 = vpop.xlane.xlu0 %1359
    %1361 = vmax.xlane.f32.xlu0 %v1316
    %v1362 = vpop.xlane.xlu0 %1361
    %1363 = vmax.xlane.f32.xlu0 %v1321
    %v1364 = vpop.xlane.xlu0 %1363
    %1365 = vmax.xlane.f32.xlu0 %v1324
    %v1366 = vpop.xlane.xlu0 %1365
    %1367 = vmax.xlane.f32.xlu0 %v1329
    %v1368 = vpop.xlane.xlu0 %1367
    %1369 = vmax.xlane.f32.xlu0 %v1332
    %v1370 = vpop.xlane.xlu0 %1369
    %1371 = vmax.xlane.f32.xlu0 %v1337
    %v1372 = vpop.xlane.xlu0 %1371
    %1373 = vmax.xlane.f32.xlu0 %v1340
    %v1374 = vpop.xlane.xlu0 %1373
    %v1375 = vsub.f32 %v1281, %v1344
    %v1376 = vsub.f32 %v1284, %v1346
    %v1377 = vsub.f32 %v1289, %v1348
    %v1378 = vsub.f32 %v1292, %v1350
    %v1379 = vsub.f32 %v1297, %v1352
    %v1380 = vsub.f32 %v1300, %v1354
    %v1381 = vsub.f32 %v1305, %v1356
    %v1382 = vsub.f32 %v1308, %v1358
    %v1383 = vsub.f32 %v1313, %v1360
    %v1384 = vsub.f32 %v1316, %v1362
    %v1385 = vsub.f32 %v1321, %v1364
    %v1386 = vsub.f32 %v1324, %v1366
    %v1387 = vsub.f32 %v1329, %v1368
    %v1388 = vsub.f32 %v1332, %v1370
    %v1389 = vsub.f32 %v1337, %v1372
    %v1390 = vsub.f32 %v1340, %v1374
    %v1391 = vmul.f32 %v1375, 1.442695
    %v1392 = vpow.pop %v1391
    %v1393 = vmul.f32 %v1376, 1.442695
    %v1394 = vpow.pop %v1393
    %v1395 = vmul.f32 %v1377, 1.442695
    %v1396 = vpow.pop %v1395
    %v1397 = vmul.f32 %v1378, 1.442695
    %v1398 = vpow.pop %v1397
    %v1399 = vmul.f32 %v1379, 1.442695
    %v1400 = vpow.pop %v1399
    %v1401 = vmul.f32 %v1380, 1.442695
    %v1402 = vpow.pop %v1401
    %v1403 = vmul.f32 %v1381, 1.442695
    %v1404 = vpow.pop %v1403
    %v1405 = vmul.f32 %v1382, 1.442695
    %v1406 = vpow.pop %v1405
    %v1407 = vmul.f32 %v1383, 1.442695
    %v1408 = vpow.pop %v1407
    %v1409 = vmul.f32 %v1384, 1.442695
    %v1410 = vpow.pop %v1409
    %v1411 = vmul.f32 %v1385, 1.442695
    %v1412 = vpow.pop %v1411
    %v1413 = vmul.f32 %v1386, 1.442695
    %v1414 = vpow.pop %v1413
    %v1415 = vmul.f32 %v1387, 1.442695
    %v1416 = vpow.pop %v1415
    %v1417 = vmul.f32 %v1388, 1.442695
    %v1418 = vpow.pop %v1417
    %v1419 = vmul.f32 %v1389, 1.442695
    %v1420 = vpow.pop %v1419
    %v1421 = vmul.f32 %v1390, 1.442695
    %v1422 = vpow.pop %v1421
    %1423 = vadd.xlane.f32.xlu0 %v1392
    %v1424 = vpop.xlane.xlu0 %1423
    %1425 = vadd.xlane.f32.xlu0 %v1394
    %v1426 = vpop.xlane.xlu0 %1425
    %1427 = vadd.xlane.f32.xlu0 %v1396
    %v1428 = vpop.xlane.xlu0 %1427
    %1429 = vadd.xlane.f32.xlu0 %v1398
    %v1430 = vpop.xlane.xlu0 %1429
    %1431 = vadd.xlane.f32.xlu0 %v1400
    %v1432 = vpop.xlane.xlu0 %1431
    %1433 = vadd.xlane.f32.xlu0 %v1402
    %v1434 = vpop.xlane.xlu0 %1433
    %1435 = vadd.xlane.f32.xlu0 %v1404
    %v1436 = vpop.xlane.xlu0 %1435
    %1437 = vadd.xlane.f32.xlu0 %v1406
    %v1438 = vpop.xlane.xlu0 %1437
    %1439 = vadd.xlane.f32.xlu0 %v1408
    %v1440 = vpop.xlane.xlu0 %1439
    %1441 = vadd.xlane.f32.xlu0 %v1410
    %v1442 = vpop.xlane.xlu0 %1441
    %1443 = vadd.xlane.f32.xlu0 %v1412
    %v1444 = vpop.xlane.xlu0 %1443
    %1445 = vadd.xlane.f32.xlu0 %v1414
    %v1446 = vpop.xlane.xlu0 %1445
    %1447 = vadd.xlane.f32.xlu0 %v1416
    %v1448 = vpop.xlane.xlu0 %1447
    %1449 = vadd.xlane.f32.xlu0 %v1418
    %v1450 = vpop.xlane.xlu0 %1449
    %1451 = vadd.xlane.f32.xlu0 %v1420
    %v1452 = vpop.xlane.xlu0 %1451
    %1453 = vadd.xlane.f32.xlu0 %v1422
    %v1454 = vpop.xlane.xlu0 %1453
    %v1455 = vlog2.pop %v1424
    %v1456 = vmul.f32 %v1455, 0.6931472
    %v1457 = vlog2.pop %v1426
    %v1458 = vmul.f32 %v1457, 0.6931472
    %v1459 = vlog2.pop %v1428
    %v1460 = vmul.f32 %v1459, 0.6931472
    %v1461 = vlog2.pop %v1430
    %v1462 = vmul.f32 %v1461, 0.6931472
    %v1463 = vlog2.pop %v1432
    %v1464 = vmul.f32 %v1463, 0.6931472
    %v1465 = vlog2.pop %v1434
    %v1466 = vmul.f32 %v1465, 0.6931472
    %v1467 = vlog2.pop %v1436
    %v1468 = vmul.f32 %v1467, 0.6931472
    %v1469 = vlog2.pop %v1438
    %v1470 = vmul.f32 %v1469, 0.6931472
    %v1471 = vlog2.pop %v1440
    %v1472 = vmul.f32 %v1471, 0.6931472
    %v1473 = vlog2.pop %v1442
    %v1474 = vmul.f32 %v1473, 0.6931472
    %v1475 = vlog2.pop %v1444
    %v1476 = vmul.f32 %v1475, 0.6931472
    %v1477 = vlog2.pop %v1446
    %v1478 = vmul.f32 %v1477, 0.6931472
    %v1479 = vlog2.pop %v1448
    %v1480 = vmul.f32 %v1479, 0.6931472
    %v1481 = vlog2.pop %v1450
    %v1482 = vmul.f32 %v1481, 0.6931472
    %v1483 = vlog2.pop %v1452
    %v1484 = vmul.f32 %v1483, 0.6931472
    %v1485 = vlog2.pop %v1454
    %v1486 = vmul.f32 %v1485, 0.6931472
    %v1487 = vadd.f32 %v1344, %v1456
    %v1488 = vadd.f32 %v1346, %v1458
    %v1489 = vadd.f32 %v1348, %v1460
    %v1490 = vadd.f32 %v1350, %v1462
    %v1491 = vadd.f32 %v1352, %v1464
    %v1492 = vadd.f32 %v1354, %v1466
    %v1493 = vadd.f32 %v1356, %v1468
    %v1494 = vadd.f32 %v1358, %v1470
    %v1495 = vadd.f32 %v1360, %v1472
    %v1496 = vadd.f32 %v1362, %v1474
    %v1497 = vadd.f32 %v1364, %v1476
    %v1498 = vadd.f32 %v1366, %v1478
    %v1499 = vadd.f32 %v1368, %v1480
    %v1500 = vadd.f32 %v1370, %v1482
    %v1501 = vadd.f32 %v1372, %v1484
    %v1502 = vadd.f32 %v1374, %v1486
    %v1503 = vsub.f32 %v1281, %v1487
    %v1504 = vsub.f32 %v1284, %v1488
    %v1505 = vsub.f32 %v1289, %v1489
    %v1506 = vsub.f32 %v1292, %v1490
    %v1507 = vsub.f32 %v1297, %v1491
    %v1508 = vsub.f32 %v1300, %v1492
    %v1509 = vsub.f32 %v1305, %v1493
    %v1510 = vsub.f32 %v1308, %v1494
    %v1511 = vsub.f32 %v1313, %v1495
    %v1512 = vsub.f32 %v1316, %v1496
    %v1513 = vsub.f32 %v1321, %v1497
    %v1514 = vsub.f32 %v1324, %v1498
    %v1515 = vsub.f32 %v1329, %v1499
    %v1516 = vsub.f32 %v1332, %v1500
    %v1517 = vsub.f32 %v1337, %v1501
    %v1518 = vsub.f32 %v1340, %v1502
    %v1519 = vld [vmem:[%s3] sm:$0xff]
    %v1520 = vlaneseq
    %v1521 = vshrl.u32 %v1520, 7
    %v1522 = vadd.s32 %v1521, 8
    %v1523 = vadd.s32 %v1521, 16
    %v1524 = vadd.s32 %v1521, 24
    %v1525 = vadd.s32 %v1521, 32
    %v1526 = vadd.s32 %v1521, 40
    %v1527 = vadd.s32 %v1521, 48
    %v1528 = vadd.s32 %v1521, 56
    %v1529 = vadd.s32 %v1521, 64
    %v1530 = vadd.s32 %v1521, 72
    %v1531 = vadd.s32 %v1521, 80
    %v1532 = vadd.s32 %v1521, 88
    %v1533 = vadd.s32 %v1521, 96
    %v1534 = vadd.s32 %v1521, 104
    %v1535 = vadd.s32 %v1521, 112
    %v1536 = vadd.s32 %v1521, 120
    %v1537 = vcombine.high %v1519, %v1519
    %v1539 = vunpack.c.l.s4 1966171168
    %v1540 = vunpack.c.0.s8 %v1539
    %v1541 = vlaneseq
    %v1542 = vshrl.u32 %v1541, 7
    %v1543 = vsub.s32 %v1540, %v1542
    %v1544 = vrot.slane %v1519, %v1543
    %v1546 = vunpack.c.l.s4 1966171168
    %v1547 = vunpack.c.0.s8 %v1546
    %v1548 = vlaneseq
    %v1549 = vshrl.u32 %v1548, 7
    %v1550 = vsub.s32 %v1547, %v1549
    %v1551 = vrot.slane %v1537, %v1550
    %v1552 = vcombine.high %v1544, %v1544
    %v1553 = vcombine.high %v1551, %v1551
    %v1555 = vunpack.c.l.s4 1966171168
    %v1556 = vunpack.c.0.s8 %v1555
    %v1557 = vlaneseq
    %v1558 = vshrl.u32 %v1557, 7
    %v1559 = vsub.s32 %v1556, %v1558
    %v1560 = vrot.slane %v1544, %v1559
    %v1562 = vunpack.c.l.s4 1966171168
    %v1563 = vunpack.c.0.s8 %v1562
    %v1564 = vlaneseq
    %v1565 = vshrl.u32 %v1564, 7
    %v1566 = vsub.s32 %v1563, %v1565
    %v1567 = vrot.slane %v1551, %v1566
    %v1569 = vunpack.c.l.s4 1966171168
    %v1570 = vunpack.c.0.s8 %v1569
    %v1571 = vlaneseq
    %v1572 = vshrl.u32 %v1571, 7
    %v1573 = vsub.s32 %v1570, %v1572
    %v1574 = vrot.slane %v1552, %v1573
    %v1576 = vunpack.c.l.s4 1966171168
    %v1577 = vunpack.c.0.s8 %v1576
    %v1578 = vlaneseq
    %v1579 = vshrl.u32 %v1578, 7
    %v1580 = vsub.s32 %v1577, %v1579
    %v1581 = vrot.slane %v1553, %v1580
    %v1582 = vcombine.high %v1560, %v1560
    %v1583 = vcombine.high %v1567, %v1567
    %v1584 = vcombine.high %v1574, %v1574
    %v1585 = vcombine.high %v1581, %v1581
    %v1586 = vlaneseq
    %v1587 = vshrl.u32 %v1586, 7
    %v1588 = vsub.s32 0, %v1587
    %v1589 = vrot.slane %v1560, %v1588
    %v1590 = vlaneseq
    %v1591 = vshrl.u32 %v1590, 7
    %v1592 = vsub.s32 0, %v1591
    %v1593 = vrot.slane %v1574, %v1592
    %v1594 = vlaneseq
    %v1595 = vshrl.u32 %v1594, 7
    %v1596 = vsub.s32 0, %v1595
    %v1597 = vrot.slane %v1582, %v1596
    %v1598 = vlaneseq
    %v1599 = vshrl.u32 %v1598, 7
    %v1600 = vsub.s32 0, %v1599
    %v1601 = vrot.slane %v1584, %v1600
    %v1602 = vlaneseq
    %v1603 = vshrl.u32 %v1602, 7
    %v1604 = vsub.s32 0, %v1603
    %v1605 = vrot.slane %v1567, %v1604
    %v1606 = vlaneseq
    %v1607 = vshrl.u32 %v1606, 7
    %v1608 = vsub.s32 0, %v1607
    %v1609 = vrot.slane %v1581, %v1608
    %v1610 = vlaneseq
    %v1611 = vshrl.u32 %v1610, 7
    %v1612 = vsub.s32 0, %v1611
    %v1613 = vrot.slane %v1583, %v1612
    %v1614 = vlaneseq
    %v1615 = vshrl.u32 %v1614, 7
    %v1616 = vsub.s32 0, %v1615
    %v1617 = vrot.slane %v1585, %v1616
    %vm1618 = vcmp.eq.s32.totalorder %v1521, %v1589
    %vm1619 = vcmp.eq.s32.totalorder %v1522, %v1589
    %vm1620 = vcmp.eq.s32.totalorder %v1523, %v1589
    %vm1621 = vcmp.eq.s32.totalorder %v1524, %v1589
    %vm1622 = vcmp.eq.s32.totalorder %v1525, %v1589
    %vm1623 = vcmp.eq.s32.totalorder %v1526, %v1589
    %vm1624 = vcmp.eq.s32.totalorder %v1527, %v1589
    %vm1625 = vcmp.eq.s32.totalorder %v1528, %v1589
    %vm1626 = vcmp.eq.s32.totalorder %v1529, %v1589
    %vm1627 = vcmp.eq.s32.totalorder %v1530, %v1589
    %vm1628 = vcmp.eq.s32.totalorder %v1531, %v1589
    %vm1629 = vcmp.eq.s32.totalorder %v1532, %v1589
    %vm1630 = vcmp.eq.s32.totalorder %v1533, %v1589
    %vm1631 = vcmp.eq.s32.totalorder %v1534, %v1589
    %vm1632 = vcmp.eq.s32.totalorder %v1535, %v1589
    %vm1633 = vcmp.eq.s32.totalorder %v1536, %v1589
    %vm1634 = vcmp.eq.s32.totalorder %v1521, %v1593
    %vm1635 = vcmp.eq.s32.totalorder %v1522, %v1593
    %vm1636 = vcmp.eq.s32.totalorder %v1523, %v1593
    %vm1637 = vcmp.eq.s32.totalorder %v1524, %v1593
    %vm1638 = vcmp.eq.s32.totalorder %v1525, %v1593
    %vm1639 = vcmp.eq.s32.totalorder %v1526, %v1593
    %vm1640 = vcmp.eq.s32.totalorder %v1527, %v1593
    %vm1641 = vcmp.eq.s32.totalorder %v1528, %v1593
    %vm1642 = vcmp.eq.s32.totalorder %v1529, %v1593
    %vm1643 = vcmp.eq.s32.totalorder %v1530, %v1593
    %vm1644 = vcmp.eq.s32.totalorder %v1531, %v1593
    %vm1645 = vcmp.eq.s32.totalorder %v1532, %v1593
    %vm1646 = vcmp.eq.s32.totalorder %v1533, %v1593
    %vm1647 = vcmp.eq.s32.totalorder %v1534, %v1593
    %vm1648 = vcmp.eq.s32.totalorder %v1535, %v1593
    %vm1649 = vcmp.eq.s32.totalorder %v1536, %v1593
    %vm1650 = vcmp.eq.s32.totalorder %v1521, %v1597
    %vm1651 = vcmp.eq.s32.totalorder %v1522, %v1597
    %vm1652 = vcmp.eq.s32.totalorder %v1523, %v1597
    %vm1653 = vcmp.eq.s32.totalorder %v1524, %v1597
    %vm1654 = vcmp.eq.s32.totalorder %v1525, %v1597
    %vm1655 = vcmp.eq.s32.totalorder %v1526, %v1597
    %vm1656 = vcmp.eq.s32.totalorder %v1527, %v1597
    %vm1657 = vcmp.eq.s32.totalorder %v1528, %v1597
    %vm1658 = vcmp.eq.s32.totalorder %v1529, %v1597
    %vm1659 = vcmp.eq.s32.totalorder %v1530, %v1597
    %vm1660 = vcmp.eq.s32.totalorder %v1531, %v1597
    %vm1661 = vcmp.eq.s32.totalorder %v1532, %v1597
    %vm1662 = vcmp.eq.s32.totalorder %v1533, %v1597
    %vm1663 = vcmp.eq.s32.totalorder %v1534, %v1597
    %vm1664 = vcmp.eq.s32.totalorder %v1535, %v1597
    %vm1665 = vcmp.eq.s32.totalorder %v1536, %v1597
    %vm1666 = vcmp.eq.s32.totalorder %v1521, %v1601
    %vm1667 = vcmp.eq.s32.totalorder %v1522, %v1601
    %vm1668 = vcmp.eq.s32.totalorder %v1523, %v1601
    %vm1669 = vcmp.eq.s32.totalorder %v1524, %v1601
    %vm1670 = vcmp.eq.s32.totalorder %v1525, %v1601
    %vm1671 = vcmp.eq.s32.totalorder %v1526, %v1601
    %vm1672 = vcmp.eq.s32.totalorder %v1527, %v1601
    %vm1673 = vcmp.eq.s32.totalorder %v1528, %v1601
    %vm1674 = vcmp.eq.s32.totalorder %v1529, %v1601
    %vm1675 = vcmp.eq.s32.totalorder %v1530, %v1601
    %vm1676 = vcmp.eq.s32.totalorder %v1531, %v1601
    %vm1677 = vcmp.eq.s32.totalorder %v1532, %v1601
    %vm1678 = vcmp.eq.s32.totalorder %v1533, %v1601
    %vm1679 = vcmp.eq.s32.totalorder %v1534, %v1601
    %vm1680 = vcmp.eq.s32.totalorder %v1535, %v1601
    %vm1681 = vcmp.eq.s32.totalorder %v1536, %v1601
    %vm1682 = vcmp.eq.s32.totalorder %v1521, %v1605
    %vm1683 = vcmp.eq.s32.totalorder %v1522, %v1605
    %vm1684 = vcmp.eq.s32.totalorder %v1523, %v1605
    %vm1685 = vcmp.eq.s32.totalorder %v1524, %v1605
    %vm1686 = vcmp.eq.s32.totalorder %v1525, %v1605
    %vm1687 = vcmp.eq.s32.totalorder %v1526, %v1605
    %vm1688 = vcmp.eq.s32.totalorder %v1527, %v1605
    %vm1689 = vcmp.eq.s32.totalorder %v1528, %v1605
    %vm1690 = vcmp.eq.s32.totalorder %v1529, %v1605
    %vm1691 = vcmp.eq.s32.totalorder %v1530, %v1605
    %vm1692 = vcmp.eq.s32.totalorder %v1531, %v1605
    %vm1693 = vcmp.eq.s32.totalorder %v1532, %v1605
    %vm1694 = vcmp.eq.s32.totalorder %v1533, %v1605
    %vm1695 = vcmp.eq.s32.totalorder %v1534, %v1605
    %vm1696 = vcmp.eq.s32.totalorder %v1535, %v1605
    %vm1697 = vcmp.eq.s32.totalorder %v1536, %v1605
    %vm1698 = vcmp.eq.s32.totalorder %v1521, %v1609
    %vm1699 = vcmp.eq.s32.totalorder %v1522, %v1609
    %vm1700 = vcmp.eq.s32.totalorder %v1523, %v1609
    %vm1701 = vcmp.eq.s32.totalorder %v1524, %v1609
    %vm1702 = vcmp.eq.s32.totalorder %v1525, %v1609
    %vm1703 = vcmp.eq.s32.totalorder %v1526, %v1609
    %vm1704 = vcmp.eq.s32.totalorder %v1527, %v1609
    %vm1705 = vcmp.eq.s32.totalorder %v1528, %v1609
    %vm1706 = vcmp.eq.s32.totalorder %v1529, %v1609
    %vm1707 = vcmp.eq.s32.totalorder %v1530, %v1609
    %vm1708 = vcmp.eq.s32.totalorder %v1531, %v1609
    %vm1709 = vcmp.eq.s32.totalorder %v1532, %v1609
    %vm1710 = vcmp.eq.s32.totalorder %v1533, %v1609
    %vm1711 = vcmp.eq.s32.totalorder %v1534, %v1609
    %vm1712 = vcmp.eq.s32.totalorder %v1535, %v1609
    %vm1713 = vcmp.eq.s32.totalorder %v1536, %v1609
    %vm1714 = vcmp.eq.s32.totalorder %v1521, %v1613
    %vm1715 = vcmp.eq.s32.totalorder %v1522, %v1613
    %vm1716 = vcmp.eq.s32.totalorder %v1523, %v1613
    %vm1717 = vcmp.eq.s32.totalorder %v1524, %v1613
    %vm1718 = vcmp.eq.s32.totalorder %v1525, %v1613
    %vm1719 = vcmp.eq.s32.totalorder %v1526, %v1613
    %vm1720 = vcmp.eq.s32.totalorder %v1527, %v1613
    %vm1721 = vcmp.eq.s32.totalorder %v1528, %v1613
    %vm1722 = vcmp.eq.s32.totalorder %v1529, %v1613
    %vm1723 = vcmp.eq.s32.totalorder %v1530, %v1613
    %vm1724 = vcmp.eq.s32.totalorder %v1531, %v1613
    %vm1725 = vcmp.eq.s32.totalorder %v1532, %v1613
    %vm1726 = vcmp.eq.s32.totalorder %v1533, %v1613
    %vm1727 = vcmp.eq.s32.totalorder %v1534, %v1613
    %vm1728 = vcmp.eq.s32.totalorder %v1535, %v1613
    %vm1729 = vcmp.eq.s32.totalorder %v1536, %v1613
    %vm1730 = vcmp.eq.s32.totalorder %v1521, %v1617
    %vm1731 = vcmp.eq.s32.totalorder %v1522, %v1617
    %vm1732 = vcmp.eq.s32.totalorder %v1523, %v1617
    %vm1733 = vcmp.eq.s32.totalorder %v1524, %v1617
    %vm1734 = vcmp.eq.s32.totalorder %v1525, %v1617
    %vm1735 = vcmp.eq.s32.totalorder %v1526, %v1617
    %vm1736 = vcmp.eq.s32.totalorder %v1527, %v1617
    %vm1737 = vcmp.eq.s32.totalorder %v1528, %v1617
    %vm1738 = vcmp.eq.s32.totalorder %v1529, %v1617
    %vm1739 = vcmp.eq.s32.totalorder %v1530, %v1617
    %vm1740 = vcmp.eq.s32.totalorder %v1531, %v1617
    %vm1741 = vcmp.eq.s32.totalorder %v1532, %v1617
    %vm1742 = vcmp.eq.s32.totalorder %v1533, %v1617
    %vm1743 = vcmp.eq.s32.totalorder %v1534, %v1617
    %vm1744 = vcmp.eq.s32.totalorder %v1535, %v1617
    %vm1745 = vcmp.eq.s32.totalorder %v1536, %v1617
    %v1746 = vsel %vm1618, 1, 0
    %v1747 = vsel %vm1619, 1, 0
    %v1748 = vsel %vm1620, 1, 0
    %v1749 = vsel %vm1621, 1, 0
    %v1750 = vsel %vm1622, 1, 0
    %v1751 = vsel %vm1623, 1, 0
    %v1752 = vsel %vm1624, 1, 0
    %v1753 = vsel %vm1625, 1, 0
    %v1754 = vsel %vm1626, 1, 0
    %v1755 = vsel %vm1627, 1, 0
    %v1756 = vsel %vm1628, 1, 0
    %v1757 = vsel %vm1629, 1, 0
    %v1758 = vsel %vm1630, 1, 0
    %v1759 = vsel %vm1631, 1, 0
    %v1760 = vsel %vm1632, 1, 0
    %v1761 = vsel %vm1633, 1, 0
    %v1762 = vsel %vm1634, 1, 0
    %v1763 = vsel %vm1635, 1, 0
    %v1764 = vsel %vm1636, 1, 0
    %v1765 = vsel %vm1637, 1, 0
    %v1766 = vsel %vm1638, 1, 0
    %v1767 = vsel %vm1639, 1, 0
    %v1768 = vsel %vm1640, 1, 0
    %v1769 = vsel %vm1641, 1, 0
    %v1770 = vsel %vm1642, 1, 0
    %v1771 = vsel %vm1643, 1, 0
    %v1772 = vsel %vm1644, 1, 0
    %v1773 = vsel %vm1645, 1, 0
    %v1774 = vsel %vm1646, 1, 0
    %v1775 = vsel %vm1647, 1, 0
    %v1776 = vsel %vm1648, 1, 0
    %v1777 = vsel %vm1649, 1, 0
    %v1778 = vsel %vm1650, 1, 0
    %v1779 = vsel %vm1651, 1, 0
    %v1780 = vsel %vm1652, 1, 0
    %v1781 = vsel %vm1653, 1, 0
    %v1782 = vsel %vm1654, 1, 0
    %v1783 = vsel %vm1655, 1, 0
    %v1784 = vsel %vm1656, 1, 0
    %v1785 = vsel %vm1657, 1, 0
    %v1786 = vsel %vm1658, 1, 0
    %v1787 = vsel %vm1659, 1, 0
    %v1788 = vsel %vm1660, 1, 0
    %v1789 = vsel %vm1661, 1, 0
    %v1790 = vsel %vm1662, 1, 0
    %v1791 = vsel %vm1663, 1, 0
    %v1792 = vsel %vm1664, 1, 0
    %v1793 = vsel %vm1665, 1, 0
    %v1794 = vsel %vm1666, 1, 0
    %v1795 = vsel %vm1667, 1, 0
    %v1796 = vsel %vm1668, 1, 0
    %v1797 = vsel %vm1669, 1, 0
    %v1798 = vsel %vm1670, 1, 0
    %v1799 = vsel %vm1671, 1, 0
    %v1800 = vsel %vm1672, 1, 0
    %v1801 = vsel %vm1673, 1, 0
    %v1802 = vsel %vm1674, 1, 0
    %v1803 = vsel %vm1675, 1, 0
    %v1804 = vsel %vm1676, 1, 0
    %v1805 = vsel %vm1677, 1, 0
    %v1806 = vsel %vm1678, 1, 0
    %v1807 = vsel %vm1679, 1, 0
    %v1808 = vsel %vm1680, 1, 0
    %v1809 = vsel %vm1681, 1, 0
    %v1810 = vsel %vm1682, 1, 0
    %v1811 = vsel %vm1683, 1, 0
    %v1812 = vsel %vm1684, 1, 0
    %v1813 = vsel %vm1685, 1, 0
    %v1814 = vsel %vm1686, 1, 0
    %v1815 = vsel %vm1687, 1, 0
    %v1816 = vsel %vm1688, 1, 0
    %v1817 = vsel %vm1689, 1, 0
    %v1818 = vsel %vm1690, 1, 0
    %v1819 = vsel %vm1691, 1, 0
    %v1820 = vsel %vm1692, 1, 0
    %v1821 = vsel %vm1693, 1, 0
    %v1822 = vsel %vm1694, 1, 0
    %v1823 = vsel %vm1695, 1, 0
    %v1824 = vsel %vm1696, 1, 0
    %v1825 = vsel %vm1697, 1, 0
    %v1826 = vsel %vm1698, 1, 0
    %v1827 = vsel %vm1699, 1, 0
    %v1828 = vsel %vm1700, 1, 0
    %v1829 = vsel %vm1701, 1, 0
    %v1830 = vsel %vm1702, 1, 0
    %v1831 = vsel %vm1703, 1, 0
    %v1832 = vsel %vm1704, 1, 0
    %v1833 = vsel %vm1705, 1, 0
    %v1834 = vsel %vm1706, 1, 0
    %v1835 = vsel %vm1707, 1, 0
    %v1836 = vsel %vm1708, 1, 0
    %v1837 = vsel %vm1709, 1, 0
    %v1838 = vsel %vm1710, 1, 0
    %v1839 = vsel %vm1711, 1, 0
    %v1840 = vsel %vm1712, 1, 0
    %v1841 = vsel %vm1713, 1, 0
    %v1842 = vsel %vm1714, 1, 0
    %v1843 = vsel %vm1715, 1, 0
    %v1844 = vsel %vm1716, 1, 0
    %v1845 = vsel %vm1717, 1, 0
    %v1846 = vsel %vm1718, 1, 0
    %v1847 = vsel %vm1719, 1, 0
    %v1848 = vsel %vm1720, 1, 0
    %v1849 = vsel %vm1721, 1, 0
    %v1850 = vsel %vm1722, 1, 0
    %v1851 = vsel %vm1723, 1, 0
    %v1852 = vsel %vm1724, 1, 0
    %v1853 = vsel %vm1725, 1, 0
    %v1854 = vsel %vm1726, 1, 0
    %v1855 = vsel %vm1727, 1, 0
    %v1856 = vsel %vm1728, 1, 0
    %v1857 = vsel %vm1729, 1, 0
    %v1858 = vsel %vm1730, 1, 0
    %v1859 = vsel %vm1731, 1, 0
    %v1860 = vsel %vm1732, 1, 0
    %v1861 = vsel %vm1733, 1, 0
    %v1862 = vsel %vm1734, 1, 0
    %v1863 = vsel %vm1735, 1, 0
    %v1864 = vsel %vm1736, 1, 0
    %v1865 = vsel %vm1737, 1, 0
    %v1866 = vsel %vm1738, 1, 0
    %v1867 = vsel %vm1739, 1, 0
    %v1868 = vsel %vm1740, 1, 0
    %v1869 = vsel %vm1741, 1, 0
    %v1870 = vsel %vm1742, 1, 0
    %v1871 = vsel %vm1743, 1, 0
    %v1872 = vsel %vm1744, 1, 0
    %v1873 = vsel %vm1745, 1, 0
    %v1874 = vcvt.s32.f32 %v1746
    %v1875 = vcvt.s32.f32 %v1747
    %v1876 = vcvt.s32.f32 %v1748
    %v1877 = vcvt.s32.f32 %v1749
    %v1878 = vcvt.s32.f32 %v1750
    %v1879 = vcvt.s32.f32 %v1751
    %v1880 = vcvt.s32.f32 %v1752
    %v1881 = vcvt.s32.f32 %v1753
    %v1882 = vcvt.s32.f32 %v1754
    %v1883 = vcvt.s32.f32 %v1755
    %v1884 = vcvt.s32.f32 %v1756
    %v1885 = vcvt.s32.f32 %v1757
    %v1886 = vcvt.s32.f32 %v1758
    %v1887 = vcvt.s32.f32 %v1759
    %v1888 = vcvt.s32.f32 %v1760
    %v1889 = vcvt.s32.f32 %v1761
    %v1890 = vcvt.s32.f32 %v1762
    %v1891 = vcvt.s32.f32 %v1763
    %v1892 = vcvt.s32.f32 %v1764
    %v1893 = vcvt.s32.f32 %v1765
    %v1894 = vcvt.s32.f32 %v1766
    %v1895 = vcvt.s32.f32 %v1767
    %v1896 = vcvt.s32.f32 %v1768
    %v1897 = vcvt.s32.f32 %v1769
    %v1898 = vcvt.s32.f32 %v1770
    %v1899 = vcvt.s32.f32 %v1771
    %v1900 = vcvt.s32.f32 %v1772
    %v1901 = vcvt.s32.f32 %v1773
    %v1902 = vcvt.s32.f32 %v1774
    %v1903 = vcvt.s32.f32 %v1775
    %v1904 = vcvt.s32.f32 %v1776
    %v1905 = vcvt.s32.f32 %v1777
    %v1906 = vcvt.s32.f32 %v1778
    %v1907 = vcvt.s32.f32 %v1779
    %v1908 = vcvt.s32.f32 %v1780
    %v1909 = vcvt.s32.f32 %v1781
    %v1910 = vcvt.s32.f32 %v1782
    %v1911 = vcvt.s32.f32 %v1783
    %v1912 = vcvt.s32.f32 %v1784
    %v1913 = vcvt.s32.f32 %v1785
    %v1914 = vcvt.s32.f32 %v1786
    %v1915 = vcvt.s32.f32 %v1787
    %v1916 = vcvt.s32.f32 %v1788
    %v1917 = vcvt.s32.f32 %v1789
    %v1918 = vcvt.s32.f32 %v1790
    %v1919 = vcvt.s32.f32 %v1791
    %v1920 = vcvt.s32.f32 %v1792
    %v1921 = vcvt.s32.f32 %v1793
    %v1922 = vcvt.s32.f32 %v1794
    %v1923 = vcvt.s32.f32 %v1795
    %v1924 = vcvt.s32.f32 %v1796
    %v1925 = vcvt.s32.f32 %v1797
    %v1926 = vcvt.s32.f32 %v1798
    %v1927 = vcvt.s32.f32 %v1799
    %v1928 = vcvt.s32.f32 %v1800
    %v1929 = vcvt.s32.f32 %v1801
    %v1930 = vcvt.s32.f32 %v1802
    %v1931 = vcvt.s32.f32 %v1803
    %v1932 = vcvt.s32.f32 %v1804
    %v1933 = vcvt.s32.f32 %v1805
    %v1934 = vcvt.s32.f32 %v1806
    %v1935 = vcvt.s32.f32 %v1807
    %v1936 = vcvt.s32.f32 %v1808
    %v1937 = vcvt.s32.f32 %v1809
    %v1938 = vcvt.s32.f32 %v1810
    %v1939 = vcvt.s32.f32 %v1811
    %v1940 = vcvt.s32.f32 %v1812
    %v1941 = vcvt.s32.f32 %v1813
    %v1942 = vcvt.s32.f32 %v1814
    %v1943 = vcvt.s32.f32 %v1815
    %v1944 = vcvt.s32.f32 %v1816
    %v1945 = vcvt.s32.f32 %v1817
    %v1946 = vcvt.s32.f32 %v1818
    %v1947 = vcvt.s32.f32 %v1819
    %v1948 = vcvt.s32.f32 %v1820
    %v1949 = vcvt.s32.f32 %v1821
    %v1950 = vcvt.s32.f32 %v1822
    %v1951 = vcvt.s32.f32 %v1823
    %v1952 = vcvt.s32.f32 %v1824
    %v1953 = vcvt.s32.f32 %v1825
    %v1954 = vcvt.s32.f32 %v1826
    %v1955 = vcvt.s32.f32 %v1827
    %v1956 = vcvt.s32.f32 %v1828
    %v1957 = vcvt.s32.f32 %v1829
    %v1958 = vcvt.s32.f32 %v1830
    %v1959 = vcvt.s32.f32 %v1831
    %v1960 = vcvt.s32.f32 %v1832
    %v1961 = vcvt.s32.f32 %v1833
    %v1962 = vcvt.s32.f32 %v1834
    %v1963 = vcvt.s32.f32 %v1835
    %v1964 = vcvt.s32.f32 %v1836
    %v1965 = vcvt.s32.f32 %v1837
    %v1966 = vcvt.s32.f32 %v1838
    %v1967 = vcvt.s32.f32 %v1839
    %v1968 = vcvt.s32.f32 %v1840
    %v1969 = vcvt.s32.f32 %v1841
    %v1970 = vcvt.s32.f32 %v1842
    %v1971 = vcvt.s32.f32 %v1843
    %v1972 = vcvt.s32.f32 %v1844
    %v1973 = vcvt.s32.f32 %v1845
    %v1974 = vcvt.s32.f32 %v1846
    %v1975 = vcvt.s32.f32 %v1847
    %v1976 = vcvt.s32.f32 %v1848
    %v1977 = vcvt.s32.f32 %v1849
    %v1978 = vcvt.s32.f32 %v1850
    %v1979 = vcvt.s32.f32 %v1851
    %v1980 = vcvt.s32.f32 %v1852
    %v1981 = vcvt.s32.f32 %v1853
    %v1982 = vcvt.s32.f32 %v1854
    %v1983 = vcvt.s32.f32 %v1855
    %v1984 = vcvt.s32.f32 %v1856
    %v1985 = vcvt.s32.f32 %v1857
    %v1986 = vcvt.s32.f32 %v1858
    %v1987 = vcvt.s32.f32 %v1859
    %v1988 = vcvt.s32.f32 %v1860
    %v1989 = vcvt.s32.f32 %v1861
    %v1990 = vcvt.s32.f32 %v1862
    %v1991 = vcvt.s32.f32 %v1863
    %v1992 = vcvt.s32.f32 %v1864
    %v1993 = vcvt.s32.f32 %v1865
    %v1994 = vcvt.s32.f32 %v1866
    %v1995 = vcvt.s32.f32 %v1867
    %v1996 = vcvt.s32.f32 %v1868
    %v1997 = vcvt.s32.f32 %v1869
    %v1998 = vcvt.s32.f32 %v1870
    %v1999 = vcvt.s32.f32 %v1871
    %v2000 = vcvt.s32.f32 %v1872
    %v2001 = vcvt.s32.f32 %v1873
    %2002 = vmatprep.subr.mxu0 0.0
    %2003 = vmatpush1.msra.mxu0 %v1889
    %2004 = vmatprep.subr.mxu0 0.0
    %2005 = vmatpush1.msra.mxu0 %v1888
    %2006 = vmatprep.subr.mxu0 0.0
    %2007 = vmatpush1.msra.mxu0 %v1887
    %2008 = vmatprep.subr.mxu0 0.0
    %2009 = vmatpush1.msra.mxu0 %v1886
    %2010 = vmatprep.subr.mxu0 0.0
    %2011 = vmatpush1.msra.mxu0 %v1885
    %2012 = vmatprep.subr.mxu0 0.0
    %2013 = vmatpush1.msra.mxu0 %v1884
    %2014 = vmatprep.subr.mxu0 0.0
    %2015 = vmatpush1.msra.mxu0 %v1883
    %2016 = vmatprep.subr.mxu0 0.0
    %2017 = vmatpush1.msra.mxu0 %v1882
    %2018 = vmatprep.subr.mxu0 0.0
    %2019 = vmatpush1.msra.mxu0 %v1881
    %2020 = vmatprep.subr.mxu0 0.0
    %2021 = vmatpush1.msra.mxu0 %v1880
    %2022 = vmatprep.subr.mxu0 0.0
    %2023 = vmatpush1.msra.mxu0 %v1879
    %2024 = vmatprep.subr.mxu0 0.0
    %2025 = vmatpush1.msra.mxu0 %v1878
    %2026 = vmatprep.subr.mxu0 0.0
    %2027 = vmatpush1.msra.mxu0 %v1877
    %2028 = vmatprep.subr.mxu0 0.0
    %2029 = vmatpush1.msra.mxu0 %v1876
    %2030 = vmatprep.subr.mxu0 0.0
    %2031 = vmatpush1.msra.mxu0 %v1875
    %2032 = vmatprep.subr.mxu0 0.0
    %2033 = vmatpush1.msra.mxu0 %v1874
    %2034 = vmatprep.subr.mxu0 0.0
    %2035 = vmatpush2.msra.mxu0 0.0
    %2036 = vmatprep.subr.mxu0 0.0
    %2037 = vmatpush2.msra.mxu0 0.0
    %2038 = vmatprep.subr.mxu0 0.0
    %2039 = vmatpush2.msra.mxu0 0.0
    %2040 = vmatprep.subr.mxu0 0.0
    %2041 = vmatpush2.msra.mxu0 0.0
    %2042 = vmatprep.subr.mxu0 0.0
    %2043 = vmatpush2.msra.mxu0 0.0
    %2044 = vmatprep.subr.mxu0 0.0
    %2045 = vmatpush2.msra.mxu0 0.0
    %2046 = vmatprep.subr.mxu0 0.0
    %2047 = vmatpush2.msra.mxu0 0.0
    %2048 = vmatprep.subr.mxu0 0.0
    %2049 = vmatpush2.msra.mxu0 0.0
    %2050 = vmatprep.subr.mxu0 0.0
    %2051 = vmatpush2.msra.mxu0 0.0
    %2052 = vmatprep.subr.mxu0 0.0
    %2053 = vmatpush2.msra.mxu0 0.0
    %2054 = vmatprep.subr.mxu0 0.0
    %2055 = vmatpush2.msra.mxu0 0.0
    %2056 = vmatprep.subr.mxu0 0.0
    %2057 = vmatpush2.msra.mxu0 0.0
    %2058 = vmatprep.subr.mxu0 0.0
    %2059 = vmatpush2.msra.mxu0 0.0
    %2060 = vmatprep.subr.mxu0 0.0
    %2061 = vmatpush2.msra.mxu0 0.0
    %2062 = vmatprep.subr.mxu0 0.0
    %2063 = vmatpush2.msra.mxu0 0.0
    %2064 = vmatprep.subr.mxu0 0.0
    %2065 = vmatpush2.msra.mxu0 0.0
    %2066 = vmatprep.mubr.f32.mxu0 0.0
    %2067 = vmatmul.mubr.f32.gmra.mxu0 %v1503
    %v2068 = vpop.f32.mrf.mxu0
    %v2069 = vadd.f32 0.0, %v2068
    %v2070 = vpop.f32.mrf.mxu0
    %2071 = vmatprep.mubr.f32.mxu0 0.0
    %2072 = vmatmul.mubr.f32.gmra.mxu0 %v1504
    %v2073 = vpop.f32.mrf.mxu0
    %v2074 = vadd.f32 0.0, %v2073
    %v2075 = vpop.f32.mrf.mxu0
    %2076 = vdwg.mxu0
    %2077 = vmatprep.subr.mxu0 0.0
    %2078 = vmatpush1.msra.mxu0 %v1905
    %2079 = vmatprep.subr.mxu0 0.0
    %2080 = vmatpush1.msra.mxu0 %v1904
    %2081 = vmatprep.subr.mxu0 0.0
    %2082 = vmatpush1.msra.mxu0 %v1903
    %2083 = vmatprep.subr.mxu0 0.0
    %2084 = vmatpush1.msra.mxu0 %v1902
    %2085 = vmatprep.subr.mxu0 0.0
    %2086 = vmatpush1.msra.mxu0 %v1901
    %2087 = vmatprep.subr.mxu0 0.0
    %2088 = vmatpush1.msra.mxu0 %v1900
    %2089 = vmatprep.subr.mxu0 0.0
    %2090 = vmatpush1.msra.mxu0 %v1899
    %2091 = vmatprep.subr.mxu0 0.0
    %2092 = vmatpush1.msra.mxu0 %v1898
    %2093 = vmatprep.subr.mxu0 0.0
    %2094 = vmatpush1.msra.mxu0 %v1897
    %2095 = vmatprep.subr.mxu0 0.0
    %2096 = vmatpush1.msra.mxu0 %v1896
    %2097 = vmatprep.subr.mxu0 0.0
    %2098 = vmatpush1.msra.mxu0 %v1895
    %2099 = vmatprep.subr.mxu0 0.0
    %2100 = vmatpush1.msra.mxu0 %v1894
    %2101 = vmatprep.subr.mxu0 0.0
    %2102 = vmatpush1.msra.mxu0 %v1893
    %2103 = vmatprep.subr.mxu0 0.0
    %2104 = vmatpush1.msra.mxu0 %v1892
    %2105 = vmatprep.subr.mxu0 0.0
    %2106 = vmatpush1.msra.mxu0 %v1891
    %2107 = vmatprep.subr.mxu0 0.0
    %2108 = vmatpush1.msra.mxu0 %v1890
    %2109 = vmatprep.subr.mxu0 0.0
    %2110 = vmatpush2.msra.mxu0 0.0
    %2111 = vmatprep.subr.mxu0 0.0
    %2112 = vmatpush2.msra.mxu0 0.0
    %2113 = vmatprep.subr.mxu0 0.0
    %2114 = vmatpush2.msra.mxu0 0.0
    %2115 = vmatprep.subr.mxu0 0.0
    %2116 = vmatpush2.msra.mxu0 0.0
    %2117 = vmatprep.subr.mxu0 0.0
    %2118 = vmatpush2.msra.mxu0 0.0
    %2119 = vmatprep.subr.mxu0 0.0
    %2120 = vmatpush2.msra.mxu0 0.0
    %2121 = vmatprep.subr.mxu0 0.0
    %2122 = vmatpush2.msra.mxu0 0.0
    %2123 = vmatprep.subr.mxu0 0.0
    %2124 = vmatpush2.msra.mxu0 0.0
    %2125 = vmatprep.subr.mxu0 0.0
    %2126 = vmatpush2.msra.mxu0 0.0
    %2127 = vmatprep.subr.mxu0 0.0
    %2128 = vmatpush2.msra.mxu0 0.0
    %2129 = vmatprep.subr.mxu0 0.0
    %2130 = vmatpush2.msra.mxu0 0.0
    %2131 = vmatprep.subr.mxu0 0.0
    %2132 = vmatpush2.msra.mxu0 0.0
    %2133 = vmatprep.subr.mxu0 0.0
    %2134 = vmatpush2.msra.mxu0 0.0
    %2135 = vmatprep.subr.mxu0 0.0
    %2136 = vmatpush2.msra.mxu0 0.0
    %2137 = vmatprep.subr.mxu0 0.0
    %2138 = vmatpush2.msra.mxu0 0.0
    %2139 = vmatprep.subr.mxu0 0.0
    %2140 = vmatpush2.msra.mxu0 0.0
    %2141 = vmatprep.mubr.f32.mxu0 0.0
    %2142 = vmatmul.mubr.f32.gmra.mxu0 %v1505
    %v2143 = vpop.f32.mrf.mxu0
    %v2144 = vadd.f32 0.0, %v2143
    %v2145 = vpop.f32.mrf.mxu0
    %2146 = vmatprep.mubr.f32.mxu0 0.0
    %2147 = vmatmul.mubr.f32.gmra.mxu0 %v1506
    %v2148 = vpop.f32.mrf.mxu0
    %v2149 = vadd.f32 0.0, %v2148
    %v2150 = vpop.f32.mrf.mxu0
    %2151 = vdwg.mxu0
    %2152 = vmatprep.subr.mxu0 0.0
    %2153 = vmatpush1.msra.mxu0 %v1921
    %2154 = vmatprep.subr.mxu0 0.0
    %2155 = vmatpush1.msra.mxu0 %v1920
    %2156 = vmatprep.subr.mxu0 0.0
    %2157 = vmatpush1.msra.mxu0 %v1919
    %2158 = vmatprep.subr.mxu0 0.0
    %2159 = vmatpush1.msra.mxu0 %v1918
    %2160 = vmatprep.subr.mxu0 0.0
    %2161 = vmatpush1.msra.mxu0 %v1917
    %2162 = vmatprep.subr.mxu0 0.0
    %2163 = vmatpush1.msra.mxu0 %v1916
    %2164 = vmatprep.subr.mxu0 0.0
    %2165 = vmatpush1.msra.mxu0 %v1915
    %2166 = vmatprep.subr.mxu0 0.0
    %2167 = vmatpush1.msra.mxu0 %v1914
    %2168 = vmatprep.subr.mxu0 0.0
    %2169 = vmatpush1.msra.mxu0 %v1913
    %2170 = vmatprep.subr.mxu0 0.0
    %2171 = vmatpush1.msra.mxu0 %v1912
    %2172 = vmatprep.subr.mxu0 0.0
    %2173 = vmatpush1.msra.mxu0 %v1911
    %2174 = vmatprep.subr.mxu0 0.0
    %2175 = vmatpush1.msra.mxu0 %v1910
    %2176 = vmatprep.subr.mxu0 0.0
    %2177 = vmatpush1.msra.mxu0 %v1909
    %2178 = vmatprep.subr.mxu0 0.0
    %2179 = vmatpush1.msra.mxu0 %v1908
    %2180 = vmatprep.subr.mxu0 0.0
    %2181 = vmatpush1.msra.mxu0 %v1907
    %2182 = vmatprep.subr.mxu0 0.0
    %2183 = vmatpush1.msra.mxu0 %v1906
    %2184 = vmatprep.subr.mxu0 0.0
    %2185 = vmatpush2.msra.mxu0 0.0
    %2186 = vmatprep.subr.mxu0 0.0
    %2187 = vmatpush2.msra.mxu0 0.0
    %2188 = vmatprep.subr.mxu0 0.0
    %2189 = vmatpush2.msra.mxu0 0.0
    %2190 = vmatprep.subr.mxu0 0.0
    %2191 = vmatpush2.msra.mxu0 0.0
    %2192 = vmatprep.subr.mxu0 0.0
    %2193 = vmatpush2.msra.mxu0 0.0
    %2194 = vmatprep.subr.mxu0 0.0
    %2195 = vmatpush2.msra.mxu0 0.0
    %2196 = vmatprep.subr.mxu0 0.0
    %2197 = vmatpush2.msra.mxu0 0.0
    %2198 = vmatprep.subr.mxu0 0.0
    %2199 = vmatpush2.msra.mxu0 0.0
    %2200 = vmatprep.subr.mxu0 0.0
    %2201 = vmatpush2.msra.mxu0 0.0
    %2202 = vmatprep.subr.mxu0 0.0
    %2203 = vmatpush2.msra.mxu0 0.0
    %2204 = vmatprep.subr.mxu0 0.0
    %2205 = vmatpush2.msra.mxu0 0.0
    %2206 = vmatprep.subr.mxu0 0.0
    %2207 = vmatpush2.msra.mxu0 0.0
    %2208 = vmatprep.subr.mxu0 0.0
    %2209 = vmatpush2.msra.mxu0 0.0
    %2210 = vmatprep.subr.mxu0 0.0
    %2211 = vmatpush2.msra.mxu0 0.0
    %2212 = vmatprep.subr.mxu0 0.0
    %2213 = vmatpush2.msra.mxu0 0.0
    %2214 = vmatprep.subr.mxu0 0.0
    %2215 = vmatpush2.msra.mxu0 0.0
    %2216 = vmatprep.mubr.f32.mxu0 0.0
    %2217 = vmatmul.mubr.f32.gmra.mxu0 %v1507
    %v2218 = vpop.f32.mrf.mxu0
    %v2219 = vadd.f32 0.0, %v2218
    %v2220 = vpop.f32.mrf.mxu0
    %2221 = vmatprep.mubr.f32.mxu0 0.0
    %2222 = vmatmul.mubr.f32.gmra.mxu0 %v1508
    %v2223 = vpop.f32.mrf.mxu0
    %v2224 = vadd.f32 0.0, %v2223
    %v2225 = vpop.f32.mrf.mxu0
    %2226 = vdwg.mxu0
    %2227 = vmatprep.subr.mxu0 0.0
    %2228 = vmatpush1.msra.mxu0 %v1937
    %2229 = vmatprep.subr.mxu0 0.0
    %2230 = vmatpush1.msra.mxu0 %v1936
    %2231 = vmatprep.subr.mxu0 0.0
    %2232 = vmatpush1.msra.mxu0 %v1935
    %2233 = vmatprep.subr.mxu0 0.0
    %2234 = vmatpush1.msra.mxu0 %v1934
    %2235 = vmatprep.subr.mxu0 0.0
    %2236 = vmatpush1.msra.mxu0 %v1933
    %2237 = vmatprep.subr.mxu0 0.0
    %2238 = vmatpush1.msra.mxu0 %v1932
    %2239 = vmatprep.subr.mxu0 0.0
    %2240 = vmatpush1.msra.mxu0 %v1931
    %2241 = vmatprep.subr.mxu0 0.0
    %2242 = vmatpush1.msra.mxu0 %v1930
    %2243 = vmatprep.subr.mxu0 0.0
    %2244 = vmatpush1.msra.mxu0 %v1929
    %2245 = vmatprep.subr.mxu0 0.0
    %2246 = vmatpush1.msra.mxu0 %v1928
    %2247 = vmatprep.subr.mxu0 0.0
    %2248 = vmatpush1.msra.mxu0 %v1927
    %2249 = vmatprep.subr.mxu0 0.0
    %2250 = vmatpush1.msra.mxu0 %v1926
    %2251 = vmatprep.subr.mxu0 0.0
    %2252 = vmatpush1.msra.mxu0 %v1925
    %2253 = vmatprep.subr.mxu0 0.0
    %2254 = vmatpush1.msra.mxu0 %v1924
    %2255 = vmatprep.subr.mxu0 0.0
    %2256 = vmatpush1.msra.mxu0 %v1923
    %2257 = vmatprep.subr.mxu0 0.0
    %2258 = vmatpush1.msra.mxu0 %v1922
    %2259 = vmatprep.subr.mxu0 0.0
    %2260 = vmatpush2.msra.mxu0 0.0
    %2261 = vmatprep.subr.mxu0 0.0
    %2262 = vmatpush2.msra.mxu0 0.0
    %2263 = vmatprep.subr.mxu0 0.0
    %2264 = vmatpush2.msra.mxu0 0.0
    %2265 = vmatprep.subr.mxu0 0.0
    %2266 = vmatpush2.msra.mxu0 0.0
    %2267 = vmatprep.subr.mxu0 0.0
    %2268 = vmatpush2.msra.mxu0 0.0
    %2269 = vmatprep.subr.mxu0 0.0
    %2270 = vmatpush2.msra.mxu0 0.0
    %2271 = vmatprep.subr.mxu0 0.0
    %2272 = vmatpush2.msra.mxu0 0.0
    %2273 = vmatprep.subr.mxu0 0.0
    %2274 = vmatpush2.msra.mxu0 0.0
    %2275 = vmatprep.subr.mxu0 0.0
    %2276 = vmatpush2.msra.mxu0 0.0
    %2277 = vmatprep.subr.mxu0 0.0
    %2278 = vmatpush2.msra.mxu0 0.0
    %2279 = vmatprep.subr.mxu0 0.0
    %2280 = vmatpush2.msra.mxu0 0.0
    %2281 = vmatprep.subr.mxu0 0.0
    %2282 = vmatpush2.msra.mxu0 0.0
    %2283 = vmatprep.subr.mxu0 0.0
    %2284 = vmatpush2.msra.mxu0 0.0
    %2285 = vmatprep.subr.mxu0 0.0
    %2286 = vmatpush2.msra.mxu0 0.0
    %2287 = vmatprep.subr.mxu0 0.0
    %2288 = vmatpush2.msra.mxu0 0.0
    %2289 = vmatprep.subr.mxu0 0.0
    %2290 = vmatpush2.msra.mxu0 0.0
    %2291 = vmatprep.mubr.f32.mxu0 0.0
    %2292 = vmatmul.mubr.f32.gmra.mxu0 %v1509
    %v2293 = vpop.f32.mrf.mxu0
    %v2294 = vadd.f32 0.0, %v2293
    %v2295 = vpop.f32.mrf.mxu0
    %2296 = vmatprep.mubr.f32.mxu0 0.0
    %2297 = vmatmul.mubr.f32.gmra.mxu0 %v1510
    %v2298 = vpop.f32.mrf.mxu0
    %v2299 = vadd.f32 0.0, %v2298
    %v2300 = vpop.f32.mrf.mxu0
    %2301 = vdwg.mxu0
    %2302 = vmatprep.subr.mxu0 0.0
    %2303 = vmatpush1.msra.mxu0 %v1953
    %2304 = vmatprep.subr.mxu0 0.0
    %2305 = vmatpush1.msra.mxu0 %v1952
    %2306 = vmatprep.subr.mxu0 0.0
    %2307 = vmatpush1.msra.mxu0 %v1951
    %2308 = vmatprep.subr.mxu0 0.0
    %2309 = vmatpush1.msra.mxu0 %v1950
    %2310 = vmatprep.subr.mxu0 0.0
    %2311 = vmatpush1.msra.mxu0 %v1949
    %2312 = vmatprep.subr.mxu0 0.0
    %2313 = vmatpush1.msra.mxu0 %v1948
    %2314 = vmatprep.subr.mxu0 0.0
    %2315 = vmatpush1.msra.mxu0 %v1947
    %2316 = vmatprep.subr.mxu0 0.0
    %2317 = vmatpush1.msra.mxu0 %v1946
    %2318 = vmatprep.subr.mxu0 0.0
    %2319 = vmatpush1.msra.mxu0 %v1945
    %2320 = vmatprep.subr.mxu0 0.0
    %2321 = vmatpush1.msra.mxu0 %v1944
    %2322 = vmatprep.subr.mxu0 0.0
    %2323 = vmatpush1.msra.mxu0 %v1943
    %2324 = vmatprep.subr.mxu0 0.0
    %2325 = vmatpush1.msra.mxu0 %v1942
    %2326 = vmatprep.subr.mxu0 0.0
    %2327 = vmatpush1.msra.mxu0 %v1941
    %2328 = vmatprep.subr.mxu0 0.0
    %2329 = vmatpush1.msra.mxu0 %v1940
    %2330 = vmatprep.subr.mxu0 0.0
    %2331 = vmatpush1.msra.mxu0 %v1939
    %2332 = vmatprep.subr.mxu0 0.0
    %2333 = vmatpush1.msra.mxu0 %v1938
    %2334 = vmatprep.subr.mxu0 0.0
    %2335 = vmatpush2.msra.mxu0 0.0
    %2336 = vmatprep.subr.mxu0 0.0
    %2337 = vmatpush2.msra.mxu0 0.0
    %2338 = vmatprep.subr.mxu0 0.0
    %2339 = vmatpush2.msra.mxu0 0.0
    %2340 = vmatprep.subr.mxu0 0.0
    %2341 = vmatpush2.msra.mxu0 0.0
    %2342 = vmatprep.subr.mxu0 0.0
    %2343 = vmatpush2.msra.mxu0 0.0
    %2344 = vmatprep.subr.mxu0 0.0
    %2345 = vmatpush2.msra.mxu0 0.0
    %2346 = vmatprep.subr.mxu0 0.0
    %2347 = vmatpush2.msra.mxu0 0.0
    %2348 = vmatprep.subr.mxu0 0.0
    %2349 = vmatpush2.msra.mxu0 0.0
    %2350 = vmatprep.subr.mxu0 0.0
    %2351 = vmatpush2.msra.mxu0 0.0
    %2352 = vmatprep.subr.mxu0 0.0
    %2353 = vmatpush2.msra.mxu0 0.0
    %2354 = vmatprep.subr.mxu0 0.0
    %2355 = vmatpush2.msra.mxu0 0.0
    %2356 = vmatprep.subr.mxu0 0.0
    %2357 = vmatpush2.msra.mxu0 0.0
    %2358 = vmatprep.subr.mxu0 0.0
    %2359 = vmatpush2.msra.mxu0 0.0
    %2360 = vmatprep.subr.mxu0 0.0
    %2361 = vmatpush2.msra.mxu0 0.0
    %2362 = vmatprep.subr.mxu0 0.0
    %2363 = vmatpush2.msra.mxu0 0.0
    %2364 = vmatprep.subr.mxu0 0.0
    %2365 = vmatpush2.msra.mxu0 0.0
    %2366 = vmatprep.mubr.f32.mxu0 0.0
    %2367 = vmatmul.mubr.f32.gmra.mxu0 %v1511
    %v2368 = vpop.f32.mrf.mxu0
    %v2369 = vadd.f32 0.0, %v2368
    %v2370 = vpop.f32.mrf.mxu0
    %2371 = vmatprep.mubr.f32.mxu0 0.0
    %2372 = vmatmul.mubr.f32.gmra.mxu0 %v1512
    %v2373 = vpop.f32.mrf.mxu0
    %v2374 = vadd.f32 0.0, %v2373
    %v2375 = vpop.f32.mrf.mxu0
    %2376 = vdwg.mxu0
    %2377 = vmatprep.subr.mxu0 0.0
    %2378 = vmatpush1.msra.mxu0 %v1969
    %2379 = vmatprep.subr.mxu0 0.0
    %2380 = vmatpush1.msra.mxu0 %v1968
    %2381 = vmatprep.subr.mxu0 0.0
    %2382 = vmatpush1.msra.mxu0 %v1967
    %2383 = vmatprep.subr.mxu0 0.0
    %2384 = vmatpush1.msra.mxu0 %v1966
    %2385 = vmatprep.subr.mxu0 0.0
    %2386 = vmatpush1.msra.mxu0 %v1965
    %2387 = vmatprep.subr.mxu0 0.0
    %2388 = vmatpush1.msra.mxu0 %v1964
    %2389 = vmatprep.subr.mxu0 0.0
    %2390 = vmatpush1.msra.mxu0 %v1963
    %2391 = vmatprep.subr.mxu0 0.0
    %2392 = vmatpush1.msra.mxu0 %v1962
    %2393 = vmatprep.subr.mxu0 0.0
    %2394 = vmatpush1.msra.mxu0 %v1961
    %2395 = vmatprep.subr.mxu0 0.0
    %2396 = vmatpush1.msra.mxu0 %v1960
    %2397 = vmatprep.subr.mxu0 0.0
    %2398 = vmatpush1.msra.mxu0 %v1959
    %2399 = vmatprep.subr.mxu0 0.0
    %2400 = vmatpush1.msra.mxu0 %v1958
    %2401 = vmatprep.subr.mxu0 0.0
    %2402 = vmatpush1.msra.mxu0 %v1957
    %2403 = vmatprep.subr.mxu0 0.0
    %2404 = vmatpush1.msra.mxu0 %v1956
    %2405 = vmatprep.subr.mxu0 0.0
    %2406 = vmatpush1.msra.mxu0 %v1955
    %2407 = vmatprep.subr.mxu0 0.0
    %2408 = vmatpush1.msra.mxu0 %v1954
    %2409 = vmatprep.subr.mxu0 0.0
    %2410 = vmatpush2.msra.mxu0 0.0
    %2411 = vmatprep.subr.mxu0 0.0
    %2412 = vmatpush2.msra.mxu0 0.0
    %2413 = vmatprep.subr.mxu0 0.0
    %2414 = vmatpush2.msra.mxu0 0.0
    %2415 = vmatprep.subr.mxu0 0.0
    %2416 = vmatpush2.msra.mxu0 0.0
    %2417 = vmatprep.subr.mxu0 0.0
    %2418 = vmatpush2.msra.mxu0 0.0
    %2419 = vmatprep.subr.mxu0 0.0
    %2420 = vmatpush2.msra.mxu0 0.0
    %2421 = vmatprep.subr.mxu0 0.0
    %2422 = vmatpush2.msra.mxu0 0.0
    %2423 = vmatprep.subr.mxu0 0.0
    %2424 = vmatpush2.msra.mxu0 0.0
    %2425 = vmatprep.subr.mxu0 0.0
    %2426 = vmatpush2.msra.mxu0 0.0
    %2427 = vmatprep.subr.mxu0 0.0
    %2428 = vmatpush2.msra.mxu0 0.0
    %2429 = vmatprep.subr.mxu0 0.0
    %2430 = vmatpush2.msra.mxu0 0.0
    %2431 = vmatprep.subr.mxu0 0.0
    %2432 = vmatpush2.msra.mxu0 0.0
    %2433 = vmatprep.subr.mxu0 0.0
    %2434 = vmatpush2.msra.mxu0 0.0
    %2435 = vmatprep.subr.mxu0 0.0
    %2436 = vmatpush2.msra.mxu0 0.0
    %2437 = vmatprep.subr.mxu0 0.0
    %2438 = vmatpush2.msra.mxu0 0.0
    %2439 = vmatprep.subr.mxu0 0.0
    %2440 = vmatpush2.msra.mxu0 0.0
    %2441 = vmatprep.mubr.f32.mxu0 0.0
    %2442 = vmatmul.mubr.f32.gmra.mxu0 %v1513
    %v2443 = vpop.f32.mrf.mxu0
    %v2444 = vadd.f32 0.0, %v2443
    %v2445 = vpop.f32.mrf.mxu0
    %2446 = vmatprep.mubr.f32.mxu0 0.0
    %2447 = vmatmul.mubr.f32.gmra.mxu0 %v1514
    %v2448 = vpop.f32.mrf.mxu0
    %v2449 = vadd.f32 0.0, %v2448
    %v2450 = vpop.f32.mrf.mxu0
    %2451 = vdwg.mxu0
    %2452 = vmatprep.subr.mxu0 0.0
    %2453 = vmatpush1.msra.mxu0 %v1985
    %2454 = vmatprep.subr.mxu0 0.0
    %2455 = vmatpush1.msra.mxu0 %v1984
    %2456 = vmatprep.subr.mxu0 0.0
    %2457 = vmatpush1.msra.mxu0 %v1983
    %2458 = vmatprep.subr.mxu0 0.0
    %2459 = vmatpush1.msra.mxu0 %v1982
    %2460 = vmatprep.subr.mxu0 0.0
    %2461 = vmatpush1.msra.mxu0 %v1981
    %2462 = vmatprep.subr.mxu0 0.0
    %2463 = vmatpush1.msra.mxu0 %v1980
    %2464 = vmatprep.subr.mxu0 0.0
    %2465 = vmatpush1.msra.mxu0 %v1979
    %2466 = vmatprep.subr.mxu0 0.0
    %2467 = vmatpush1.msra.mxu0 %v1978
    %2468 = vmatprep.subr.mxu0 0.0
    %2469 = vmatpush1.msra.mxu0 %v1977
    %2470 = vmatprep.subr.mxu0 0.0
    %2471 = vmatpush1.msra.mxu0 %v1976
    %2472 = vmatprep.subr.mxu0 0.0
    %2473 = vmatpush1.msra.mxu0 %v1975
    %2474 = vmatprep.subr.mxu0 0.0
    %2475 = vmatpush1.msra.mxu0 %v1974
    %2476 = vmatprep.subr.mxu0 0.0
    %2477 = vmatpush1.msra.mxu0 %v1973
    %2478 = vmatprep.subr.mxu0 0.0
    %2479 = vmatpush1.msra.mxu0 %v1972
    %2480 = vmatprep.subr.mxu0 0.0
    %2481 = vmatpush1.msra.mxu0 %v1971
    %2482 = vmatprep.subr.mxu0 0.0
    %2483 = vmatpush1.msra.mxu0 %v1970
    %2484 = vmatprep.subr.mxu0 0.0
    %2485 = vmatpush2.msra.mxu0 0.0
    %2486 = vmatprep.subr.mxu0 0.0
    %2487 = vmatpush2.msra.mxu0 0.0
    %2488 = vmatprep.subr.mxu0 0.0
    %2489 = vmatpush2.msra.mxu0 0.0
    %2490 = vmatprep.subr.mxu0 0.0
    %2491 = vmatpush2.msra.mxu0 0.0
    %2492 = vmatprep.subr.mxu0 0.0
    %2493 = vmatpush2.msra.mxu0 0.0
    %2494 = vmatprep.subr.mxu0 0.0
    %2495 = vmatpush2.msra.mxu0 0.0
    %2496 = vmatprep.subr.mxu0 0.0
    %2497 = vmatpush2.msra.mxu0 0.0
    %2498 = vmatprep.subr.mxu0 0.0
    %2499 = vmatpush2.msra.mxu0 0.0
    %2500 = vmatprep.subr.mxu0 0.0
    %2501 = vmatpush2.msra.mxu0 0.0
    %2502 = vmatprep.subr.mxu0 0.0
    %2503 = vmatpush2.msra.mxu0 0.0
    %2504 = vmatprep.subr.mxu0 0.0
    %2505 = vmatpush2.msra.mxu0 0.0
    %2506 = vmatprep.subr.mxu0 0.0
    %2507 = vmatpush2.msra.mxu0 0.0
    %2508 = vmatprep.subr.mxu0 0.0
    %2509 = vmatpush2.msra.mxu0 0.0
    %2510 = vmatprep.subr.mxu0 0.0
    %2511 = vmatpush2.msra.mxu0 0.0
    %2512 = vmatprep.subr.mxu0 0.0
    %2513 = vmatpush2.msra.mxu0 0.0
    %2514 = vmatprep.subr.mxu0 0.0
    %2515 = vmatpush2.msra.mxu0 0.0
    %2516 = vmatprep.mubr.f32.mxu0 0.0
    %2517 = vmatmul.mubr.f32.gmra.mxu0 %v1515
    %v2518 = vpop.f32.mrf.mxu0
    %v2519 = vadd.f32 0.0, %v2518
    %v2520 = vpop.f32.mrf.mxu0
    %2521 = vmatprep.mubr.f32.mxu0 0.0
    %2522 = vmatmul.mubr.f32.gmra.mxu0 %v1516
    %v2523 = vpop.f32.mrf.mxu0
    %v2524 = vadd.f32 0.0, %v2523
    %v2525 = vpop.f32.mrf.mxu0
    %2526 = vdwg.mxu0
    %2527 = vmatprep.subr.mxu0 0.0
    %2528 = vmatpush1.msra.mxu0 %v2001
    %2529 = vmatprep.subr.mxu0 0.0
    %2530 = vmatpush1.msra.mxu0 %v2000
    %2531 = vmatprep.subr.mxu0 0.0
    %2532 = vmatpush1.msra.mxu0 %v1999
    %2533 = vmatprep.subr.mxu0 0.0
    %2534 = vmatpush1.msra.mxu0 %v1998
    %2535 = vmatprep.subr.mxu0 0.0
    %2536 = vmatpush1.msra.mxu0 %v1997
    %2537 = vmatprep.subr.mxu0 0.0
    %2538 = vmatpush1.msra.mxu0 %v1996
    %2539 = vmatprep.subr.mxu0 0.0
    %2540 = vmatpush1.msra.mxu0 %v1995
    %2541 = vmatprep.subr.mxu0 0.0
    %2542 = vmatpush1.msra.mxu0 %v1994
    %2543 = vmatprep.subr.mxu0 0.0
    %2544 = vmatpush1.msra.mxu0 %v1993
    %2545 = vmatprep.subr.mxu0 0.0
    %2546 = vmatpush1.msra.mxu0 %v1992
    %2547 = vmatprep.subr.mxu0 0.0
    %2548 = vmatpush1.msra.mxu0 %v1991
    %2549 = vmatprep.subr.mxu0 0.0
    %2550 = vmatpush1.msra.mxu0 %v1990
    %2551 = vmatprep.subr.mxu0 0.0
    %2552 = vmatpush1.msra.mxu0 %v1989
    %2553 = vmatprep.subr.mxu0 0.0
    %2554 = vmatpush1.msra.mxu0 %v1988
    %2555 = vmatprep.subr.mxu0 0.0
    %2556 = vmatpush1.msra.mxu0 %v1987
    %2557 = vmatprep.subr.mxu0 0.0
    %2558 = vmatpush1.msra.mxu0 %v1986
    %2559 = vmatprep.subr.mxu0 0.0
    %2560 = vmatpush2.msra.mxu0 0.0
    %2561 = vmatprep.subr.mxu0 0.0
    %2562 = vmatpush2.msra.mxu0 0.0
    %2563 = vmatprep.subr.mxu0 0.0
    %2564 = vmatpush2.msra.mxu0 0.0
    %2565 = vmatprep.subr.mxu0 0.0
    %2566 = vmatpush2.msra.mxu0 0.0
    %2567 = vmatprep.subr.mxu0 0.0
    %2568 = vmatpush2.msra.mxu0 0.0
    %2569 = vmatprep.subr.mxu0 0.0
    %2570 = vmatpush2.msra.mxu0 0.0
    %2571 = vmatprep.subr.mxu0 0.0
    %2572 = vmatpush2.msra.mxu0 0.0
    %2573 = vmatprep.subr.mxu0 0.0
    %2574 = vmatpush2.msra.mxu0 0.0
    %2575 = vmatprep.subr.mxu0 0.0
    %2576 = vmatpush2.msra.mxu0 0.0
    %2577 = vmatprep.subr.mxu0 0.0
    %2578 = vmatpush2.msra.mxu0 0.0
    %2579 = vmatprep.subr.mxu0 0.0
    %2580 = vmatpush2.msra.mxu0 0.0
    %2581 = vmatprep.subr.mxu0 0.0
    %2582 = vmatpush2.msra.mxu0 0.0
    %2583 = vmatprep.subr.mxu0 0.0
    %2584 = vmatpush2.msra.mxu0 0.0
    %2585 = vmatprep.subr.mxu0 0.0
    %2586 = vmatpush2.msra.mxu0 0.0
    %2587 = vmatprep.subr.mxu0 0.0
    %2588 = vmatpush2.msra.mxu0 0.0
    %2589 = vmatprep.subr.mxu0 0.0
    %2590 = vmatpush2.msra.mxu0 0.0
    %2591 = vmatprep.mubr.f32.mxu0 0.0
    %2592 = vmatmul.mubr.f32.gmra.mxu0 %v1517
    %v2593 = vpop.f32.mrf.mxu0
    %v2594 = vadd.f32 0.0, %v2593
    %v2595 = vpop.f32.mrf.mxu0
    %2596 = vmatprep.mubr.f32.mxu0 0.0
    %2597 = vmatmul.mubr.f32.gmra.mxu0 %v1518
    %v2598 = vpop.f32.mrf.mxu0
    %v2599 = vadd.f32 0.0, %v2598
    %v2600 = vpop.f32.mrf.mxu0
    %2601 = vdwg.mxu0
    %2602 = vst [vmem:[#allocation2] sm:$0xff] %v2069
    %2603 = vst [vmem:[#allocation2 + $0x8] sm:$0xff] %v2074
    %2604 = vst [vmem:[#allocation2 + $0x10] sm:$0xff] %v2144
    %2605 = vst [vmem:[#allocation2 + $0x18] sm:$0xff] %v2149
    %2606 = vst [vmem:[#allocation2 + $0x20] sm:$0xff] %v2219
    %2607 = vst [vmem:[#allocation2 + $0x28] sm:$0xff] %v2224
    %2608 = vst [vmem:[#allocation2 + $0x30] sm:$0xff] %v2294
    %2609 = vst [vmem:[#allocation2 + $0x38] sm:$0xff] %v2299
    %2610 = vst [vmem:[#allocation2 + $0x40] sm:$0xff] %v2369
    %2611 = vst [vmem:[#allocation2 + $0x48] sm:$0xff] %v2374
    %2612 = vst [vmem:[#allocation2 + $0x50] sm:$0xff] %v2444
    %2613 = vst [vmem:[#allocation2 + $0x58] sm:$0xff] %v2449
    %2614 = vst [vmem:[#allocation2 + $0x60] sm:$0xff] %v2519
    %2615 = vst [vmem:[#allocation2 + $0x68] sm:$0xff] %v2524
    %2616 = vst [vmem:[#allocation2 + $0x70] sm:$0xff] %v2594
    %2617 = vst [vmem:[#allocation2 + $0x78] sm:$0xff] %v2599
    %v2618 = vlaneseq
    %v2619 = vand.u32 %v2618, 127
    %2620 = vrot.lane.b32.xlu0 %v1519, 2
    %v2621 = vpop.permute.xlu0 %2620
    %vm2622 = vcmp.ge.s32.totalorder %v2619, 2
    %vm2623 = vcmp.ne.s32.totalorder %v1519, 0
    %vm2624 = vmand %vm2622, %vm2623
    %vm2625 = vcmp.ne.s32.totalorder %v1519, %v2621
    %vm2626 = vmand %vm2624, %vm2625
    %vm2627 = vcmp.ge.s32.totalorder %v2619, 1
    %v2628 = vld [vmem:[%s4] sm:$0xff]
    %v2629 = vld [vmem:[%s5] sm:$0xff]
    %2630 = vset.pattern.permute.xlu0 0
    %2631 = vperm.xlu0 %2630, %v2629
    %v2632 = vpop.permute.xlu0 %2631
    %vm2633 = vcmp.eq.s32.totalorder %v2619, %v2632
    %v2634 = vsub.s32 %v2629, 1
    %2635 = vset.pattern.permute.xlu0 0
    %2636 = vperm.xlu0 %2635, %v2634
    %v2637 = vpop.permute.xlu0 %2636
    %vm2638 = vcmp.eq.s32.totalorder %v2619, %v2637
    %vm2639 = vmor %vm2633, %vm2638
    %vm2640 = vcmp.eq.s32.totalorder %v2619, 0
    %v2641 = vsel %vm2640, 0.0, -1e+30
    %2642 = vrot.lane.b32.xlu0 %v2641, 1
    %v2643 = vpop.permute.xlu0 %2642
    %v2644 = vsel %vm2627, %v2643, -1e+30
    %2645 = vrot.lane.b32.xlu0 %v2641, 2
    %v2646 = vpop.permute.xlu0 %2645
    %v2647 = vsel %vm2626, %v2646, -1e+30
    %v2648 = vmax.f32 %v2641, %v2644
    %v2649 = vmax.f32 %v2648, %v2647
    %v2650 = vsub.f32 %v2641, %v2649
    %v2651 = vmul.f32 %v2650, 1.442695
    %v2652 = vpow.pop %v2651
    %v2653 = vsub.f32 %v2644, %v2649
    %v2654 = vmul.f32 %v2653, 1.442695
    %v2655 = vpow.pop %v2654
    %v2656 = vadd.f32 %v2652, %v2655
    %v2657 = vsub.f32 %v2647, %v2649
    %v2658 = vmul.f32 %v2657, 1.442695
    %v2659 = vpow.pop %v2658
    %v2660 = vadd.f32 %v2656, %v2659
    %v2661 = vlog2.pop %v2660
    %v2662 = vmul.f32 %v2661, 0.6931472
    %v2663 = vadd.f32 %v2649, %v2662
    %v2664 = vld [vmem:[#allocation2] sm:$0x1]
    %v2665 = vld [vmem:[#allocation2 + $0x10] sm:$0x1]
    %v2666 = vld [vmem:[#allocation2 + $0x20] sm:$0x1]
    %v2667 = vld [vmem:[#allocation2 + $0x30] sm:$0x1]
    %v2668 = vld [vmem:[#allocation2 + $0x40] sm:$0x1]
    %v2669 = vld [vmem:[#allocation2 + $0x50] sm:$0x1]
    %v2670 = vld [vmem:[#allocation2 + $0x60] sm:$0x1]
    %v2671 = vld [vmem:[#allocation2 + $0x70] sm:$0x1]
    %v2680 = vrot.slane %v2665, 7
    %vm2681 = vcmask 1041409
    %v2682 = vsel %vm2681, %v2680, %v2664
    %v2683 = vrot.slane %v2666, 6
    %vm2684 = vcmask 1042434
    %v2685 = vsel %vm2684, %v2683, %v2682
    %v2686 = vrot.slane %v2667, 5
    %vm2687 = vcmask 1043459
    %v2688 = vsel %vm2687, %v2686, %v2685
    %v2689 = vrot.slane %v2668, 4
    %vm2690 = vcmask 1044484
    %v2691 = vsel %vm2690, %v2689, %v2688
    %v2692 = vrot.slane %v2669, 3
    %vm2693 = vcmask 1045509
    %v2694 = vsel %vm2693, %v2692, %v2691
    %v2695 = vrot.slane %v2670, 2
    %vm2696 = vcmask 1046534
    %v2697 = vsel %vm2696, %v2695, %v2694
    %v2698 = vrot.slane %v2671, 1
    %vm2699 = vcmask 1047559
    %v2700 = vsel %vm2699, %v2698, %v2697
    %v2702 = vadd.f32 %v2663, %v2700
    %vm2703 = vcmp.gt.s32.totalorder %v2628, 0
    %v2704 = vsel %vm2703, 1, 0
    %2705 = vset.pattern.permute.xlu0 0
    %2706 = vperm.xlu0 %2705, %v2704
    %v2707 = vpop.permute.xlu0 %2706
    %vm2708 = vcmp.eq.s32.totalorder %v2707, 1
    %v2709 = vsel %vm2708, %v2702, %v2641
    %2710 = vrot.lane.b32.xlu0 %v2709, 1
    %v2711 = vpop.permute.xlu0 %2710
    %v2712 = vsel %vm2627, %v2711, -1e+30
    %2713 = vrot.lane.b32.xlu0 %v2709, 2
    %v2714 = vpop.permute.xlu0 %2713
    %v2715 = vsel %vm2626, %v2714, -1e+30
    %v2716 = vmax.f32 %v2709, %v2712
    %v2717 = vmax.f32 %v2716, %v2715
    %v2718 = vsub.f32 %v2709, %v2717
    %v2719 = vmul.f32 %v2718, 1.442695
    %v2720 = vpow.pop %v2719
    %v2721 = vsub.f32 %v2712, %v2717
    %v2722 = vmul.f32 %v2721, 1.442695
    %v2723 = vpow.pop %v2722
    %v2724 = vadd.f32 %v2720, %v2723
    %v2725 = vsub.f32 %v2715, %v2717
    %v2726 = vmul.f32 %v2725, 1.442695
    %v2727 = vpow.pop %v2726
    %v2728 = vadd.f32 %v2724, %v2727
    %v2729 = vlog2.pop %v2728
    %v2730 = vmul.f32 %v2729, 0.6931472
    %v2731 = vadd.f32 %v2717, %v2730
    %v2732 = vld [vmem:[#allocation2 + $0x1] sm:$0x1]
    %v2733 = vld [vmem:[#allocation2 + $0x11] sm:$0x1]
    %v2734 = vld [vmem:[#allocation2 + $0x21] sm:$0x1]
    %v2735 = vld [vmem:[#allocation2 + $0x31] sm:$0x1]
    %v2736 = vld [vmem:[#allocation2 + $0x41] sm:$0x1]
    %v2737 = vld [vmem:[#allocation2 + $0x51] sm:$0x1]
    %v2738 = vld [vmem:[#allocation2 + $0x61] sm:$0x1]
    %v2739 = vld [vmem:[#allocation2 + $0x71] sm:$0x1]
    %v2748 = vrot.slane %v2733, 7
    %v2749 = vsel %vm2681, %v2748, %v2732
    %v2750 = vrot.slane %v2734, 6
    %v2751 = vsel %vm2684, %v2750, %v2749
    %v2752 = vrot.slane %v2735, 5
    %v2753 = vsel %vm2687, %v2752, %v2751
    %v2754 = vrot.slane %v2736, 4
    %v2755 = vsel %vm2690, %v2754, %v2753
    %v2756 = vrot.slane %v2737, 3
    %v2757 = vsel %vm2693, %v2756, %v2755
    %v2758 = vrot.slane %v2738, 2
    %v2759 = vsel %vm2696, %v2758, %v2757
    %v2760 = vrot.slane %v2739, 1
    %v2761 = vsel %vm2699, %v2760, %v2759
    %v2763 = vadd.f32 %v2731, %v2761
    %vm2764 = vcmp.gt.s32.totalorder %v2628, 1
    %v2765 = vsel %vm2764, 1, 0
    %2766 = vset.pattern.permute.xlu0 0
    %2767 = vperm.xlu0 %2766, %v2765
    %v2768 = vpop.permute.xlu0 %2767
    %vm2769 = vcmp.eq.s32.totalorder %v2768, 1
    %v2770 = vsel %vm2769, %v2763, %v2709
    %2771 = vrot.lane.b32.xlu0 %v2770, 1
    %v2772 = vpop.permute.xlu0 %2771
    %v2773 = vsel %vm2627, %v2772, -1e+30
    %2774 = vrot.lane.b32.xlu0 %v2770, 2
    %v2775 = vpop.permute.xlu0 %2774
    %v2776 = vsel %vm2626, %v2775, -1e+30
    %v2777 = vmax.f32 %v2770, %v2773
    %v2778 = vmax.f32 %v2777, %v2776
    %v2779 = vsub.f32 %v2770, %v2778
    %v2780 = vmul.f32 %v2779, 1.442695
    %v2781 = vpow.pop %v2780
    %v2782 = vsub.f32 %v2773, %v2778
    %v2783 = vmul.f32 %v2782, 1.442695
    %v2784 = vpow.pop %v2783
    %v2785 = vadd.f32 %v2781, %v2784
    %v2786 = vsub.f32 %v2776, %v2778
    %v2787 = vmul.f32 %v2786, 1.442695
    %v2788 = vpow.pop %v2787
    %v2789 = vadd.f32 %v2785, %v2788
    %v2790 = vlog2.pop %v2789
    %v2791 = vmul.f32 %v2790, 0.6931472
    %v2792 = vadd.f32 %v2778, %v2791
    %v2793 = vld [vmem:[#allocation2 + $0x2] sm:$0x1]
    %v2794 = vld [vmem:[#allocation2 + $0x12] sm:$0x1]
    %v2795 = vld [vmem:[#allocation2 + $0x22] sm:$0x1]
    %v2796 = vld [vmem:[#allocation2 + $0x32] sm:$0x1]
    %v2797 = vld [vmem:[#allocation2 + $0x42] sm:$0x1]
    %v2798 = vld [vmem:[#allocation2 + $0x52] sm:$0x1]
    %v2799 = vld [vmem:[#allocation2 + $0x62] sm:$0x1]
    %v2800 = vld [vmem:[#allocation2 + $0x72] sm:$0x1]
    %v2809 = vrot.slane %v2794, 7
    %v2810 = vsel %vm2681, %v2809, %v2793
    %v2811 = vrot.slane %v2795, 6
    %v2812 = vsel %vm2684, %v2811, %v2810
    %v2813 = vrot.slane %v2796, 5
    %v2814 = vsel %vm2687, %v2813, %v2812
    %v2815 = vrot.slane %v2797, 4
    %v2816 = vsel %vm2690, %v2815, %v2814
    %v2817 = vrot.slane %v2798, 3
    %v2818 = vsel %vm2693, %v2817, %v2816
    %v2819 = vrot.slane %v2799, 2
    %v2820 = vsel %vm2696, %v2819, %v2818
    %v2821 = vrot.slane %v2800, 1
    %v2822 = vsel %vm2699, %v2821, %v2820
    %v2824 = vadd.f32 %v2792, %v2822
    %vm2825 = vcmp.gt.s32.totalorder %v2628, 2
    %v2826 = vsel %vm2825, 1, 0
    %2827 = vset.pattern.permute.xlu0 0
    %2828 = vperm.xlu0 %2827, %v2826
    %v2829 = vpop.permute.xlu0 %2828
    %vm2830 = vcmp.eq.s32.totalorder %v2829, 1
    %v2831 = vsel %vm2830, %v2824, %v2770
    %2832 = vrot.lane.b32.xlu0 %v2831, 1
    %v2833 = vpop.permute.xlu0 %2832
    %v2834 = vsel %vm2627, %v2833, -1e+30
    %2835 = vrot.lane.b32.xlu0 %v2831, 2
    %v2836 = vpop.permute.xlu0 %2835
    %v2837 = vsel %vm2626, %v2836, -1e+30
    %v2838 = vmax.f32 %v2831, %v2834
    %v2839 = vmax.f32 %v2838, %v2837
    %v2840 = vsub.f32 %v2831, %v2839
    %v2841 = vmul.f32 %v2840, 1.442695
    %v2842 = vpow.pop %v2841
    %v2843 = vsub.f32 %v2834, %v2839
    %v2844 = vmul.f32 %v2843, 1.442695
    %v2845 = vpow.pop %v2844
    %v2846 = vadd.f32 %v2842, %v2845
    %v2847 = vsub.f32 %v2837, %v2839
    %v2848 = vmul.f32 %v2847, 1.442695
    %v2849 = vpow.pop %v2848
    %v2850 = vadd.f32 %v2846, %v2849
    %v2851 = vlog2.pop %v2850
    %v2852 = vmul.f32 %v2851, 0.6931472
    %v2853 = vadd.f32 %v2839, %v2852
    %v2854 = vld [vmem:[#allocation2 + $0x3] sm:$0x1]
    %v2855 = vld [vmem:[#allocation2 + $0x13] sm:$0x1]
    %v2856 = vld [vmem:[#allocation2 + $0x23] sm:$0x1]
    %v2857 = vld [vmem:[#allocation2 + $0x33] sm:$0x1]
    %v2858 = vld [vmem:[#allocation2 + $0x43] sm:$0x1]
    %v2859 = vld [vmem:[#allocation2 + $0x53] sm:$0x1]
    %v2860 = vld [vmem:[#allocation2 + $0x63] sm:$0x1]
    %v2861 = vld [vmem:[#allocation2 + $0x73] sm:$0x1]
    %v2870 = vrot.slane %v2855, 7
    %v2871 = vsel %vm2681, %v2870, %v2854
    %v2872 = vrot.slane %v2856, 6
    %v2873 = vsel %vm2684, %v2872, %v2871
    %v2874 = vrot.slane %v2857, 5
    %v2875 = vsel %vm2687, %v2874, %v2873
    %v2876 = vrot.slane %v2858, 4
    %v2877 = vsel %vm2690, %v2876, %v2875
    %v2878 = vrot.slane %v2859, 3
    %v2879 = vsel %vm2693, %v2878, %v2877
    %v2880 = vrot.slane %v2860, 2
    %v2881 = vsel %vm2696, %v2880, %v2879
    %v2882 = vrot.slane %v2861, 1
    %v2883 = vsel %vm2699, %v2882, %v2881
    %v2885 = vadd.f32 %v2853, %v2883
    %vm2886 = vcmp.gt.s32.totalorder %v2628, 3
    %v2887 = vsel %vm2886, 1, 0
    %2888 = vset.pattern.permute.xlu0 0
    %2889 = vperm.xlu0 %2888, %v2887
    %v2890 = vpop.permute.xlu0 %2889
    %vm2891 = vcmp.eq.s32.totalorder %v2890, 1
    %v2892 = vsel %vm2891, %v2885, %v2831
    %2893 = vrot.lane.b32.xlu0 %v2892, 1
    %v2894 = vpop.permute.xlu0 %2893
    %v2895 = vsel %vm2627, %v2894, -1e+30
    %2896 = vrot.lane.b32.xlu0 %v2892, 2
    %v2897 = vpop.permute.xlu0 %2896
    %v2898 = vsel %vm2626, %v2897, -1e+30
    %v2899 = vmax.f32 %v2892, %v2895
    %v2900 = vmax.f32 %v2899, %v2898
    %v2901 = vsub.f32 %v2892, %v2900
    %v2902 = vmul.f32 %v2901, 1.442695
    %v2903 = vpow.pop %v2902
    %v2904 = vsub.f32 %v2895, %v2900
    %v2905 = vmul.f32 %v2904, 1.442695
    %v2906 = vpow.pop %v2905
    %v2907 = vadd.f32 %v2903, %v2906
    %v2908 = vsub.f32 %v2898, %v2900
    %v2909 = vmul.f32 %v2908, 1.442695
    %v2910 = vpow.pop %v2909
    %v2911 = vadd.f32 %v2907, %v2910
    %v2912 = vlog2.pop %v2911
    %v2913 = vmul.f32 %v2912, 0.6931472
    %v2914 = vadd.f32 %v2900, %v2913
    %v2915 = vld [vmem:[#allocation2 + $0x4] sm:$0x1]
    %v2916 = vld [vmem:[#allocation2 + $0x14] sm:$0x1]
    %v2917 = vld [vmem:[#allocation2 + $0x24] sm:$0x1]
    %v2918 = vld [vmem:[#allocation2 + $0x34] sm:$0x1]
    %v2919 = vld [vmem:[#allocation2 + $0x44] sm:$0x1]
    %v2920 = vld [vmem:[#allocation2 + $0x54] sm:$0x1]
    %v2921 = vld [vmem:[#allocation2 + $0x64] sm:$0x1]
    %v2922 = vld [vmem:[#allocation2 + $0x74] sm:$0x1]
    %v2931 = vrot.slane %v2916, 7
    %v2932 = vsel %vm2681, %v2931, %v2915
    %v2933 = vrot.slane %v2917, 6
    %v2934 = vsel %vm2684, %v2933, %v2932
    %v2935 = vrot.slane %v2918, 5
    %v2936 = vsel %vm2687, %v2935, %v2934
    %v2937 = vrot.slane %v2919, 4
    %v2938 = vsel %vm2690, %v2937, %v2936
    %v2939 = vrot.slane %v2920, 3
    %v2940 = vsel %vm2693, %v2939, %v2938
    %v2941 = vrot.slane %v2921, 2
    %v2942 = vsel %vm2696, %v2941, %v2940
    %v2943 = vrot.slane %v2922, 1
    %v2944 = vsel %vm2699, %v2943, %v2942
    %v2946 = vadd.f32 %v2914, %v2944
    %vm2947 = vcmp.gt.s32.totalorder %v2628, 4
    %v2948 = vsel %vm2947, 1, 0
    %2949 = vset.pattern.permute.xlu0 0
    %2950 = vperm.xlu0 %2949, %v2948
    %v2951 = vpop.permute.xlu0 %2950
    %vm2952 = vcmp.eq.s32.totalorder %v2951, 1
    %v2953 = vsel %vm2952, %v2946, %v2892
    %2954 = vrot.lane.b32.xlu0 %v2953, 1
    %v2955 = vpop.permute.xlu0 %2954
    %v2956 = vsel %vm2627, %v2955, -1e+30
    %2957 = vrot.lane.b32.xlu0 %v2953, 2
    %v2958 = vpop.permute.xlu0 %2957
    %v2959 = vsel %vm2626, %v2958, -1e+30
    %v2960 = vmax.f32 %v2953, %v2956
    %v2961 = vmax.f32 %v2960, %v2959
    %v2962 = vsub.f32 %v2953, %v2961
    %v2963 = vmul.f32 %v2962, 1.442695
    %v2964 = vpow.pop %v2963
    %v2965 = vsub.f32 %v2956, %v2961
    %v2966 = vmul.f32 %v2965, 1.442695
    %v2967 = vpow.pop %v2966
    %v2968 = vadd.f32 %v2964, %v2967
    %v2969 = vsub.f32 %v2959, %v2961
    %v2970 = vmul.f32 %v2969, 1.442695
    %v2971 = vpow.pop %v2970
    %v2972 = vadd.f32 %v2968, %v2971
    %v2973 = vlog2.pop %v2972
    %v2974 = vmul.f32 %v2973, 0.6931472
    %v2975 = vadd.f32 %v2961, %v2974
    %v2976 = vld [vmem:[#allocation2 + $0x5] sm:$0x1]
    %v2977 = vld [vmem:[#allocation2 + $0x15] sm:$0x1]
    %v2978 = vld [vmem:[#allocation2 + $0x25] sm:$0x1]
    %v2979 = vld [vmem:[#allocation2 + $0x35] sm:$0x1]
    %v2980 = vld [vmem:[#allocation2 + $0x45] sm:$0x1]
    %v2981 = vld [vmem:[#allocation2 + $0x55] sm:$0x1]
    %v2982 = vld [vmem:[#allocation2 + $0x65] sm:$0x1]
    %v2983 = vld [vmem:[#allocation2 + $0x75] sm:$0x1]
    %v2992 = vrot.slane %v2977, 7
    %v2993 = vsel %vm2681, %v2992, %v2976
    %v2994 = vrot.slane %v2978, 6
    %v2995 = vsel %vm2684, %v2994, %v2993
    %v2996 = vrot.slane %v2979, 5
    %v2997 = vsel %vm2687, %v2996, %v2995
    %v2998 = vrot.slane %v2980, 4
    %v2999 = vsel %vm2690, %v2998, %v2997
    %v3000 = vrot.slane %v2981, 3
    %v3001 = vsel %vm2693, %v3000, %v2999
    %v3002 = vrot.slane %v2982, 2
    %v3003 = vsel %vm2696, %v3002, %v3001
    %v3004 = vrot.slane %v2983, 1
    %v3005 = vsel %vm2699, %v3004, %v3003
    %v3007 = vadd.f32 %v2975, %v3005
    %vm3008 = vcmp.gt.s32.totalorder %v2628, 5
    %v3009 = vsel %vm3008, 1, 0
    %3010 = vset.pattern.permute.xlu0 0
    %3011 = vperm.xlu0 %3010, %v3009
    %v3012 = vpop.permute.xlu0 %3011
    %vm3013 = vcmp.eq.s32.totalorder %v3012, 1
    %v3014 = vsel %vm3013, %v3007, %v2953
    %3015 = vrot.lane.b32.xlu0 %v3014, 1
    %v3016 = vpop.permute.xlu0 %3015
    %v3017 = vsel %vm2627, %v3016, -1e+30
    %3018 = vrot.lane.b32.xlu0 %v3014, 2
    %v3019 = vpop.permute.xlu0 %3018
    %v3020 = vsel %vm2626, %v3019, -1e+30
    %v3021 = vmax.f32 %v3014, %v3017
    %v3022 = vmax.f32 %v3021, %v3020
    %v3023 = vsub.f32 %v3014, %v3022
    %v3024 = vmul.f32 %v3023, 1.442695
    %v3025 = vpow.pop %v3024
    %v3026 = vsub.f32 %v3017, %v3022
    %v3027 = vmul.f32 %v3026, 1.442695
    %v3028 = vpow.pop %v3027
    %v3029 = vadd.f32 %v3025, %v3028
    %v3030 = vsub.f32 %v3020, %v3022
    %v3031 = vmul.f32 %v3030, 1.442695
    %v3032 = vpow.pop %v3031
    %v3033 = vadd.f32 %v3029, %v3032
    %v3034 = vlog2.pop %v3033
    %v3035 = vmul.f32 %v3034, 0.6931472
    %v3036 = vadd.f32 %v3022, %v3035
    %v3037 = vld [vmem:[#allocation2 + $0x6] sm:$0x1]
    %v3038 = vld [vmem:[#allocation2 + $0x16] sm:$0x1]
    %v3039 = vld [vmem:[#allocation2 + $0x26] sm:$0x1]
    %v3040 = vld [vmem:[#allocation2 + $0x36] sm:$0x1]
    %v3041 = vld [vmem:[#allocation2 + $0x46] sm:$0x1]
    %v3042 = vld [vmem:[#allocation2 + $0x56] sm:$0x1]
    %v3043 = vld [vmem:[#allocation2 + $0x66] sm:$0x1]
    %v3044 = vld [vmem:[#allocation2 + $0x76] sm:$0x1]
    %v3053 = vrot.slane %v3038, 7
    %v3054 = vsel %vm2681, %v3053, %v3037
    %v3055 = vrot.slane %v3039, 6
    %v3056 = vsel %vm2684, %v3055, %v3054
    %v3057 = vrot.slane %v3040, 5
    %v3058 = vsel %vm2687, %v3057, %v3056
    %v3059 = vrot.slane %v3041, 4
    %v3060 = vsel %vm2690, %v3059, %v3058
    %v3061 = vrot.slane %v3042, 3
    %v3062 = vsel %vm2693, %v3061, %v3060
    %v3063 = vrot.slane %v3043, 2
    %v3064 = vsel %vm2696, %v3063, %v3062
    %v3065 = vrot.slane %v3044, 1
    %v3066 = vsel %vm2699, %v3065, %v3064
    %v3068 = vadd.f32 %v3036, %v3066
    %vm3069 = vcmp.gt.s32.totalorder %v2628, 6
    %v3070 = vsel %vm3069, 1, 0
    %3071 = vset.pattern.permute.xlu0 0
    %3072 = vperm.xlu0 %3071, %v3070
    %v3073 = vpop.permute.xlu0 %3072
    %vm3074 = vcmp.eq.s32.totalorder %v3073, 1
    %v3075 = vsel %vm3074, %v3068, %v3014
    %3076 = vrot.lane.b32.xlu0 %v3075, 1
    %v3077 = vpop.permute.xlu0 %3076
    %v3078 = vsel %vm2627, %v3077, -1e+30
    %3079 = vrot.lane.b32.xlu0 %v3075, 2
    %v3080 = vpop.permute.xlu0 %3079
    %v3081 = vsel %vm2626, %v3080, -1e+30
    %v3082 = vmax.f32 %v3075, %v3078
    %v3083 = vmax.f32 %v3082, %v3081
    %v3084 = vsub.f32 %v3075, %v3083
    %v3085 = vmul.f32 %v3084, 1.442695
    %v3086 = vpow.pop %v3085
    %v3087 = vsub.f32 %v3078, %v3083
    %v3088 = vmul.f32 %v3087, 1.442695
    %v3089 = vpow.pop %v3088
    %v3090 = vadd.f32 %v3086, %v3089
    %v3091 = vsub.f32 %v3081, %v3083
    %v3092 = vmul.f32 %v3091, 1.442695
    %v3093 = vpow.pop %v3092
    %v3094 = vadd.f32 %v3090, %v3093
    %v3095 = vlog2.pop %v3094
    %v3096 = vmul.f32 %v3095, 0.6931472
    %v3097 = vadd.f32 %v3083, %v3096
    %v3098 = vld [vmem:[#allocation2 + $0x7] sm:$0x1]
    %v3099 = vld [vmem:[#allocation2 + $0x17] sm:$0x1]
    %v3100 = vld [vmem:[#allocation2 + $0x27] sm:$0x1]
    %v3101 = vld [vmem:[#allocation2 + $0x37] sm:$0x1]
    %v3102 = vld [vmem:[#allocation2 + $0x47] sm:$0x1]
    %v3103 = vld [vmem:[#allocation2 + $0x57] sm:$0x1]
    %v3104 = vld [vmem:[#allocation2 + $0x67] sm:$0x1]
    %v3105 = vld [vmem:[#allocation2 + $0x77] sm:$0x1]
    %v3114 = vrot.slane %v3099, 7
    %v3115 = vsel %vm2681, %v3114, %v3098
    %v3116 = vrot.slane %v3100, 6
    %v3117 = vsel %vm2684, %v3116, %v3115
    %v3118 = vrot.slane %v3101, 5
    %v3119 = vsel %vm2687, %v3118, %v3117
    %v3120 = vrot.slane %v3102, 4
    %v3121 = vsel %vm2690, %v3120, %v3119
    %v3122 = vrot.slane %v3103, 3
    %v3123 = vsel %vm2693, %v3122, %v3121
    %v3124 = vrot.slane %v3104, 2
    %v3125 = vsel %vm2696, %v3124, %v3123
    %v3126 = vrot.slane %v3105, 1
    %v3127 = vsel %vm2699, %v3126, %v3125
    %v3129 = vadd.f32 %v3097, %v3127
    %vm3130 = vcmp.gt.s32.totalorder %v2628, 7
    %v3131 = vsel %vm3130, 1, 0
    %3132 = vset.pattern.permute.xlu0 0
    %3133 = vperm.xlu0 %3132, %v3131
    %v3134 = vpop.permute.xlu0 %3133
    %vm3135 = vcmp.eq.s32.totalorder %v3134, 1
    %v3136 = vsel %vm3135, %v3129, %v3075
    %3137 = vrot.lane.b32.xlu0 %v3136, 1
    %v3138 = vpop.permute.xlu0 %3137
    %v3139 = vsel %vm2627, %v3138, -1e+30
    %3140 = vrot.lane.b32.xlu0 %v3136, 2
    %v3141 = vpop.permute.xlu0 %3140
    %v3142 = vsel %vm2626, %v3141, -1e+30
    %v3143 = vmax.f32 %v3136, %v3139
    %v3144 = vmax.f32 %v3143, %v3142
    %v3145 = vsub.f32 %v3136, %v3144
    %v3146 = vmul.f32 %v3145, 1.442695
    %v3147 = vpow.pop %v3146
    %v3148 = vsub.f32 %v3139, %v3144
    %v3149 = vmul.f32 %v3148, 1.442695
    %v3150 = vpow.pop %v3149
    %v3151 = vadd.f32 %v3147, %v3150
    %v3152 = vsub.f32 %v3142, %v3144
    %v3153 = vmul.f32 %v3152, 1.442695
    %v3154 = vpow.pop %v3153
    %v3155 = vadd.f32 %v3151, %v3154
    %v3156 = vlog2.pop %v3155
    %v3157 = vmul.f32 %v3156, 0.6931472
    %v3158 = vadd.f32 %v3144, %v3157
    %v3159 = vld [vmem:[#allocation2 + $0x8] sm:$0x1]
    %v3160 = vld [vmem:[#allocation2 + $0x18] sm:$0x1]
    %v3161 = vld [vmem:[#allocation2 + $0x28] sm:$0x1]
    %v3162 = vld [vmem:[#allocation2 + $0x38] sm:$0x1]
    %v3163 = vld [vmem:[#allocation2 + $0x48] sm:$0x1]
    %v3164 = vld [vmem:[#allocation2 + $0x58] sm:$0x1]
    %v3165 = vld [vmem:[#allocation2 + $0x68] sm:$0x1]
    %v3166 = vld [vmem:[#allocation2 + $0x78] sm:$0x1]
    %v3175 = vrot.slane %v3160, 7
    %v3176 = vsel %vm2681, %v3175, %v3159
    %v3177 = vrot.slane %v3161, 6
    %v3178 = vsel %vm2684, %v3177, %v3176
    %v3179 = vrot.slane %v3162, 5
    %v3180 = vsel %vm2687, %v3179, %v3178
    %v3181 = vrot.slane %v3163, 4
    %v3182 = vsel %vm2690, %v3181, %v3180
    %v3183 = vrot.slane %v3164, 3
    %v3184 = vsel %vm2693, %v3183, %v3182
    %v3185 = vrot.slane %v3165, 2
    %v3186 = vsel %vm2696, %v3185, %v3184
    %v3187 = vrot.slane %v3166, 1
    %v3188 = vsel %vm2699, %v3187, %v3186
    %v3190 = vadd.f32 %v3158, %v3188
    %vm3191 = vcmp.gt.s32.totalorder %v2628, 8
    %v3192 = vsel %vm3191, 1, 0
    %3193 = vset.pattern.permute.xlu0 0
    %3194 = vperm.xlu0 %3193, %v3192
    %v3195 = vpop.permute.xlu0 %3194
    %vm3196 = vcmp.eq.s32.totalorder %v3195, 1
    %v3197 = vsel %vm3196, %v3190, %v3136
    %3198 = vrot.lane.b32.xlu0 %v3197, 1
    %v3199 = vpop.permute.xlu0 %3198
    %v3200 = vsel %vm2627, %v3199, -1e+30
    %3201 = vrot.lane.b32.xlu0 %v3197, 2
    %v3202 = vpop.permute.xlu0 %3201
    %v3203 = vsel %vm2626, %v3202, -1e+30
    %v3204 = vmax.f32 %v3197, %v3200
    %v3205 = vmax.f32 %v3204, %v3203
    %v3206 = vsub.f32 %v3197, %v3205
    %v3207 = vmul.f32 %v3206, 1.442695
    %v3208 = vpow.pop %v3207
    %v3209 = vsub.f32 %v3200, %v3205
    %v3210 = vmul.f32 %v3209, 1.442695
    %v3211 = vpow.pop %v3210
    %v3212 = vadd.f32 %v3208, %v3211
    %v3213 = vsub.f32 %v3203, %v3205
    %v3214 = vmul.f32 %v3213, 1.442695
    %v3215 = vpow.pop %v3214
    %v3216 = vadd.f32 %v3212, %v3215
    %v3217 = vlog2.pop %v3216
    %v3218 = vmul.f32 %v3217, 0.6931472
    %v3219 = vadd.f32 %v3205, %v3218
    %v3220 = vld [vmem:[#allocation2 + $0x9] sm:$0x1]
    %v3221 = vld [vmem:[#allocation2 + $0x19] sm:$0x1]
    %v3222 = vld [vmem:[#allocation2 + $0x29] sm:$0x1]
    %v3223 = vld [vmem:[#allocation2 + $0x39] sm:$0x1]
    %v3224 = vld [vmem:[#allocation2 + $0x49] sm:$0x1]
    %v3225 = vld [vmem:[#allocation2 + $0x59] sm:$0x1]
    %v3226 = vld [vmem:[#allocation2 + $0x69] sm:$0x1]
    %v3227 = vld [vmem:[#allocation2 + $0x79] sm:$0x1]
    %v3236 = vrot.slane %v3221, 7
    %v3237 = vsel %vm2681, %v3236, %v3220
    %v3238 = vrot.slane %v3222, 6
    %v3239 = vsel %vm2684, %v3238, %v3237
    %v3240 = vrot.slane %v3223, 5
    %v3241 = vsel %vm2687, %v3240, %v3239
    %v3242 = vrot.slane %v3224, 4
    %v3243 = vsel %vm2690, %v3242, %v3241
    %v3244 = vrot.slane %v3225, 3
    %v3245 = vsel %vm2693, %v3244, %v3243
    %v3246 = vrot.slane %v3226, 2
    %v3247 = vsel %vm2696, %v3246, %v3245
    %v3248 = vrot.slane %v3227, 1
    %v3249 = vsel %vm2699, %v3248, %v3247
    %v3251 = vadd.f32 %v3219, %v3249
    %vm3252 = vcmp.gt.s32.totalorder %v2628, 9
    %v3253 = vsel %vm3252, 1, 0
    %3254 = vset.pattern.permute.xlu0 0
    %3255 = vperm.xlu0 %3254, %v3253
    %v3256 = vpop.permute.xlu0 %3255
    %vm3257 = vcmp.eq.s32.totalorder %v3256, 1
    %v3258 = vsel %vm3257, %v3251, %v3197
    %3259 = vrot.lane.b32.xlu0 %v3258, 1
    %v3260 = vpop.permute.xlu0 %3259
    %v3261 = vsel %vm2627, %v3260, -1e+30
    %3262 = vrot.lane.b32.xlu0 %v3258, 2
    %v3263 = vpop.permute.xlu0 %3262
    %v3264 = vsel %vm2626, %v3263, -1e+30
    %v3265 = vmax.f32 %v3258, %v3261
    %v3266 = vmax.f32 %v3265, %v3264
    %v3267 = vsub.f32 %v3258, %v3266
    %v3268 = vmul.f32 %v3267, 1.442695
    %v3269 = vpow.pop %v3268
    %v3270 = vsub.f32 %v3261, %v3266
    %v3271 = vmul.f32 %v3270, 1.442695
    %v3272 = vpow.pop %v3271
    %v3273 = vadd.f32 %v3269, %v3272
    %v3274 = vsub.f32 %v3264, %v3266
    %v3275 = vmul.f32 %v3274, 1.442695
    %v3276 = vpow.pop %v3275
    %v3277 = vadd.f32 %v3273, %v3276
    %v3278 = vlog2.pop %v3277
    %v3279 = vmul.f32 %v3278, 0.6931472
    %v3280 = vadd.f32 %v3266, %v3279
    %v3281 = vld [vmem:[#allocation2 + $0xa] sm:$0x1]
    %v3282 = vld [vmem:[#allocation2 + $0x1a] sm:$0x1]
    %v3283 = vld [vmem:[#allocation2 + $0x2a] sm:$0x1]
    %v3284 = vld [vmem:[#allocation2 + $0x3a] sm:$0x1]
    %v3285 = vld [vmem:[#allocation2 + $0x4a] sm:$0x1]
    %v3286 = vld [vmem:[#allocation2 + $0x5a] sm:$0x1]
    %v3287 = vld [vmem:[#allocation2 + $0x6a] sm:$0x1]
    %v3288 = vld [vmem:[#allocation2 + $0x7a] sm:$0x1]
    %v3297 = vrot.slane %v3282, 7
    %v3298 = vsel %vm2681, %v3297, %v3281
    %v3299 = vrot.slane %v3283, 6
    %v3300 = vsel %vm2684, %v3299, %v3298
    %v3301 = vrot.slane %v3284, 5
    %v3302 = vsel %vm2687, %v3301, %v3300
    %v3303 = vrot.slane %v3285, 4
    %v3304 = vsel %vm2690, %v3303, %v3302
    %v3305 = vrot.slane %v3286, 3
    %v3306 = vsel %vm2693, %v3305, %v3304
    %v3307 = vrot.slane %v3287, 2
    %v3308 = vsel %vm2696, %v3307, %v3306
    %v3309 = vrot.slane %v3288, 1
    %v3310 = vsel %vm2699, %v3309, %v3308
    %v3312 = vadd.f32 %v3280, %v3310
    %vm3313 = vcmp.gt.s32.totalorder %v2628, 10
    %v3314 = vsel %vm3313, 1, 0
    %3315 = vset.pattern.permute.xlu0 0
    %3316 = vperm.xlu0 %3315, %v3314
    %v3317 = vpop.permute.xlu0 %3316
    %vm3318 = vcmp.eq.s32.totalorder %v3317, 1
    %v3319 = vsel %vm3318, %v3312, %v3258
    %3320 = vrot.lane.b32.xlu0 %v3319, 1
    %v3321 = vpop.permute.xlu0 %3320
    %v3322 = vsel %vm2627, %v3321, -1e+30
    %3323 = vrot.lane.b32.xlu0 %v3319, 2
    %v3324 = vpop.permute.xlu0 %3323
    %v3325 = vsel %vm2626, %v3324, -1e+30
    %v3326 = vmax.f32 %v3319, %v3322
    %v3327 = vmax.f32 %v3326, %v3325
    %v3328 = vsub.f32 %v3319, %v3327
    %v3329 = vmul.f32 %v3328, 1.442695
    %v3330 = vpow.pop %v3329
    %v3331 = vsub.f32 %v3322, %v3327
    %v3332 = vmul.f32 %v3331, 1.442695
    %v3333 = vpow.pop %v3332
    %v3334 = vadd.f32 %v3330, %v3333
    %v3335 = vsub.f32 %v3325, %v3327
    %v3336 = vmul.f32 %v3335, 1.442695
    %v3337 = vpow.pop %v3336
    %v3338 = vadd.f32 %v3334, %v3337
    %v3339 = vlog2.pop %v3338
    %v3340 = vmul.f32 %v3339, 0.6931472
    %v3341 = vadd.f32 %v3327, %v3340
    %v3342 = vld [vmem:[#allocation2 + $0xb] sm:$0x1]
    %v3343 = vld [vmem:[#allocation2 + $0x1b] sm:$0x1]
    %v3344 = vld [vmem:[#allocation2 + $0x2b] sm:$0x1]
    %v3345 = vld [vmem:[#allocation2 + $0x3b] sm:$0x1]
    %v3346 = vld [vmem:[#allocation2 + $0x4b] sm:$0x1]
    %v3347 = vld [vmem:[#allocation2 + $0x5b] sm:$0x1]
    %v3348 = vld [vmem:[#allocation2 + $0x6b] sm:$0x1]
    %v3349 = vld [vmem:[#allocation2 + $0x7b] sm:$0x1]
    %v3358 = vrot.slane %v3343, 7
    %v3359 = vsel %vm2681, %v3358, %v3342
    %v3360 = vrot.slane %v3344, 6
    %v3361 = vsel %vm2684, %v3360, %v3359
    %v3362 = vrot.slane %v3345, 5
    %v3363 = vsel %vm2687, %v3362, %v3361
    %v3364 = vrot.slane %v3346, 4
    %v3365 = vsel %vm2690, %v3364, %v3363
    %v3366 = vrot.slane %v3347, 3
    %v3367 = vsel %vm2693, %v3366, %v3365
    %v3368 = vrot.slane %v3348, 2
    %v3369 = vsel %vm2696, %v3368, %v3367
    %v3370 = vrot.slane %v3349, 1
    %v3371 = vsel %vm2699, %v3370, %v3369
    %v3373 = vadd.f32 %v3341, %v3371
    %vm3374 = vcmp.gt.s32.totalorder %v2628, 11
    %v3375 = vsel %vm3374, 1, 0
    %3376 = vset.pattern.permute.xlu0 0
    %3377 = vperm.xlu0 %3376, %v3375
    %v3378 = vpop.permute.xlu0 %3377
    %vm3379 = vcmp.eq.s32.totalorder %v3378, 1
    %v3380 = vsel %vm3379, %v3373, %v3319
    %3381 = vrot.lane.b32.xlu0 %v3380, 1
    %v3382 = vpop.permute.xlu0 %3381
    %v3383 = vsel %vm2627, %v3382, -1e+30
    %3384 = vrot.lane.b32.xlu0 %v3380, 2
    %v3385 = vpop.permute.xlu0 %3384
    %v3386 = vsel %vm2626, %v3385, -1e+30
    %v3387 = vmax.f32 %v3380, %v3383
    %v3388 = vmax.f32 %v3387, %v3386
    %v3389 = vsub.f32 %v3380, %v3388
    %v3390 = vmul.f32 %v3389, 1.442695
    %v3391 = vpow.pop %v3390
    %v3392 = vsub.f32 %v3383, %v3388
    %v3393 = vmul.f32 %v3392, 1.442695
    %v3394 = vpow.pop %v3393
    %v3395 = vadd.f32 %v3391, %v3394
    %v3396 = vsub.f32 %v3386, %v3388
    %v3397 = vmul.f32 %v3396, 1.442695
    %v3398 = vpow.pop %v3397
    %v3399 = vadd.f32 %v3395, %v3398
    %v3400 = vlog2.pop %v3399
    %v3401 = vmul.f32 %v3400, 0.6931472
    %v3402 = vadd.f32 %v3388, %v3401
    %v3403 = vld [vmem:[#allocation2 + $0xc] sm:$0x1]
    %v3404 = vld [vmem:[#allocation2 + $0x1c] sm:$0x1]
    %v3405 = vld [vmem:[#allocation2 + $0x2c] sm:$0x1]
    %v3406 = vld [vmem:[#allocation2 + $0x3c] sm:$0x1]
    %v3407 = vld [vmem:[#allocation2 + $0x4c] sm:$0x1]
    %v3408 = vld [vmem:[#allocation2 + $0x5c] sm:$0x1]
    %v3409 = vld [vmem:[#allocation2 + $0x6c] sm:$0x1]
    %v3410 = vld [vmem:[#allocation2 + $0x7c] sm:$0x1]
    %v3419 = vrot.slane %v3404, 7
    %v3420 = vsel %vm2681, %v3419, %v3403
    %v3421 = vrot.slane %v3405, 6
    %v3422 = vsel %vm2684, %v3421, %v3420
    %v3423 = vrot.slane %v3406, 5
    %v3424 = vsel %vm2687, %v3423, %v3422
    %v3425 = vrot.slane %v3407, 4
    %v3426 = vsel %vm2690, %v3425, %v3424
    %v3427 = vrot.slane %v3408, 3
    %v3428 = vsel %vm2693, %v3427, %v3426
    %v3429 = vrot.slane %v3409, 2
    %v3430 = vsel %vm2696, %v3429, %v3428
    %v3431 = vrot.slane %v3410, 1
    %v3432 = vsel %vm2699, %v3431, %v3430
    %v3434 = vadd.f32 %v3402, %v3432
    %vm3435 = vcmp.gt.s32.totalorder %v2628, 12
    %v3436 = vsel %vm3435, 1, 0
    %3437 = vset.pattern.permute.xlu0 0
    %3438 = vperm.xlu0 %3437, %v3436
    %v3439 = vpop.permute.xlu0 %3438
    %vm3440 = vcmp.eq.s32.totalorder %v3439, 1
    %v3441 = vsel %vm3440, %v3434, %v3380
    %3442 = vrot.lane.b32.xlu0 %v3441, 1
    %v3443 = vpop.permute.xlu0 %3442
    %v3444 = vsel %vm2627, %v3443, -1e+30
    %3445 = vrot.lane.b32.xlu0 %v3441, 2
    %v3446 = vpop.permute.xlu0 %3445
    %v3447 = vsel %vm2626, %v3446, -1e+30
    %v3448 = vmax.f32 %v3441, %v3444
    %v3449 = vmax.f32 %v3448, %v3447
    %v3450 = vsub.f32 %v3441, %v3449
    %v3451 = vmul.f32 %v3450, 1.442695
    %v3452 = vpow.pop %v3451
    %v3453 = vsub.f32 %v3444, %v3449
    %v3454 = vmul.f32 %v3453, 1.442695
    %v3455 = vpow.pop %v3454
    %v3456 = vadd.f32 %v3452, %v3455
    %v3457 = vsub.f32 %v3447, %v3449
    %v3458 = vmul.f32 %v3457, 1.442695
    %v3459 = vpow.pop %v3458
    %v3460 = vadd.f32 %v3456, %v3459
    %v3461 = vlog2.pop %v3460
    %v3462 = vmul.f32 %v3461, 0.6931472
    %v3463 = vadd.f32 %v3449, %v3462
    %v3464 = vld [vmem:[#allocation2 + $0xd] sm:$0x1]
    %v3465 = vld [vmem:[#allocation2 + $0x1d] sm:$0x1]
    %v3466 = vld [vmem:[#allocation2 + $0x2d] sm:$0x1]
    %v3467 = vld [vmem:[#allocation2 + $0x3d] sm:$0x1]
    %v3468 = vld [vmem:[#allocation2 + $0x4d] sm:$0x1]
    %v3469 = vld [vmem:[#allocation2 + $0x5d] sm:$0x1]
    %v3470 = vld [vmem:[#allocation2 + $0x6d] sm:$0x1]
    %v3471 = vld [vmem:[#allocation2 + $0x7d] sm:$0x1]
    %v3480 = vrot.slane %v3465, 7
    %v3481 = vsel %vm2681, %v3480, %v3464
    %v3482 = vrot.slane %v3466, 6
    %v3483 = vsel %vm2684, %v3482, %v3481
    %v3484 = vrot.slane %v3467, 5
    %v3485 = vsel %vm2687, %v3484, %v3483
    %v3486 = vrot.slane %v3468, 4
    %v3487 = vsel %vm2690, %v3486, %v3485
    %v3488 = vrot.slane %v3469, 3
    %v3489 = vsel %vm2693, %v3488, %v3487
    %v3490 = vrot.slane %v3470, 2
    %v3491 = vsel %vm2696, %v3490, %v3489
    %v3492 = vrot.slane %v3471, 1
    %v3493 = vsel %vm2699, %v3492, %v3491
    %v3495 = vadd.f32 %v3463, %v3493
    %vm3496 = vcmp.gt.s32.totalorder %v2628, 13
    %v3497 = vsel %vm3496, 1, 0
    %3498 = vset.pattern.permute.xlu0 0
    %3499 = vperm.xlu0 %3498, %v3497
    %v3500 = vpop.permute.xlu0 %3499
    %vm3501 = vcmp.eq.s32.totalorder %v3500, 1
    %v3502 = vsel %vm3501, %v3495, %v3441
    %3503 = vrot.lane.b32.xlu0 %v3502, 1
    %v3504 = vpop.permute.xlu0 %3503
    %v3505 = vsel %vm2627, %v3504, -1e+30
    %3506 = vrot.lane.b32.xlu0 %v3502, 2
    %v3507 = vpop.permute.xlu0 %3506
    %v3508 = vsel %vm2626, %v3507, -1e+30
    %v3509 = vmax.f32 %v3502, %v3505
    %v3510 = vmax.f32 %v3509, %v3508
    %v3511 = vsub.f32 %v3502, %v3510
    %v3512 = vmul.f32 %v3511, 1.442695
    %v3513 = vpow.pop %v3512
    %v3514 = vsub.f32 %v3505, %v3510
    %v3515 = vmul.f32 %v3514, 1.442695
    %v3516 = vpow.pop %v3515
    %v3517 = vadd.f32 %v3513, %v3516
    %v3518 = vsub.f32 %v3508, %v3510
    %v3519 = vmul.f32 %v3518, 1.442695
    %v3520 = vpow.pop %v3519
    %v3521 = vadd.f32 %v3517, %v3520
    %v3522 = vlog2.pop %v3521
    %v3523 = vmul.f32 %v3522, 0.6931472
    %v3524 = vadd.f32 %v3510, %v3523
    %v3525 = vld [vmem:[#allocation2 + $0xe] sm:$0x1]
    %v3526 = vld [vmem:[#allocation2 + $0x1e] sm:$0x1]
    %v3527 = vld [vmem:[#allocation2 + $0x2e] sm:$0x1]
    %v3528 = vld [vmem:[#allocation2 + $0x3e] sm:$0x1]
    %v3529 = vld [vmem:[#allocation2 + $0x4e] sm:$0x1]
    %v3530 = vld [vmem:[#allocation2 + $0x5e] sm:$0x1]
    %v3531 = vld [vmem:[#allocation2 + $0x6e] sm:$0x1]
    %v3532 = vld [vmem:[#allocation2 + $0x7e] sm:$0x1]
    %v3541 = vrot.slane %v3526, 7
    %v3542 = vsel %vm2681, %v3541, %v3525
    %v3543 = vrot.slane %v3527, 6
    %v3544 = vsel %vm2684, %v3543, %v3542
    %v3545 = vrot.slane %v3528, 5
    %v3546 = vsel %vm2687, %v3545, %v3544
    %v3547 = vrot.slane %v3529, 4
    %v3548 = vsel %vm2690, %v3547, %v3546
    %v3549 = vrot.slane %v3530, 3
    %v3550 = vsel %vm2693, %v3549, %v3548
    %v3551 = vrot.slane %v3531, 2
    %v3552 = vsel %vm2696, %v3551, %v3550
    %v3553 = vrot.slane %v3532, 1
    %v3554 = vsel %vm2699, %v3553, %v3552
    %v3556 = vadd.f32 %v3524, %v3554
    %vm3557 = vcmp.gt.s32.totalorder %v2628, 14
    %v3558 = vsel %vm3557, 1, 0
    %3559 = vset.pattern.permute.xlu0 0
    %3560 = vperm.xlu0 %3559, %v3558
    %v3561 = vpop.permute.xlu0 %3560
    %vm3562 = vcmp.eq.s32.totalorder %v3561, 1
    %v3563 = vsel %vm3562, %v3556, %v3502
    %3564 = vrot.lane.b32.xlu0 %v3563, 1
    %v3565 = vpop.permute.xlu0 %3564
    %v3566 = vsel %vm2627, %v3565, -1e+30
    %3567 = vrot.lane.b32.xlu0 %v3563, 2
    %v3568 = vpop.permute.xlu0 %3567
    %v3569 = vsel %vm2626, %v3568, -1e+30
    %v3570 = vmax.f32 %v3563, %v3566
    %v3571 = vmax.f32 %v3570, %v3569
    %v3572 = vsub.f32 %v3563, %v3571
    %v3573 = vmul.f32 %v3572, 1.442695
    %v3574 = vpow.pop %v3573
    %v3575 = vsub.f32 %v3566, %v3571
    %v3576 = vmul.f32 %v3575, 1.442695
    %v3577 = vpow.pop %v3576
    %v3578 = vadd.f32 %v3574, %v3577
    %v3579 = vsub.f32 %v3569, %v3571
    %v3580 = vmul.f32 %v3579, 1.442695
    %v3581 = vpow.pop %v3580
    %v3582 = vadd.f32 %v3578, %v3581
    %v3583 = vlog2.pop %v3582
    %v3584 = vmul.f32 %v3583, 0.6931472
    %v3585 = vadd.f32 %v3571, %v3584
    %v3586 = vld [vmem:[#allocation2 + $0xf] sm:$0x1]
    %v3587 = vld [vmem:[#allocation2 + $0x1f] sm:$0x1]
    %v3588 = vld [vmem:[#allocation2 + $0x2f] sm:$0x1]
    %v3589 = vld [vmem:[#allocation2 + $0x3f] sm:$0x1]
    %v3590 = vld [vmem:[#allocation2 + $0x4f] sm:$0x1]
    %v3591 = vld [vmem:[#allocation2 + $0x5f] sm:$0x1]
    %v3592 = vld [vmem:[#allocation2 + $0x6f] sm:$0x1]
    %v3593 = vld [vmem:[#allocation2 + $0x7f] sm:$0x1]
    %v3602 = vrot.slane %v3587, 7
    %v3603 = vsel %vm2681, %v3602, %v3586
    %v3604 = vrot.slane %v3588, 6
    %v3605 = vsel %vm2684, %v3604, %v3603
    %v3606 = vrot.slane %v3589, 5
    %v3607 = vsel %vm2687, %v3606, %v3605
    %v3608 = vrot.slane %v3590, 4
    %v3609 = vsel %vm2690, %v3608, %v3607
    %v3610 = vrot.slane %v3591, 3
    %v3611 = vsel %vm2693, %v3610, %v3609
    %v3612 = vrot.slane %v3592, 2
    %v3613 = vsel %vm2696, %v3612, %v3611
    %v3614 = vrot.slane %v3593, 1
    %v3615 = vsel %vm2699, %v3614, %v3613
    %v3617 = vadd.f32 %v3585, %v3615
    %vm3618 = vcmp.gt.s32.totalorder %v2628, 15
    %v3619 = vsel %vm3618, 1, 0
    %3620 = vset.pattern.permute.xlu0 0
    %3621 = vperm.xlu0 %3620, %v3619
    %v3622 = vpop.permute.xlu0 %3621
    %vm3623 = vcmp.eq.s32.totalorder %v3622, 1
    %v3624 = vsel %vm3623, %v3617, %v3563
    %v3625 = vsel %vm2639, %v3624, -1e+30
    %3626 = vmax.xlane.f32.xlu0 %v3625
    %v3627 = vpop.xlane.xlu0 %3626
    %v3628 = vsub.f32 %v3625, %v3627
    %v3629 = vmul.f32 %v3628, 1.442695
    %v3630 = vpow.pop %v3629
    %3631 = vadd.xlane.f32.xlu0 %v3630
    %v3632 = vpop.xlane.xlu0 %3631
    %v3633 = vlog2.pop %v3632
    %v3634 = vmul.f32 %v3633, 0.6931472
    %v3635 = vadd.f32 %v3627, %v3634
    %v3636 = vcvt.s32.f32 %v2629
    %v3637 = vrcp.pop %v3636
    %v3638 = vmul.f32 2.0, %v3637
    %v3639 = vmul.f32 %v3635, %v3638
    %v3640 = vsub.f32 0.0, %v3639
    %vm3641 = vcmask 7168
    %3642 = vst.msk [vmem:[%s6] sm:$0xff] %vm3641, %v3640
    // Predicated region
    $region34: #{tpu_custom_call.1} parent=1 // pred_check
      _
    $region35: #{tpu_custom_call.1} parent=1 // pred_check_branch
      %3644 = sbr.rel (0) target = $region37
    $region36: #{tpu_custom_call.1} parent=1 // pred_region
      _
    $region37: #{tpu_custom_call.1} parent=1 // pred_fallthru
      _
    // Predicated region
    $region38: #{tpu_custom_call.1} parent=1 // pred_check
      _
    $region39: #{tpu_custom_call.1} parent=1 // pred_check_branch
      %3646 = sbr.rel (0) target = $region41
    $region40: #{tpu_custom_call.1} parent=1 // pred_region
      _
    $region41: #{tpu_custom_call.1} parent=1 // pred_fallthru
      _
    %3647 = vsyncpa [#allocation4], 1
    %3648 = vsyncpa [#allocation6], 1

</llo_original>
